<compile_context>
chip_gen: v6e
topology: v6e:2x2x1
jax: 0.10.0
libtpu: 0.0.40
codegen_flags: <defaults>
</compile_context>

<pallas_src>
import functools

import jax
import jax.numpy as jnp
from jax.experimental import pallas as pl
from jax.experimental.pallas import tpu as pltpu


_OC_TILE = 128  # lane-dense output tile; OC is always padded to a multiple.


# ---------------------------------------------------------------------------
# Pallas kernel: fused 3x3/stride-2 conv (9-tap accumulation) + BN + ReLU
# ---------------------------------------------------------------------------
def _conv_bn_relu_kernel(xs_ref, w_ref, shift_ref, o_ref, *, oh_out, ow_out):
    """One image x one 128-wide slice of output channels.

    xs_ref   : (1, OH+1, 4, OW+1, C)  space-to-depth'd zero-padded input (bf16)
               xs[0, i, dy*2+dx, j, c] == x_padded[2i+dy, 2j+dx, c]
    w_ref    : (9, C, OC_TILE)        per-tap weights, BN scale pre-folded (bf16)
    shift_ref: (1, OC_TILE)           folded conv-bias + BN shift (f32)
    o_ref    : (1, OH, OW, OC_TILE)   output (bf16)
    """
    shift = shift_ref[...]                       # (1, OC_TILE), f32
    oc_t = o_ref.shape[-1]

    @pl.loop(0, oh_out)
    def _(oh):
        acc = jnp.zeros((ow_out, oc_t), jnp.float32)
        # Statically unrolled 9-tap accumulation.  Each tap is a contiguous
        # (OW, C) window of the VMEM-resident space-to-depth block: row offset
        # r0 in {0,1}, column offset c0 in {0,1}, channel group g in {0..3}.
        for kh in range(3):
            r0, dy = kh // 2, kh % 2
            for kw in range(3):
                c0, dx = kw // 2, kw % 2
                g = dy * 2 + dx
                x_tap = xs_ref[0, oh + r0, g, pl.ds(c0, ow_out), :]   # (OW, C)
                acc = acc + jnp.dot(x_tap, w_ref[kh * 3 + kw],
                                    preferred_element_type=jnp.float32)
        y = jnp.maximum(acc + shift, 0.0)        # BN shift + ReLU in f32
        o_ref[0, oh] = y.astype(o_ref.dtype)


def _conv_bn_relu_pallas(xs, w_taps, shift, oh_out, ow_out):
    n = xs.shape[0]
    cin = w_taps.shape[1]
    ocp = w_taps.shape[2]
    assert ocp % _OC_TILE == 0
    n_oc = ocp // _OC_TILE

    kernel = functools.partial(_conv_bn_relu_kernel, oh_out=oh_out, ow_out=ow_out)
    return pl.pallas_call(
        kernel,
        out_shape=jax.ShapeDtypeStruct((n, oh_out, ow_out, ocp), jnp.bfloat16),
        grid_spec=pltpu.PrefetchScalarGridSpec(
            num_scalar_prefetch=0,
            grid=(n, n_oc),
            in_specs=[
                # Full space-to-depth image per batch element; the block index
                # is constant along the OC-tile axis so it stays VMEM-resident.
                pl.BlockSpec((1,) + xs.shape[1:], lambda b, j: (b, 0, 0, 0, 0)),
                pl.BlockSpec((9, cin, _OC_TILE), lambda b, j: (0, 0, j)),
                pl.BlockSpec((1, _OC_TILE), lambda b, j: (0, j)),
            ],
            out_specs=pl.BlockSpec((1, oh_out, ow_out, _OC_TILE),
                                   lambda b, j: (b, 0, 0, j)),
        ),
        compiler_params=pltpu.CompilerParams(
            # Both grid axes are independent -> shard across TensorCores
            # (v7x 2-TC megacore); no reduction axis at the grid level.
            dimension_semantics=("parallel", "parallel"),
            # Explicit budget, safe on v5e/v6e/v7x scoped VMEM.
            vmem_limit_bytes=32 * 1024 * 1024,
        ),
    )(xs, w_taps, shift)


# ---------------------------------------------------------------------------
# Wrapper glue (pure XLA rearrangements, no 9x patch materialization)
# ---------------------------------------------------------------------------
def _space_to_depth_pad1(x_nhwc):
    """Zero-pad spatially by 1 and rearrange to (N, OH+1, 4, OW+1, C) with
    xs[n, i, dy*2+dx, j, c] = x_padded[n, 2i+dy, 2j+dx, c]."""
    n, h, w, c = x_nhwc.shape
    xp = jnp.pad(x_nhwc, ((0, 0), (1, 1), (1, 1), (0, 0)))
    hp, wp = h + 2, w + 2
    if hp % 2:
        xp = jnp.pad(xp, ((0, 0), (0, 1), (0, 0), (0, 0)))
        hp += 1
    if wp % 2:
        xp = jnp.pad(xp, ((0, 0), (0, 0), (0, 1), (0, 0)))
        wp += 1
    xs = xp.reshape(n, hp // 2, 2, wp // 2, 2, c)      # [n, i, dy, j, dx, c]
    xs = jnp.transpose(xs, (0, 1, 2, 4, 3, 5))         # [n, i, dy, dx, j, c]
    return xs.reshape(n, hp // 2, 4, wp // 2, c)


def conv_block_forward(x_nhwc, params):
    """ConvBlock (Conv2d k=3 s=2 p=1 -> BN(eval) -> ReLU), NHWC in/out.
    The input may carry trailing all-zero channels (previous layer's OC
    padding); the weight is zero-padded to match, so results are exact."""
    w = params["w"]                              # (OC, Cw, 3, 3) PyTorch layout
    b, gamma, beta = params["b"], params["gamma"], params["beta"]
    mean, var, eps = params["mean"], params["var"], params["eps"]
    oc, cw, kh, kw = w.shape
    n, h, wd, c = x_nhwc.shape
    assert (kh, kw) == (3, 3) and c >= cw

    if c > cw:                                   # zero channels contribute 0
        w = jnp.pad(w, ((0, 0), (0, c - cw), (0, 0), (0, 0)))

    # Fold conv bias + eval-mode BN into per-channel scale/shift, then fold
    # the scale straight into the weights (kernel epilogue = add + relu).
    scale = gamma / jnp.sqrt(var + eps)          # (OC,)
    shift = (b - mean) * scale + beta            # (OC,)

    # (9, C, OC): w_taps[kh*3+kw, c, oc] = w[oc, c, kh, kw] * scale[oc]
    w_taps = jnp.transpose(w, (2, 3, 1, 0)).reshape(9, c, oc) * scale[None, None, :]

    # Pad OC to a multiple of 128: lane-dense output stores; padded channels
    # are exactly zero (shift pad = 0 -> relu(0) = 0) and give the next layer
    # a 128-aligned contraction dim.
    ocp = -(-oc // _OC_TILE) * _OC_TILE
    if ocp > oc:
        w_taps = jnp.pad(w_taps, ((0, 0), (0, 0), (0, ocp - oc)))
        shift = jnp.pad(shift, (0, ocp - oc))
    shift = shift.reshape(1, ocp).astype(jnp.float32)

    oh = (h + 2 - 3) // 2 + 1
    ow = (wd + 2 - 3) // 2 + 1
    xs = _space_to_depth_pad1(x_nhwc.astype(jnp.bfloat16))
    return _conv_bn_relu_pallas(xs, w_taps.astype(jnp.bfloat16), shift, oh, ow)


# ---------------------------------------------------------------------------
# Parameter init (deterministic, mirrors the PyTorch __init__)
# ---------------------------------------------------------------------------
def init_conv_block(key, in_ch, out_ch, k=3):
    # nn.init.kaiming_normal_(w, a=1): gain = sqrt(2/(1+1)) = 1,
    # std = gain / sqrt(fan_in), fan_in = in_ch * k * k
    fan_in = in_ch * k * k
    std = 1.0 / jnp.sqrt(jnp.float32(fan_in))
    w = jax.random.normal(key, (out_ch, in_ch, k, k), jnp.float32) * std
    return {
        "w": w,
        "b": jnp.zeros((out_ch,), jnp.float32),          # constant_(bias, 0)
        "gamma": jnp.ones((out_ch,), jnp.float32),       # BN weight init
        "beta": jnp.zeros((out_ch,), jnp.float32),       # BN bias init
        "mean": jnp.zeros((out_ch,), jnp.float32),       # running_mean
        "var": jnp.ones((out_ch,), jnp.float32),         # running_var
        "eps": jnp.float32(1e-5),
    }


def init_sample_path(key):
    k1, k2, k3 = jax.random.split(key, 3)
    return [
        init_conv_block(k1, 3, 64),
        init_conv_block(k2, 64, 128),
        init_conv_block(k3, 128, 256),
    ]


# ---------------------------------------------------------------------------
# sample_path forward: NCHW in -> NCHW out (matches the PyTorch module)
# ---------------------------------------------------------------------------
def sample_path_forward(x_nchw, params_list):
    x = jnp.transpose(x_nchw, (0, 2, 3, 1))              # NCHW -> NHWC
    for p in params_list:
        x = conv_block_forward(x, p)
    x = x[..., :params_list[-1]["w"].shape[0]]           # drop OC padding
    return jnp.transpose(x, (0, 3, 1, 2)).astype(jnp.float32)   # NHWC -> NCHW


# ---------------------------------------------------------------------------
# Pure-JAX reference (f32) for a correctness sanity check
# ---------------------------------------------------------------------------
def _reference_forward(x_nchw, params_list):
    x = x_nchw
    for p in params_list:
        y = jax.lax.conv_general_dilated(
            x, p["w"], window_strides=(2, 2), padding=((1, 1), (1, 1)),
            dimension_numbers=("NCHW", "OIHW", "NCHW"))
        y = y + p["b"][None, :, None, None]
        scale = (p["gamma"] / jnp.sqrt(p["var"] + p["eps"]))[None, :, None, None]
        y = (y - p["mean"][None, :, None, None]) * scale + p["beta"][None, :, None, None]
        x = jnp.maximum(y, 0.0)
    return x


if __name__ == "__main__":
    key = jax.random.PRNGKey(0)
    kx, kp = jax.random.split(key)

    # small input consistent with the module: [N=2, C=3, H=16, W=16]
    x = jax.random.normal(kx, (2, 3, 16, 16), jnp.float32)
    params = init_sample_path(kp)

    fwd = jax.jit(lambda a: sample_path_forward(a, params))
    out = fwd(x)
    jax.block_until_ready(out)

    assert out.shape == (2, 256, 2, 2), out.shape
    assert bool(jnp.all(out >= 0.0))                     # ReLU output

    ref = _reference_forward(x, params)
    max_err = float(jnp.max(jnp.abs(out - ref)))
    assert max_err < 0.1, max_err                        # bf16-operand tolerance

    print("KERNEL_OK")
</pallas_src>

<mosaic_0001>
module attributes {stable_mosaic.version = 11 : i64} {
  func.func @_conv_bn_relu_kernel(%arg0: i32, %arg1: i32, %arg2: memref<1x9x4x9x3xbf16, #tpu.memory_space<vmem>>, %arg3: memref<9x3x128xbf16, #tpu.memory_space<vmem>>, %arg4: memref<1x128xf32, #tpu.memory_space<vmem>>, %arg5: memref<1x8x8x128xbf16, #tpu.memory_space<vmem>>) attributes {dimension_semantics = [#tpu.dimension_semantics<parallel>, #tpu.dimension_semantics<parallel>], iteration_bounds = array<i64: 2, 1>, scalar_prefetch = 0 : i64, scratch_operands = 0 : i64, tpu.core_type = #tpu.core_type<tc>, window_params = [{transform_indices = @transform_0, window_bounds = array<i64: 1, 9, 4, 9, 3>}, {transform_indices = @transform_1, window_bounds = array<i64: 9, 3, 128>}, {transform_indices = @transform_2, window_bounds = array<i64: 1, 128>}, {transform_indices = @transform_3, window_bounds = array<i64: 1, 8, 8, 128>}]} {
    %c0 = arith.constant 0 : index
    %c0_0 = arith.constant 0 : index
    %0 = vector.load %arg4[%c0, %c0_0] : memref<1x128xf32, #tpu.memory_space<vmem>>, vector<1x128xf32>
    %c0_i32 = arith.constant 0 : i32
    %c8_i32 = arith.constant 8 : i32
    %1 = arith.addi %c0_i32, %c8_i32 : i32
    %c1_i32 = arith.constant 1 : i32
    scf.for %arg6 = %c0_i32 to %1 step %c1_i32  : i32 {
      %c1_i32_2 = arith.constant 1 : i32
      %2 = arith.muli %arg6, %c1_i32_2 : i32
      %c0_i32_3 = arith.constant 0 : i32
      %3 = arith.addi %c0_i32_3, %2 : i32
      %cst = arith.constant 0.000000e+00 : f32
      %4 = vector.broadcast %cst : f32 to vector<8x128xf32>
      %c0_i32_4 = arith.constant 0 : i32
      %5 = arith.addi %3, %c0_i32_4 : i32
      %c0_5 = arith.constant 0 : index
      %6 = arith.index_cast %5 : i32 to index
      %c0_6 = arith.constant 0 : index
      %c0_7 = arith.constant 0 : index
      %c0_8 = arith.constant 0 : index
      %7 = vector.load %arg2[%c0_5, %6, %c0_6, %c0_7, %c0_8] : memref<1x9x4x9x3xbf16, #tpu.memory_space<vmem>>, vector<1x1x1x8x3xbf16>
      %8 = vector.shape_cast %7 : vector<1x1x1x8x3xbf16> to vector<8x3xbf16>
      %c0_9 = arith.constant 0 : index
      %c0_10 = arith.constant 0 : index
      %c0_11 = arith.constant 0 : index
      %9 = vector.load %arg3[%c0_9, %c0_10, %c0_11] : memref<9x3x128xbf16, #tpu.memory_space<vmem>>, vector<1x3x128xbf16>
      %10 = vector.shape_cast %9 : vector<1x3x128xbf16> to vector<3x128xbf16>
      %cst_12 = arith.constant dense<0.000000e+00> : vector<8x128xf32>
      %11 = tpu.matmul %8, %10, %cst_12 {dimension_numbers = #tpu.dot_dimension_numbers<[1], [0], [0], [1], [0, 0, 1, 1], [], []>} : vector<8x3xbf16>, vector<3x128xbf16>, vector<8x128xf32> -> vector<8x128xf32>
      %12 = arith.addf %4, %11 : vector<8x128xf32>
      %c0_i32_13 = arith.constant 0 : i32
      %13 = arith.addi %3, %c0_i32_13 : i32
      %c0_14 = arith.constant 0 : index
      %14 = arith.index_cast %13 : i32 to index
      %c1 = arith.constant 1 : index
      %c0_15 = arith.constant 0 : index
      %c0_16 = arith.constant 0 : index
      %15 = vector.load %arg2[%c0_14, %14, %c1, %c0_15, %c0_16] : memref<1x9x4x9x3xbf16, #tpu.memory_space<vmem>>, vector<1x1x1x8x3xbf16>
      %16 = vector.shape_cast %15 : vector<1x1x1x8x3xbf16> to vector<8x3xbf16>
      %c1_17 = arith.constant 1 : index
      %c0_18 = arith.constant 0 : index
      %c0_19 = arith.constant 0 : index
      %17 = vector.load %arg3[%c1_17, %c0_18, %c0_19] : memref<9x3x128xbf16, #tpu.memory_space<vmem>>, vector<1x3x128xbf16>
      %18 = vector.shape_cast %17 : vector<1x3x128xbf16> to vector<3x128xbf16>
      %cst_20 = arith.constant dense<0.000000e+00> : vector<8x128xf32>
      %19 = tpu.matmul %16, %18, %cst_20 {dimension_numbers = #tpu.dot_dimension_numbers<[1], [0], [0], [1], [0, 0, 1, 1], [], []>} : vector<8x3xbf16>, vector<3x128xbf16>, vector<8x128xf32> -> vector<8x128xf32>
      %20 = arith.addf %12, %19 : vector<8x128xf32>
      %c0_i32_21 = arith.constant 0 : i32
      %21 = arith.addi %3, %c0_i32_21 : i32
      %c0_22 = arith.constant 0 : index
      %22 = arith.index_cast %21 : i32 to index
      %c0_23 = arith.constant 0 : index
      %c1_24 = arith.constant 1 : index
      %c0_25 = arith.constant 0 : index
      %23 = vector.load %arg2[%c0_22, %22, %c0_23, %c1_24, %c0_25] : memref<1x9x4x9x3xbf16, #tpu.memory_space<vmem>>, vector<1x1x1x8x3xbf16>
      %24 = vector.shape_cast %23 : vector<1x1x1x8x3xbf16> to vector<8x3xbf16>
      %c2 = arith.constant 2 : index
      %c0_26 = arith.constant 0 : index
      %c0_27 = arith.constant 0 : index
      %25 = vector.load %arg3[%c2, %c0_26, %c0_27] : memref<9x3x128xbf16, #tpu.memory_space<vmem>>, vector<1x3x128xbf16>
      %26 = vector.shape_cast %25 : vector<1x3x128xbf16> to vector<3x128xbf16>
      %cst_28 = arith.constant dense<0.000000e+00> : vector<8x128xf32>
      %27 = tpu.matmul %24, %26, %cst_28 {dimension_numbers = #tpu.dot_dimension_numbers<[1], [0], [0], [1], [0, 0, 1, 1], [], []>} : vector<8x3xbf16>, vector<3x128xbf16>, vector<8x128xf32> -> vector<8x128xf32>
      %28 = arith.addf %20, %27 : vector<8x128xf32>
      %c0_i32_29 = arith.constant 0 : i32
      %29 = arith.addi %3, %c0_i32_29 : i32
      %c0_30 = arith.constant 0 : index
      %30 = arith.index_cast %29 : i32 to index
      %c2_31 = arith.constant 2 : index
      %c0_32 = arith.constant 0 : index
      %c0_33 = arith.constant 0 : index
      %31 = vector.load %arg2[%c0_30, %30, %c2_31, %c0_32, %c0_33] : memref<1x9x4x9x3xbf16, #tpu.memory_space<vmem>>, vector<1x1x1x8x3xbf16>
      %32 = vector.shape_cast %31 : vector<1x1x1x8x3xbf16> to vector<8x3xbf16>
      %c3 = arith.constant 3 : index
      %c0_34 = arith.constant 0 : index
      %c0_35 = arith.constant 0 : index
      %33 = vector.load %arg3[%c3, %c0_34, %c0_35] : memref<9x3x128xbf16, #tpu.memory_space<vmem>>, vector<1x3x128xbf16>
      %34 = vector.shape_cast %33 : vector<1x3x128xbf16> to vector<3x128xbf16>
      %cst_36 = arith.constant dense<0.000000e+00> : vector<8x128xf32>
      %35 = tpu.matmul %32, %34, %cst_36 {dimension_numbers = #tpu.dot_dimension_numbers<[1], [0], [0], [1], [0, 0, 1, 1], [], []>} : vector<8x3xbf16>, vector<3x128xbf16>, vector<8x128xf32> -> vector<8x128xf32>
      %36 = arith.addf %28, %35 : vector<8x128xf32>
      %c0_i32_37 = arith.constant 0 : i32
      %37 = arith.addi %3, %c0_i32_37 : i32
      %c0_38 = arith.constant 0 : index
      %38 = arith.index_cast %37 : i32 to index
      %c3_39 = arith.constant 3 : index
      %c0_40 = arith.constant 0 : index
      %c0_41 = arith.constant 0 : index
      %39 = vector.load %arg2[%c0_38, %38, %c3_39, %c0_40, %c0_41] : memref<1x9x4x9x3xbf16, #tpu.memory_space<vmem>>, vector<1x1x1x8x3xbf16>
      %40 = vector.shape_cast %39 : vector<1x1x1x8x3xbf16> to vector<8x3xbf16>
      %c4 = arith.constant 4 : index
      %c0_42 = arith.constant 0 : index
      %c0_43 = arith.constant 0 : index
      %41 = vector.load %arg3[%c4, %c0_42, %c0_43] : memref<9x3x128xbf16, #tpu.memory_space<vmem>>, vector<1x3x128xbf16>
      %42 = vector.shape_cast %41 : vector<1x3x128xbf16> to vector<3x128xbf16>
      %cst_44 = arith.constant dense<0.000000e+00> : vector<8x128xf32>
      %43 = tpu.matmul %40, %42, %cst_44 {dimension_numbers = #tpu.dot_dimension_numbers<[1], [0], [0], [1], [0, 0, 1, 1], [], []>} : vector<8x3xbf16>, vector<3x128xbf16>, vector<8x128xf32> -> vector<8x128xf32>
      %44 = arith.addf %36, %43 : vector<8x128xf32>
      %c0_i32_45 = arith.constant 0 : i32
      %45 = arith.addi %3, %c0_i32_45 : i32
      %c0_46 = arith.constant 0 : index
      %46 = arith.index_cast %45 : i32 to index
      %c2_47 = arith.constant 2 : index
      %c1_48 = arith.constant 1 : index
      %c0_49 = arith.constant 0 : index
      %47 = vector.load %arg2[%c0_46, %46, %c2_47, %c1_48, %c0_49] : memref<1x9x4x9x3xbf16, #tpu.memory_space<vmem>>, vector<1x1x1x8x3xbf16>
      %48 = vector.shape_cast %47 : vector<1x1x1x8x3xbf16> to vector<8x3xbf16>
      %c5 = arith.constant 5 : index
      %c0_50 = arith.constant 0 : index
      %c0_51 = arith.constant 0 : index
      %49 = vector.load %arg3[%c5, %c0_50, %c0_51] : memref<9x3x128xbf16, #tpu.memory_space<vmem>>, vector<1x3x128xbf16>
      %50 = vector.shape_cast %49 : vector<1x3x128xbf16> to vector<3x128xbf16>
      %cst_52 = arith.constant dense<0.000000e+00> : vector<8x128xf32>
      %51 = tpu.matmul %48, %50, %cst_52 {dimension_numbers = #tpu.dot_dimension_numbers<[1], [0], [0], [1], [0, 0, 1, 1], [], []>} : vector<8x3xbf16>, vector<3x128xbf16>, vector<8x128xf32> -> vector<8x128xf32>
      %52 = arith.addf %44, %51 : vector<8x128xf32>
      %c1_i32_53 = arith.constant 1 : i32
      %53 = arith.addi %3, %c1_i32_53 : i32
      %c0_54 = arith.constant 0 : index
      %54 = arith.index_cast %53 : i32 to index
      %c0_55 = arith.constant 0 : index
      %c0_56 = arith.constant 0 : index
      %c0_57 = arith.constant 0 : index
      %55 = vector.load %arg2[%c0_54, %54, %c0_55, %c0_56, %c0_57] : memref<1x9x4x9x3xbf16, #tpu.memory_space<vmem>>, vector<1x1x1x8x3xbf16>
      %56 = vector.shape_cast %55 : vector<1x1x1x8x3xbf16> to vector<8x3xbf16>
      %c6 = arith.constant 6 : index
      %c0_58 = arith.constant 0 : index
      %c0_59 = arith.constant 0 : index
      %57 = vector.load %arg3[%c6, %c0_58, %c0_59] : memref<9x3x128xbf16, #tpu.memory_space<vmem>>, vector<1x3x128xbf16>
      %58 = vector.shape_cast %57 : vector<1x3x128xbf16> to vector<3x128xbf16>
      %cst_60 = arith.constant dense<0.000000e+00> : vector<8x128xf32>
      %59 = tpu.matmul %56, %58, %cst_60 {dimension_numbers = #tpu.dot_dimension_numbers<[1], [0], [0], [1], [0, 0, 1, 1], [], []>} : vector<8x3xbf16>, vector<3x128xbf16>, vector<8x128xf32> -> vector<8x128xf32>
      %60 = arith.addf %52, %59 : vector<8x128xf32>
      %c1_i32_61 = arith.constant 1 : i32
      %61 = arith.addi %3, %c1_i32_61 : i32
      %c0_62 = arith.constant 0 : index
      %62 = arith.index_cast %61 : i32 to index
      %c1_63 = arith.constant 1 : index
      %c0_64 = arith.constant 0 : index
      %c0_65 = arith.constant 0 : index
      %63 = vector.load %arg2[%c0_62, %62, %c1_63, %c0_64, %c0_65] : memref<1x9x4x9x3xbf16, #tpu.memory_space<vmem>>, vector<1x1x1x8x3xbf16>
      %64 = vector.shape_cast %63 : vector<1x1x1x8x3xbf16> to vector<8x3xbf16>
      %c7 = arith.constant 7 : index
      %c0_66 = arith.constant 0 : index
      %c0_67 = arith.constant 0 : index
      %65 = vector.load %arg3[%c7, %c0_66, %c0_67] : memref<9x3x128xbf16, #tpu.memory_space<vmem>>, vector<1x3x128xbf16>
      %66 = vector.shape_cast %65 : vector<1x3x128xbf16> to vector<3x128xbf16>
      %cst_68 = arith.constant dense<0.000000e+00> : vector<8x128xf32>
      %67 = tpu.matmul %64, %66, %cst_68 {dimension_numbers = #tpu.dot_dimension_numbers<[1], [0], [0], [1], [0, 0, 1, 1], [], []>} : vector<8x3xbf16>, vector<3x128xbf16>, vector<8x128xf32> -> vector<8x128xf32>
      %68 = arith.addf %60, %67 : vector<8x128xf32>
      %c1_i32_69 = arith.constant 1 : i32
      %69 = arith.addi %3, %c1_i32_69 : i32
      %c0_70 = arith.constant 0 : index
      %70 = arith.index_cast %69 : i32 to index
      %c0_71 = arith.constant 0 : index
      %c1_72 = arith.constant 1 : index
      %c0_73 = arith.constant 0 : index
      %71 = vector.load %arg2[%c0_70, %70, %c0_71, %c1_72, %c0_73] : memref<1x9x4x9x3xbf16, #tpu.memory_space<vmem>>, vector<1x1x1x8x3xbf16>
      %72 = vector.shape_cast %71 : vector<1x1x1x8x3xbf16> to vector<8x3xbf16>
      %c8 = arith.constant 8 : index
      %c0_74 = arith.constant 0 : index
      %c0_75 = arith.constant 0 : index
      %73 = vector.load %arg3[%c8, %c0_74, %c0_75] : memref<9x3x128xbf16, #tpu.memory_space<vmem>>, vector<1x3x128xbf16>
      %74 = vector.shape_cast %73 : vector<1x3x128xbf16> to vector<3x128xbf16>
      %cst_76 = arith.constant dense<0.000000e+00> : vector<8x128xf32>
      %75 = tpu.matmul %72, %74, %cst_76 {dimension_numbers = #tpu.dot_dimension_numbers<[1], [0], [0], [1], [0, 0, 1, 1], [], []>} : vector<8x3xbf16>, vector<3x128xbf16>, vector<8x128xf32> -> vector<8x128xf32>
      %76 = arith.addf %68, %75 : vector<8x128xf32>
      %77 = vector.broadcast %0 : vector<1x128xf32> to vector<8x128xf32>
      %78 = arith.addf %76, %77 : vector<8x128xf32>
      %cst_77 = arith.constant 0.000000e+00 : f32
      %79 = vector.broadcast %cst_77 : f32 to vector<8x128xf32>
      %80 = arith.maximumf %78, %79 : vector<8x128xf32>
      %81 = arith.truncf %80 : vector<8x128xf32> to vector<8x128xbf16>
      %c0_78 = arith.constant 0 : index
      %82 = arith.index_cast %3 : i32 to index
      %c0_79 = arith.constant 0 : index
      %c0_80 = arith.constant 0 : index
      %83 = vector.load %arg5[%c0_78, %82, %c0_79, %c0_80] : memref<1x8x8x128xbf16, #tpu.memory_space<vmem>>, vector<1x1x8x128xbf16>
      %84 = vector.shape_cast %83 : vector<1x1x8x128xbf16> to vector<8x128xbf16>
      %85 = vector.shape_cast %81 : vector<8x128xbf16> to vector<1x1x8x128xbf16>
      tpu.vector_store %arg5[%c0_78, %82, %c0_79, %c0_80], %85 {strides = array<i32>} : memref<1x8x8x128xbf16, #tpu.memory_space<vmem>>, vector<1x1x8x128xbf16>,
    }
    %c8_i32_1 = arith.constant 8 : i32
    return
  }
  func.func @transform_0(%arg0: i32, %arg1: i32) -> (i32, i32, i32, i32, i32) {
    %c0_i32 = arith.constant 0 : i32
    %c0_i32_0 = arith.constant 0 : i32
    %c0_i32_1 = arith.constant 0 : i32
    %c0_i32_2 = arith.constant 0 : i32
    %c0_i32_3 = arith.constant 0 : i32
    return %arg0, %c0_i32, %c0_i32_0, %c0_i32_1, %c0_i32_2 : i32, i32, i32, i32, i32
  }
  func.func @transform_1(%arg0: i32, %arg1: i32) -> (i32, i32, i32) {
    %c0_i32 = arith.constant 0 : i32
    %c0_i32_0 = arith.constant 0 : i32
    %c0_i32_1 = arith.constant 0 : i32
    return %c0_i32, %c0_i32_0, %arg1 : i32, i32, i32
  }
  func.func @transform_2(%arg0: i32, %arg1: i32) -> (i32, i32) {
    %c0_i32 = arith.constant 0 : i32
    %c0_i32_0 = arith.constant 0 : i32
    return %c0_i32, %arg1 : i32, i32
  }
  func.func @transform_3(%arg0: i32, %arg1: i32) -> (i32, i32, i32, i32) {
    %c0_i32 = arith.constant 0 : i32
    %c0_i32_0 = arith.constant 0 : i32
    %c0_i32_1 = arith.constant 0 : i32
    return %arg0, %c0_i32, %c0_i32_0, %arg1 : i32, i32, i32, i32
  }
}

module attributes {stable_mosaic.version = 11 : i64} {
  func.func @_conv_bn_relu_kernel(%arg0: i32, %arg1: i32, %arg2: memref<1x5x4x5x128xbf16, #tpu.memory_space<vmem>>, %arg3: memref<9x128x128xbf16, #tpu.memory_space<vmem>>, %arg4: memref<1x128xf32, #tpu.memory_space<vmem>>, %arg5: memref<1x4x4x128xbf16, #tpu.memory_space<vmem>>) attributes {dimension_semantics = [#tpu.dimension_semantics<parallel>, #tpu.dimension_semantics<parallel>], iteration_bounds = array<i64: 2, 1>, scalar_prefetch = 0 : i64, scratch_operands = 0 : i64, tpu.core_type = #tpu.core_type<tc>, window_params = [{transform_indices = @transform_0, window_bounds = array<i64: 1, 5, 4, 5, 128>}, {transform_indices = @transform_1, window_bounds = array<i64: 9, 128, 128>}, {transform_indices = @transform_2, window_bounds = array<i64: 1, 128>}, {transform_indices = @transform_3, window_bounds = array<i64: 1, 4, 4, 128>}]} {
    %c0 = arith.constant 0 : index
    %c0_0 = arith.constant 0 : index
    %0 = vector.load %arg4[%c0, %c0_0] : memref<1x128xf32, #tpu.memory_space<vmem>>, vector<1x128xf32>
    %c0_i32 = arith.constant 0 : i32
    %c4_i32 = arith.constant 4 : i32
    %1 = arith.addi %c0_i32, %c4_i32 : i32
    %c1_i32 = arith.constant 1 : i32
    scf.for %arg6 = %c0_i32 to %1 step %c1_i32  : i32 {
      %c1_i32_2 = arith.constant 1 : i32
      %2 = arith.muli %arg6, %c1_i32_2 : i32
      %c0_i32_3 = arith.constant 0 : i32
      %3 = arith.addi %c0_i32_3, %2 : i32
      %cst = arith.constant 0.000000e+00 : f32
      %4 = vector.broadcast %cst : f32 to vector<4x128xf32>
      %c0_i32_4 = arith.constant 0 : i32
      %5 = arith.addi %3, %c0_i32_4 : i32
      %c0_5 = arith.constant 0 : index
      %6 = arith.index_cast %5 : i32 to index
      %c0_6 = arith.constant 0 : index
      %c0_7 = arith.constant 0 : index
      %c0_8 = arith.constant 0 : index
      %7 = vector.load %arg2[%c0_5, %6, %c0_6, %c0_7, %c0_8] : memref<1x5x4x5x128xbf16, #tpu.memory_space<vmem>>, vector<1x1x1x4x128xbf16>
      %8 = vector.shape_cast %7 : vector<1x1x1x4x128xbf16> to vector<4x128xbf16>
      %c0_9 = arith.constant 0 : index
      %c0_10 = arith.constant 0 : index
      %c0_11 = arith.constant 0 : index
      %9 = vector.load %arg3[%c0_9, %c0_10, %c0_11] : memref<9x128x128xbf16, #tpu.memory_space<vmem>>, vector<1x128x128xbf16>
      %10 = vector.shape_cast %9 : vector<1x128x128xbf16> to vector<128x128xbf16>
      %cst_12 = arith.constant dense<0.000000e+00> : vector<4x128xf32>
      %11 = tpu.matmul %8, %10, %cst_12 {dimension_numbers = #tpu.dot_dimension_numbers<[1], [0], [0], [1], [0, 0, 1, 1], [], []>} : vector<4x128xbf16>, vector<128x128xbf16>, vector<4x128xf32> -> vector<4x128xf32>
      %12 = arith.addf %4, %11 : vector<4x128xf32>
      %c0_i32_13 = arith.constant 0 : i32
      %13 = arith.addi %3, %c0_i32_13 : i32
      %c0_14 = arith.constant 0 : index
      %14 = arith.index_cast %13 : i32 to index
      %c1 = arith.constant 1 : index
      %c0_15 = arith.constant 0 : index
      %c0_16 = arith.constant 0 : index
      %15 = vector.load %arg2[%c0_14, %14, %c1, %c0_15, %c0_16] : memref<1x5x4x5x128xbf16, #tpu.memory_space<vmem>>, vector<1x1x1x4x128xbf16>
      %16 = vector.shape_cast %15 : vector<1x1x1x4x128xbf16> to vector<4x128xbf16>
      %c1_17 = arith.constant 1 : index
      %c0_18 = arith.constant 0 : index
      %c0_19 = arith.constant 0 : index
      %17 = vector.load %arg3[%c1_17, %c0_18, %c0_19] : memref<9x128x128xbf16, #tpu.memory_space<vmem>>, vector<1x128x128xbf16>
      %18 = vector.shape_cast %17 : vector<1x128x128xbf16> to vector<128x128xbf16>
      %cst_20 = arith.constant dense<0.000000e+00> : vector<4x128xf32>
      %19 = tpu.matmul %16, %18, %cst_20 {dimension_numbers = #tpu.dot_dimension_numbers<[1], [0], [0], [1], [0, 0, 1, 1], [], []>} : vector<4x128xbf16>, vector<128x128xbf16>, vector<4x128xf32> -> vector<4x128xf32>
      %20 = arith.addf %12, %19 : vector<4x128xf32>
      %c0_i32_21 = arith.constant 0 : i32
      %21 = arith.addi %3, %c0_i32_21 : i32
      %c0_22 = arith.constant 0 : index
      %22 = arith.index_cast %21 : i32 to index
      %c0_23 = arith.constant 0 : index
      %c1_24 = arith.constant 1 : index
      %c0_25 = arith.constant 0 : index
      %23 = vector.load %arg2[%c0_22, %22, %c0_23, %c1_24, %c0_25] : memref<1x5x4x5x128xbf16, #tpu.memory_space<vmem>>, vector<1x1x1x4x128xbf16>
      %24 = vector.shape_cast %23 : vector<1x1x1x4x128xbf16> to vector<4x128xbf16>
      %c2 = arith.constant 2 : index
      %c0_26 = arith.constant 0 : index
      %c0_27 = arith.constant 0 : index
      %25 = vector.load %arg3[%c2, %c0_26, %c0_27] : memref<9x128x128xbf16, #tpu.memory_space<vmem>>, vector<1x128x128xbf16>
      %26 = vector.shape_cast %25 : vector<1x128x128xbf16> to vector<128x128xbf16>
      %cst_28 = arith.constant dense<0.000000e+00> : vector<4x128xf32>
      %27 = tpu.matmul %24, %26, %cst_28 {dimension_numbers = #tpu.dot_dimension_numbers<[1], [0], [0], [1], [0, 0, 1, 1], [], []>} : vector<4x128xbf16>, vector<128x128xbf16>, vector<4x128xf32> -> vector<4x128xf32>
      %28 = arith.addf %20, %27 : vector<4x128xf32>
      %c0_i32_29 = arith.constant 0 : i32
      %29 = arith.addi %3, %c0_i32_29 : i32
      %c0_30 = arith.constant 0 : index
      %30 = arith.index_cast %29 : i32 to index
      %c2_31 = arith.constant 2 : index
      %c0_32 = arith.constant 0 : index
      %c0_33 = arith.constant 0 : index
      %31 = vector.load %arg2[%c0_30, %30, %c2_31, %c0_32, %c0_33] : memref<1x5x4x5x128xbf16, #tpu.memory_space<vmem>>, vector<1x1x1x4x128xbf16>
      %32 = vector.shape_cast %31 : vector<1x1x1x4x128xbf16> to vector<4x128xbf16>
      %c3 = arith.constant 3 : index
      %c0_34 = arith.constant 0 : index
      %c0_35 = arith.constant 0 : index
      %33 = vector.load %arg3[%c3, %c0_34, %c0_35] : memref<9x128x128xbf16, #tpu.memory_space<vmem>>, vector<1x128x128xbf16>
      %34 = vector.shape_cast %33 : vector<1x128x128xbf16> to vector<128x128xbf16>
      %cst_36 = arith.constant dense<0.000000e+00> : vector<4x128xf32>
      %35 = tpu.matmul %32, %34, %cst_36 {dimension_numbers = #tpu.dot_dimension_numbers<[1], [0], [0], [1], [0, 0, 1, 1], [], []>} : vector<4x128xbf16>, vector<128x128xbf16>, vector<4x128xf32> -> vector<4x128xf32>
      %36 = arith.addf %28, %35 : vector<4x128xf32>
      %c0_i32_37 = arith.constant 0 : i32
      %37 = arith.addi %3, %c0_i32_37 : i32
      %c0_38 = arith.constant 0 : index
      %38 = arith.index_cast %37 : i32 to index
      %c3_39 = arith.constant 3 : index
      %c0_40 = arith.constant 0 : index
      %c0_41 = arith.constant 0 : index
      %39 = vector.load %arg2[%c0_38, %38, %c3_39, %c0_40, %c0_41] : memref<1x5x4x5x128xbf16, #tpu.memory_space<vmem>>, vector<1x1x1x4x128xbf16>
      %40 = vector.shape_cast %39 : vector<1x1x1x4x128xbf16> to vector<4x128xbf16>
      %c4 = arith.constant 4 : index
      %c0_42 = arith.constant 0 : index
      %c0_43 = arith.constant 0 : index
      %41 = vector.load %arg3[%c4, %c0_42, %c0_43] : memref<9x128x128xbf16, #tpu.memory_space<vmem>>, vector<1x128x128xbf16>
      %42 = vector.shape_cast %41 : vector<1x128x128xbf16> to vector<128x128xbf16>
      %cst_44 = arith.constant dense<0.000000e+00> : vector<4x128xf32>
      %43 = tpu.matmul %40, %42, %cst_44 {dimension_numbers = #tpu.dot_dimension_numbers<[1], [0], [0], [1], [0, 0, 1, 1], [], []>} : vector<4x128xbf16>, vector<128x128xbf16>, vector<4x128xf32> -> vector<4x128xf32>
      %44 = arith.addf %36, %43 : vector<4x128xf32>
      %c0_i32_45 = arith.constant 0 : i32
      %45 = arith.addi %3, %c0_i32_45 : i32
      %c0_46 = arith.constant 0 : index
      %46 = arith.index_cast %45 : i32 to index
      %c2_47 = arith.constant 2 : index
      %c1_48 = arith.constant 1 : index
      %c0_49 = arith.constant 0 : index
      %47 = vector.load %arg2[%c0_46, %46, %c2_47, %c1_48, %c0_49] : memref<1x5x4x5x128xbf16, #tpu.memory_space<vmem>>, vector<1x1x1x4x128xbf16>
      %48 = vector.shape_cast %47 : vector<1x1x1x4x128xbf16> to vector<4x128xbf16>
      %c5 = arith.constant 5 : index
      %c0_50 = arith.constant 0 : index
      %c0_51 = arith.constant 0 : index
      %49 = vector.load %arg3[%c5, %c0_50, %c0_51] : memref<9x128x128xbf16, #tpu.memory_space<vmem>>, vector<1x128x128xbf16>
      %50 = vector.shape_cast %49 : vector<1x128x128xbf16> to vector<128x128xbf16>
      %cst_52 = arith.constant dense<0.000000e+00> : vector<4x128xf32>
      %51 = tpu.matmul %48, %50, %cst_52 {dimension_numbers = #tpu.dot_dimension_numbers<[1], [0], [0], [1], [0, 0, 1, 1], [], []>} : vector<4x128xbf16>, vector<128x128xbf16>, vector<4x128xf32> -> vector<4x128xf32>
      %52 = arith.addf %44, %51 : vector<4x128xf32>
      %c1_i32_53 = arith.constant 1 : i32
      %53 = arith.addi %3, %c1_i32_53 : i32
      %c0_54 = arith.constant 0 : index
      %54 = arith.index_cast %53 : i32 to index
      %c0_55 = arith.constant 0 : index
      %c0_56 = arith.constant 0 : index
      %c0_57 = arith.constant 0 : index
      %55 = vector.load %arg2[%c0_54, %54, %c0_55, %c0_56, %c0_57] : memref<1x5x4x5x128xbf16, #tpu.memory_space<vmem>>, vector<1x1x1x4x128xbf16>
      %56 = vector.shape_cast %55 : vector<1x1x1x4x128xbf16> to vector<4x128xbf16>
      %c6 = arith.constant 6 : index
      %c0_58 = arith.constant 0 : index
      %c0_59 = arith.constant 0 : index
      %57 = vector.load %arg3[%c6, %c0_58, %c0_59] : memref<9x128x128xbf16, #tpu.memory_space<vmem>>, vector<1x128x128xbf16>
      %58 = vector.shape_cast %57 : vector<1x128x128xbf16> to vector<128x128xbf16>
      %cst_60 = arith.constant dense<0.000000e+00> : vector<4x128xf32>
      %59 = tpu.matmul %56, %58, %cst_60 {dimension_numbers = #tpu.dot_dimension_numbers<[1], [0], [0], [1], [0, 0, 1, 1], [], []>} : vector<4x128xbf16>, vector<128x128xbf16>, vector<4x128xf32> -> vector<4x128xf32>
      %60 = arith.addf %52, %59 : vector<4x128xf32>
      %c1_i32_61 = arith.constant 1 : i32
      %61 = arith.addi %3, %c1_i32_61 : i32
      %c0_62 = arith.constant 0 : index
      %62 = arith.index_cast %61 : i32 to index
      %c1_63 = arith.constant 1 : index
      %c0_64 = arith.constant 0 : index
      %c0_65 = arith.constant 0 : index
      %63 = vector.load %arg2[%c0_62, %62, %c1_63, %c0_64, %c0_65] : memref<1x5x4x5x128xbf16, #tpu.memory_space<vmem>>, vector<1x1x1x4x128xbf16>
      %64 = vector.shape_cast %63 : vector<1x1x1x4x128xbf16> to vector<4x128xbf16>
      %c7 = arith.constant 7 : index
      %c0_66 = arith.constant 0 : index
      %c0_67 = arith.constant 0 : index
      %65 = vector.load %arg3[%c7, %c0_66, %c0_67] : memref<9x128x128xbf16, #tpu.memory_space<vmem>>, vector<1x128x128xbf16>
      %66 = vector.shape_cast %65 : vector<1x128x128xbf16> to vector<128x128xbf16>
      %cst_68 = arith.constant dense<0.000000e+00> : vector<4x128xf32>
      %67 = tpu.matmul %64, %66, %cst_68 {dimension_numbers = #tpu.dot_dimension_numbers<[1], [0], [0], [1], [0, 0, 1, 1], [], []>} : vector<4x128xbf16>, vector<128x128xbf16>, vector<4x128xf32> -> vector<4x128xf32>
      %68 = arith.addf %60, %67 : vector<4x128xf32>
      %c1_i32_69 = arith.constant 1 : i32
      %69 = arith.addi %3, %c1_i32_69 : i32
      %c0_70 = arith.constant 0 : index
      %70 = arith.index_cast %69 : i32 to index
      %c0_71 = arith.constant 0 : index
      %c1_72 = arith.constant 1 : index
      %c0_73 = arith.constant 0 : index
      %71 = vector.load %arg2[%c0_70, %70, %c0_71, %c1_72, %c0_73] : memref<1x5x4x5x128xbf16, #tpu.memory_space<vmem>>, vector<1x1x1x4x128xbf16>
      %72 = vector.shape_cast %71 : vector<1x1x1x4x128xbf16> to vector<4x128xbf16>
      %c8 = arith.constant 8 : index
      %c0_74 = arith.constant 0 : index
      %c0_75 = arith.constant 0 : index
      %73 = vector.load %arg3[%c8, %c0_74, %c0_75] : memref<9x128x128xbf16, #tpu.memory_space<vmem>>, vector<1x128x128xbf16>
      %74 = vector.shape_cast %73 : vector<1x128x128xbf16> to vector<128x128xbf16>
      %cst_76 = arith.constant dense<0.000000e+00> : vector<4x128xf32>
      %75 = tpu.matmul %72, %74, %cst_76 {dimension_numbers = #tpu.dot_dimension_numbers<[1], [0], [0], [1], [0, 0, 1, 1], [], []>} : vector<4x128xbf16>, vector<128x128xbf16>, vector<4x128xf32> -> vector<4x128xf32>
      %76 = arith.addf %68, %75 : vector<4x128xf32>
      %77 = vector.broadcast %0 : vector<1x128xf32> to vector<4x128xf32>
      %78 = arith.addf %76, %77 : vector<4x128xf32>
      %cst_77 = arith.constant 0.000000e+00 : f32
      %79 = vector.broadcast %cst_77 : f32 to vector<4x128xf32>
      %80 = arith.maximumf %78, %79 : vector<4x128xf32>
      %81 = arith.truncf %80 : vector<4x128xf32> to vector<4x128xbf16>
      %c0_78 = arith.constant 0 : index
      %82 = arith.index_cast %3 : i32 to index
      %c0_79 = arith.constant 0 : index
      %c0_80 = arith.constant 0 : index
      %83 = vector.load %arg5[%c0_78, %82, %c0_79, %c0_80] : memref<1x4x4x128xbf16, #tpu.memory_space<vmem>>, vector<1x1x4x128xbf16>
      %84 = vector.shape_cast %83 : vector<1x1x4x128xbf16> to vector<4x128xbf16>
      %85 = vector.shape_cast %81 : vector<4x128xbf16> to vector<1x1x4x128xbf16>
      tpu.vector_store %arg5[%c0_78, %82, %c0_79, %c0_80], %85 {strides = array<i32>} : memref<1x4x4x128xbf16, #tpu.memory_space<vmem>>, vector<1x1x4x128xbf16>,
    }
    %c4_i32_1 = arith.constant 4 : i32
    return
  }
  func.func @transform_0(%arg0: i32, %arg1: i32) -> (i32, i32, i32, i32, i32) {
    %c0_i32 = arith.constant 0 : i32
    %c0_i32_0 = arith.constant 0 : i32
    %c0_i32_1 = arith.constant 0 : i32
    %c0_i32_2 = arith.constant 0 : i32
    %c0_i32_3 = arith.constant 0 : i32
    return %arg0, %c0_i32, %c0_i32_0, %c0_i32_1, %c0_i32_2 : i32, i32, i32, i32, i32
  }
  func.func @transform_1(%arg0: i32, %arg1: i32) -> (i32, i32, i32) {
    %c0_i32 = arith.constant 0 : i32
    %c0_i32_0 = arith.constant 0 : i32
    %c0_i32_1 = arith.constant 0 : i32
    return %c0_i32, %c0_i32_0, %arg1 : i32, i32, i32
  }
  func.func @transform_2(%arg0: i32, %arg1: i32) -> (i32, i32) {
    %c0_i32 = arith.constant 0 : i32
    %c0_i32_0 = arith.constant 0 : i32
    return %c0_i32, %arg1 : i32, i32
  }
  func.func @transform_3(%arg0: i32, %arg1: i32) -> (i32, i32, i32, i32) {
    %c0_i32 = arith.constant 0 : i32
    %c0_i32_0 = arith.constant 0 : i32
    %c0_i32_1 = arith.constant 0 : i32
    return %arg0, %c0_i32, %c0_i32_0, %arg1 : i32, i32, i32, i32
  }
}

module attributes {stable_mosaic.version = 11 : i64} {
  func.func @_conv_bn_relu_kernel(%arg0: i32, %arg1: i32, %arg2: memref<1x3x4x3x128xbf16, #tpu.memory_space<vmem>>, %arg3: memref<9x128x128xbf16, #tpu.memory_space<vmem>>, %arg4: memref<1x128xf32, #tpu.memory_space<vmem>>, %arg5: memref<1x2x2x128xbf16, #tpu.memory_space<vmem>>) attributes {dimension_semantics = [#tpu.dimension_semantics<parallel>, #tpu.dimension_semantics<parallel>], iteration_bounds = array<i64: 2, 2>, scalar_prefetch = 0 : i64, scratch_operands = 0 : i64, tpu.core_type = #tpu.core_type<tc>, window_params = [{transform_indices = @transform_0, window_bounds = array<i64: 1, 3, 4, 3, 128>}, {transform_indices = @transform_1, window_bounds = array<i64: 9, 128, 128>}, {transform_indices = @transform_2, window_bounds = array<i64: 1, 128>}, {transform_indices = @transform_3, window_bounds = array<i64: 1, 2, 2, 128>}]} {
    %c0 = arith.constant 0 : index
    %c0_0 = arith.constant 0 : index
    %0 = vector.load %arg4[%c0, %c0_0] : memref<1x128xf32, #tpu.memory_space<vmem>>, vector<1x128xf32>
    %c0_i32 = arith.constant 0 : i32
    %c2_i32 = arith.constant 2 : i32
    %1 = arith.addi %c0_i32, %c2_i32 : i32
    %c1_i32 = arith.constant 1 : i32
    scf.for %arg6 = %c0_i32 to %1 step %c1_i32  : i32 {
      %c1_i32_2 = arith.constant 1 : i32
      %2 = arith.muli %arg6, %c1_i32_2 : i32
      %c0_i32_3 = arith.constant 0 : i32
      %3 = arith.addi %c0_i32_3, %2 : i32
      %cst = arith.constant 0.000000e+00 : f32
      %4 = vector.broadcast %cst : f32 to vector<2x128xf32>
      %c0_i32_4 = arith.constant 0 : i32
      %5 = arith.addi %3, %c0_i32_4 : i32
      %c0_5 = arith.constant 0 : index
      %6 = arith.index_cast %5 : i32 to index
      %c0_6 = arith.constant 0 : index
      %c0_7 = arith.constant 0 : index
      %c0_8 = arith.constant 0 : index
      %7 = vector.load %arg2[%c0_5, %6, %c0_6, %c0_7, %c0_8] : memref<1x3x4x3x128xbf16, #tpu.memory_space<vmem>>, vector<1x1x1x2x128xbf16>
      %8 = vector.shape_cast %7 : vector<1x1x1x2x128xbf16> to vector<2x128xbf16>
      %c0_9 = arith.constant 0 : index
      %c0_10 = arith.constant 0 : index
      %c0_11 = arith.constant 0 : index
      %9 = vector.load %arg3[%c0_9, %c0_10, %c0_11] : memref<9x128x128xbf16, #tpu.memory_space<vmem>>, vector<1x128x128xbf16>
      %10 = vector.shape_cast %9 : vector<1x128x128xbf16> to vector<128x128xbf16>
      %cst_12 = arith.constant dense<0.000000e+00> : vector<2x128xf32>
      %11 = tpu.matmul %8, %10, %cst_12 {dimension_numbers = #tpu.dot_dimension_numbers<[1], [0], [0], [1], [0, 0, 1, 1], [], []>} : vector<2x128xbf16>, vector<128x128xbf16>, vector<2x128xf32> -> vector<2x128xf32>
      %12 = arith.addf %4, %11 : vector<2x128xf32>
      %c0_i32_13 = arith.constant 0 : i32
      %13 = arith.addi %3, %c0_i32_13 : i32
      %c0_14 = arith.constant 0 : index
      %14 = arith.index_cast %13 : i32 to index
      %c1 = arith.constant 1 : index
      %c0_15 = arith.constant 0 : index
      %c0_16 = arith.constant 0 : index
      %15 = vector.load %arg2[%c0_14, %14, %c1, %c0_15, %c0_16] : memref<1x3x4x3x128xbf16, #tpu.memory_space<vmem>>, vector<1x1x1x2x128xbf16>
      %16 = vector.shape_cast %15 : vector<1x1x1x2x128xbf16> to vector<2x128xbf16>
      %c1_17 = arith.constant 1 : index
      %c0_18 = arith.constant 0 : index
      %c0_19 = arith.constant 0 : index
      %17 = vector.load %arg3[%c1_17, %c0_18, %c0_19] : memref<9x128x128xbf16, #tpu.memory_space<vmem>>, vector<1x128x128xbf16>
      %18 = vector.shape_cast %17 : vector<1x128x128xbf16> to vector<128x128xbf16>
      %cst_20 = arith.constant dense<0.000000e+00> : vector<2x128xf32>
      %19 = tpu.matmul %16, %18, %cst_20 {dimension_numbers = #tpu.dot_dimension_numbers<[1], [0], [0], [1], [0, 0, 1, 1], [], []>} : vector<2x128xbf16>, vector<128x128xbf16>, vector<2x128xf32> -> vector<2x128xf32>
      %20 = arith.addf %12, %19 : vector<2x128xf32>
      %c0_i32_21 = arith.constant 0 : i32
      %21 = arith.addi %3, %c0_i32_21 : i32
      %c0_22 = arith.constant 0 : index
      %22 = arith.index_cast %21 : i32 to index
      %c0_23 = arith.constant 0 : index
      %c1_24 = arith.constant 1 : index
      %c0_25 = arith.constant 0 : index
      %23 = vector.load %arg2[%c0_22, %22, %c0_23, %c1_24, %c0_25] : memref<1x3x4x3x128xbf16, #tpu.memory_space<vmem>>, vector<1x1x1x2x128xbf16>
      %24 = vector.shape_cast %23 : vector<1x1x1x2x128xbf16> to vector<2x128xbf16>
      %c2 = arith.constant 2 : index
      %c0_26 = arith.constant 0 : index
      %c0_27 = arith.constant 0 : index
      %25 = vector.load %arg3[%c2, %c0_26, %c0_27] : memref<9x128x128xbf16, #tpu.memory_space<vmem>>, vector<1x128x128xbf16>
      %26 = vector.shape_cast %25 : vector<1x128x128xbf16> to vector<128x128xbf16>
      %cst_28 = arith.constant dense<0.000000e+00> : vector<2x128xf32>
      %27 = tpu.matmul %24, %26, %cst_28 {dimension_numbers = #tpu.dot_dimension_numbers<[1], [0], [0], [1], [0, 0, 1, 1], [], []>} : vector<2x128xbf16>, vector<128x128xbf16>, vector<2x128xf32> -> vector<2x128xf32>
      %28 = arith.addf %20, %27 : vector<2x128xf32>
      %c0_i32_29 = arith.constant 0 : i32
      %29 = arith.addi %3, %c0_i32_29 : i32
      %c0_30 = arith.constant 0 : index
      %30 = arith.index_cast %29 : i32 to index
      %c2_31 = arith.constant 2 : index
      %c0_32 = arith.constant 0 : index
      %c0_33 = arith.constant 0 : index
      %31 = vector.load %arg2[%c0_30, %30, %c2_31, %c0_32, %c0_33] : memref<1x3x4x3x128xbf16, #tpu.memory_space<vmem>>, vector<1x1x1x2x128xbf16>
      %32 = vector.shape_cast %31 : vector<1x1x1x2x128xbf16> to vector<2x128xbf16>
      %c3 = arith.constant 3 : index
      %c0_34 = arith.constant 0 : index
      %c0_35 = arith.constant 0 : index
      %33 = vector.load %arg3[%c3, %c0_34, %c0_35] : memref<9x128x128xbf16, #tpu.memory_space<vmem>>, vector<1x128x128xbf16>
      %34 = vector.shape_cast %33 : vector<1x128x128xbf16> to vector<128x128xbf16>
      %cst_36 = arith.constant dense<0.000000e+00> : vector<2x128xf32>
      %35 = tpu.matmul %32, %34, %cst_36 {dimension_numbers = #tpu.dot_dimension_numbers<[1], [0], [0], [1], [0, 0, 1, 1], [], []>} : vector<2x128xbf16>, vector<128x128xbf16>, vector<2x128xf32> -> vector<2x128xf32>
      %36 = arith.addf %28, %35 : vector<2x128xf32>
      %c0_i32_37 = arith.constant 0 : i32
      %37 = arith.addi %3, %c0_i32_37 : i32
      %c0_38 = arith.constant 0 : index
      %38 = arith.index_cast %37 : i32 to index
      %c3_39 = arith.constant 3 : index
      %c0_40 = arith.constant 0 : index
      %c0_41 = arith.constant 0 : index
      %39 = vector.load %arg2[%c0_38, %38, %c3_39, %c0_40, %c0_41] : memref<1x3x4x3x128xbf16, #tpu.memory_space<vmem>>, vector<1x1x1x2x128xbf16>
      %40 = vector.shape_cast %39 : vector<1x1x1x2x128xbf16> to vector<2x128xbf16>
      %c4 = arith.constant 4 : index
      %c0_42 = arith.constant 0 : index
      %c0_43 = arith.constant 0 : index
      %41 = vector.load %arg3[%c4, %c0_42, %c0_43] : memref<9x128x128xbf16, #tpu.memory_space<vmem>>, vector<1x128x128xbf16>
      %42 = vector.shape_cast %41 : vector<1x128x128xbf16> to vector<128x128xbf16>
      %cst_44 = arith.constant dense<0.000000e+00> : vector<2x128xf32>
      %43 = tpu.matmul %40, %42, %cst_44 {dimension_numbers = #tpu.dot_dimension_numbers<[1], [0], [0], [1], [0, 0, 1, 1], [], []>} : vector<2x128xbf16>, vector<128x128xbf16>, vector<2x128xf32> -> vector<2x128xf32>
      %44 = arith.addf %36, %43 : vector<2x128xf32>
      %c0_i32_45 = arith.constant 0 : i32
      %45 = arith.addi %3, %c0_i32_45 : i32
      %c0_46 = arith.constant 0 : index
      %46 = arith.index_cast %45 : i32 to index
      %c2_47 = arith.constant 2 : index
      %c1_48 = arith.constant 1 : index
      %c0_49 = arith.constant 0 : index
      %47 = vector.load %arg2[%c0_46, %46, %c2_47, %c1_48, %c0_49] : memref<1x3x4x3x128xbf16, #tpu.memory_space<vmem>>, vector<1x1x1x2x128xbf16>
      %48 = vector.shape_cast %47 : vector<1x1x1x2x128xbf16> to vector<2x128xbf16>
      %c5 = arith.constant 5 : index
      %c0_50 = arith.constant 0 : index
      %c0_51 = arith.constant 0 : index
      %49 = vector.load %arg3[%c5, %c0_50, %c0_51] : memref<9x128x128xbf16, #tpu.memory_space<vmem>>, vector<1x128x128xbf16>
      %50 = vector.shape_cast %49 : vector<1x128x128xbf16> to vector<128x128xbf16>
      %cst_52 = arith.constant dense<0.000000e+00> : vector<2x128xf32>
      %51 = tpu.matmul %48, %50, %cst_52 {dimension_numbers = #tpu.dot_dimension_numbers<[1], [0], [0], [1], [0, 0, 1, 1], [], []>} : vector<2x128xbf16>, vector<128x128xbf16>, vector<2x128xf32> -> vector<2x128xf32>
      %52 = arith.addf %44, %51 : vector<2x128xf32>
      %c1_i32_53 = arith.constant 1 : i32
      %53 = arith.addi %3, %c1_i32_53 : i32
      %c0_54 = arith.constant 0 : index
      %54 = arith.index_cast %53 : i32 to index
      %c0_55 = arith.constant 0 : index
      %c0_56 = arith.constant 0 : index
      %c0_57 = arith.constant 0 : index
      %55 = vector.load %arg2[%c0_54, %54, %c0_55, %c0_56, %c0_57] : memref<1x3x4x3x128xbf16, #tpu.memory_space<vmem>>, vector<1x1x1x2x128xbf16>
      %56 = vector.shape_cast %55 : vector<1x1x1x2x128xbf16> to vector<2x128xbf16>
      %c6 = arith.constant 6 : index
      %c0_58 = arith.constant 0 : index
      %c0_59 = arith.constant 0 : index
      %57 = vector.load %arg3[%c6, %c0_58, %c0_59] : memref<9x128x128xbf16, #tpu.memory_space<vmem>>, vector<1x128x128xbf16>
      %58 = vector.shape_cast %57 : vector<1x128x128xbf16> to vector<128x128xbf16>
      %cst_60 = arith.constant dense<0.000000e+00> : vector<2x128xf32>
      %59 = tpu.matmul %56, %58, %cst_60 {dimension_numbers = #tpu.dot_dimension_numbers<[1], [0], [0], [1], [0, 0, 1, 1], [], []>} : vector<2x128xbf16>, vector<128x128xbf16>, vector<2x128xf32> -> vector<2x128xf32>
      %60 = arith.addf %52, %59 : vector<2x128xf32>
      %c1_i32_61 = arith.constant 1 : i32
      %61 = arith.addi %3, %c1_i32_61 : i32
      %c0_62 = arith.constant 0 : index
      %62 = arith.index_cast %61 : i32 to index
      %c1_63 = arith.constant 1 : index
      %c0_64 = arith.constant 0 : index
      %c0_65 = arith.constant 0 : index
      %63 = vector.load %arg2[%c0_62, %62, %c1_63, %c0_64, %c0_65] : memref<1x3x4x3x128xbf16, #tpu.memory_space<vmem>>, vector<1x1x1x2x128xbf16>
      %64 = vector.shape_cast %63 : vector<1x1x1x2x128xbf16> to vector<2x128xbf16>
      %c7 = arith.constant 7 : index
      %c0_66 = arith.constant 0 : index
      %c0_67 = arith.constant 0 : index
      %65 = vector.load %arg3[%c7, %c0_66, %c0_67] : memref<9x128x128xbf16, #tpu.memory_space<vmem>>, vector<1x128x128xbf16>
      %66 = vector.shape_cast %65 : vector<1x128x128xbf16> to vector<128x128xbf16>
      %cst_68 = arith.constant dense<0.000000e+00> : vector<2x128xf32>
      %67 = tpu.matmul %64, %66, %cst_68 {dimension_numbers = #tpu.dot_dimension_numbers<[1], [0], [0], [1], [0, 0, 1, 1], [], []>} : vector<2x128xbf16>, vector<128x128xbf16>, vector<2x128xf32> -> vector<2x128xf32>
      %68 = arith.addf %60, %67 : vector<2x128xf32>
      %c1_i32_69 = arith.constant 1 : i32
      %69 = arith.addi %3, %c1_i32_69 : i32
      %c0_70 = arith.constant 0 : index
      %70 = arith.index_cast %69 : i32 to index
      %c0_71 = arith.constant 0 : index
      %c1_72 = arith.constant 1 : index
      %c0_73 = arith.constant 0 : index
      %71 = vector.load %arg2[%c0_70, %70, %c0_71, %c1_72, %c0_73] : memref<1x3x4x3x128xbf16, #tpu.memory_space<vmem>>, vector<1x1x1x2x128xbf16>
      %72 = vector.shape_cast %71 : vector<1x1x1x2x128xbf16> to vector<2x128xbf16>
      %c8 = arith.constant 8 : index
      %c0_74 = arith.constant 0 : index
      %c0_75 = arith.constant 0 : index
      %73 = vector.load %arg3[%c8, %c0_74, %c0_75] : memref<9x128x128xbf16, #tpu.memory_space<vmem>>, vector<1x128x128xbf16>
      %74 = vector.shape_cast %73 : vector<1x128x128xbf16> to vector<128x128xbf16>
      %cst_76 = arith.constant dense<0.000000e+00> : vector<2x128xf32>
      %75 = tpu.matmul %72, %74, %cst_76 {dimension_numbers = #tpu.dot_dimension_numbers<[1], [0], [0], [1], [0, 0, 1, 1], [], []>} : vector<2x128xbf16>, vector<128x128xbf16>, vector<2x128xf32> -> vector<2x128xf32>
      %76 = arith.addf %68, %75 : vector<2x128xf32>
      %77 = vector.broadcast %0 : vector<1x128xf32> to vector<2x128xf32>
      %78 = arith.addf %76, %77 : vector<2x128xf32>
      %cst_77 = arith.constant 0.000000e+00 : f32
      %79 = vector.broadcast %cst_77 : f32 to vector<2x128xf32>
      %80 = arith.maximumf %78, %79 : vector<2x128xf32>
      %81 = arith.truncf %80 : vector<2x128xf32> to vector<2x128xbf16>
      %c0_78 = arith.constant 0 : index
      %82 = arith.index_cast %3 : i32 to index
      %c0_79 = arith.constant 0 : index
      %c0_80 = arith.constant 0 : index
      %83 = vector.load %arg5[%c0_78, %82, %c0_79, %c0_80] : memref<1x2x2x128xbf16, #tpu.memory_space<vmem>>, vector<1x1x2x128xbf16>
      %84 = vector.shape_cast %83 : vector<1x1x2x128xbf16> to vector<2x128xbf16>
      %85 = vector.shape_cast %81 : vector<2x128xbf16> to vector<1x1x2x128xbf16>
      tpu.vector_store %arg5[%c0_78, %82, %c0_79, %c0_80], %85 {strides = array<i32>} : memref<1x2x2x128xbf16, #tpu.memory_space<vmem>>, vector<1x1x2x128xbf16>,
    }
    %c2_i32_1 = arith.constant 2 : i32
    return
  }
  func.func @transform_0(%arg0: i32, %arg1: i32) -> (i32, i32, i32, i32, i32) {
    %c0_i32 = arith.constant 0 : i32
    %c0_i32_0 = arith.constant 0 : i32
    %c0_i32_1 = arith.constant 0 : i32
    %c0_i32_2 = arith.constant 0 : i32
    %c0_i32_3 = arith.constant 0 : i32
    return %arg0, %c0_i32, %c0_i32_0, %c0_i32_1, %c0_i32_2 : i32, i32, i32, i32, i32
  }
  func.func @transform_1(%arg0: i32, %arg1: i32) -> (i32, i32, i32) {
    %c0_i32 = arith.constant 0 : i32
    %c0_i32_0 = arith.constant 0 : i32
    %c0_i32_1 = arith.constant 0 : i32
    return %c0_i32, %c0_i32_0, %arg1 : i32, i32, i32
  }
  func.func @transform_2(%arg0: i32, %arg1: i32) -> (i32, i32) {
    %c0_i32 = arith.constant 0 : i32
    %c0_i32_0 = arith.constant 0 : i32
    return %c0_i32, %arg1 : i32, i32
  }
  func.func @transform_3(%arg0: i32, %arg1: i32) -> (i32, i32, i32, i32) {
    %c0_i32 = arith.constant 0 : i32
    %c0_i32_0 = arith.constant 0 : i32
    %c0_i32_1 = arith.constant 0 : i32
    return %arg0, %c0_i32, %c0_i32_0, %arg1 : i32, i32, i32, i32
  }
}

</mosaic_0001>

<llo_original>
// kernel: sub.1
$region0: #{sub.1}
  #allocation0 [shape = 's32[1]{0}', space=sflag, size = 0x4, scoped, tag = 'scoped memory for sub.1']
  %s0 = inlined_call_operand.<no memory space> [shape: f32[], index: 0, kind: input, shape index: {}]
  %s1 = inlined_call_operand.vmem [shape: f32[64], index: 1, kind: output, shape index: {}]
  %v2 = vstv %s0
  %3 = vst [vmem:[%s1] sm:$0x1] %v2

// kernel: _lambda_.3
$region0: #{_lambda_.3}
  #allocation0 [shape = 'u32[]', space=smem, size = 0x4, offset = 0x4, fixed_abs, tag = 'smem constant byte address 0x4 - core index']
  #allocation1 [shape = 'u32[144,128]{1,0:T(1,128)}', space=vmem, size = 0x12000, scoped, tag = 'internal scratch']
  %s0 = inlined_call_operand.vmem [shape: bf16[2,9,4,9,3], index: 0, kind: input, shape index: {}]
  %s1 = inlined_call_operand.vmem [shape: bf16[9,3,128], index: 1, kind: input, shape index: {}]
  %s2 = inlined_call_operand.vmem [shape: f32[1,128], index: 2, kind: input, shape index: {}]
  %s3 = inlined_call_operand.vmem [shape: bf16[2,8,8,128], index: 3, kind: output, shape index: {}]
  %s4 = sld [smem:[#allocation0]]
  $region52: #{_lambda_.3} parent=0
    _
  %s6 = ssub.s32 1, %s4
  %s7 = scalar_select 0, %s6, %s4
  loop: start=0, step=1, limit=4
  $region2: #{_lambda_.3} parent=0 // loop_pre_header
    _
  $region3: #{_lambda_.3} parent=0 // loop_header
    %s9 = sphi 0, %s13
    %p10 = scmp.ge.s32.totalorder %s9, 4
    %s16 = sphi 0, %s28
    %s17 = sphi 0, %s24
    %s18 = sphi 0, %s16
    %s19 = sphi 0, %s17
    %s20 = sphi 0, %s18
    %s21 = sphi 0, %s19
    %s31 = sphi 0, %s33
    %s34 = sphi 0, %s31
    %s35 = sphi 0, %s34
    %s51 = sphi 0, %s35
    %s57 = sphi 0, %s59
    %s60 = sphi 0, %s57
    %s61 = sphi 0, %s60
    %s77 = sphi 0, %s61
    %s83 = sphi 0, %s85
    %s86 = sphi 0, %s83
    %s87 = sphi 0, %s86
    %s103 = sphi 0, %s87
    %s111 = sphi 0, %s113
    %s114 = sphi 0, %s111
    %s115 = sphi 0, %s114
    %s131 = sphi 0, %s115
  $region4: #{_lambda_.3} parent=0 // loop_header_branch
    %12 = sbr.rel (%p10) target = $region8
  $region5: #{_lambda_.3} parent=0 // loop_body
    %s14 = ssub.s32 %s9, 1
    %s15 = ssub.s32 %s9, 2
    %s22 = sadd.s32 1, %s17
    %p23 = scmp.ge.s32.totalorder %s22, 1
    %s24 = scalar_select %p23, 0, %s22
    %s25 = sadd.s32 1, %s16
    %s26 = scalar_select %p23, %s25, %s16
    %p27 = scmp.ge.s32.totalorder %s26, 2
    %s28 = scalar_select %p27, 0, %s26
    %s29 = ssub.s32 %s16, %s28
    %p30 = scmp.eq.s32.totalorder %s29, 0
    %s32 = sadd.s32 %s31, 1
    %s33 = scalar_select %p30, %s31, %s32
    %p36 = pneg %p30
    %p37 = scmp.eq.s32.totalorder %s9, 1
    %p38 = por %p36, %p37
    %p39 = scmp.ne.s32.totalorder %s31, %s34
    %p40 = scmp.eq.s32.totalorder %s9, 0
    %p41 = por %p39, %p40
    %p42 = scmp.ne.s32.totalorder %s31, %s34
    %p43 = scmp.eq.s32.totalorder %s14, 1
    %p44 = por %p42, %p43
    %p45 = scmp.ne.s32.totalorder %s34, %s35
    %p46 = scmp.eq.s32.totalorder %s14, 0
    %p47 = por %p45, %p46
    %p48 = scmp.ne.s32.totalorder %s34, %s35
    %p49 = scmp.eq.s32.totalorder %s15, 1
    %p50 = por %p48, %p49
    %p52 = scmp.ne.s32.totalorder %s35, %s51
    %p53 = scmp.eq.s32.totalorder %s15, 0
    %p54 = por %p52, %p53
    %s55 = ssub.s32 %s17, %s24
    %p56 = scmp.eq.s32.totalorder %s55, 0
    %s58 = sadd.s32 %s57, 1
    %s59 = scalar_select %p56, %s57, %s58
    %p62 = pneg %p56
    %p63 = scmp.eq.s32.totalorder %s9, 1
    %p64 = por %p62, %p63
    %p65 = scmp.ne.s32.totalorder %s57, %s60
    %p66 = scmp.eq.s32.totalorder %s9, 0
    %p67 = por %p65, %p66
    %p68 = scmp.ne.s32.totalorder %s57, %s60
    %p69 = scmp.eq.s32.totalorder %s14, 1
    %p70 = por %p68, %p69
    %p71 = scmp.ne.s32.totalorder %s60, %s61
    %p72 = scmp.eq.s32.totalorder %s14, 0
    %p73 = por %p71, %p72
    %p74 = scmp.ne.s32.totalorder %s60, %s61
    %p75 = scmp.eq.s32.totalorder %s15, 1
    %p76 = por %p74, %p75
    %p78 = scmp.ne.s32.totalorder %s61, %s77
    %p79 = scmp.eq.s32.totalorder %s15, 0
    %p80 = por %p78, %p79
    %s81 = ssub.s32 %s17, %s24
    %p82 = scmp.eq.s32.totalorder %s81, 0
    %s84 = sadd.s32 %s83, 1
    %s85 = scalar_select %p82, %s83, %s84
    %p88 = pneg %p82
    %p89 = scmp.eq.s32.totalorder %s9, 1
    %p90 = por %p88, %p89
    %p91 = scmp.ne.s32.totalorder %s83, %s86
    %p92 = scmp.eq.s32.totalorder %s9, 0
    %p93 = por %p91, %p92
    %p94 = scmp.ne.s32.totalorder %s83, %s86
    %p95 = scmp.eq.s32.totalorder %s14, 1
    %p96 = por %p94, %p95
    %p97 = scmp.ne.s32.totalorder %s86, %s87
    %p98 = scmp.eq.s32.totalorder %s14, 0
    %p99 = por %p97, %p98
    %p100 = scmp.ne.s32.totalorder %s86, %s87
    %p101 = scmp.eq.s32.totalorder %s15, 1
    %p102 = por %p100, %p101
    %p104 = scmp.ne.s32.totalorder %s87, %s103
    %p105 = scmp.eq.s32.totalorder %s15, 0
    %p106 = por %p104, %p105
    %s107 = ssub.s32 %s16, %s28
    %s108 = ssub.s32 %s17, %s24
    %s109 = sor.u32 %s107, %s108
    %p110 = scmp.eq.s32.totalorder %s109, 0
    %s112 = sadd.s32 %s111, 1
    %s113 = scalar_select %p110, %s111, %s112
    %p116 = pneg %p110
    %p117 = scmp.eq.s32.totalorder %s9, 1
    %p118 = por %p116, %p117
    %p119 = scmp.ne.s32.totalorder %s111, %s114
    %p120 = scmp.eq.s32.totalorder %s9, 0
    %p121 = por %p119, %p120
    %p122 = scmp.ne.s32.totalorder %s111, %s114
    %p123 = scmp.eq.s32.totalorder %s14, 1
    %p124 = por %p122, %p123
    %p125 = scmp.ne.s32.totalorder %s114, %s115
    %p126 = scmp.eq.s32.totalorder %s14, 0
    %p127 = por %p125, %p126
    %p128 = scmp.ne.s32.totalorder %s114, %s115
    %p129 = scmp.eq.s32.totalorder %s15, 1
    %p130 = por %p128, %p129
    %p132 = scmp.ne.s32.totalorder %s115, %s131
    %p133 = scmp.eq.s32.totalorder %s15, 0
    %p134 = por %p132, %p133
    %p135 = scmp.le.s32.totalorder 1, %s9
    %p136 = scmp.lt.s32.totalorder %s9, 3
    %p137 = pnand %p135, %p136
    %p138 = pneg %p137
    // Predicated region
    $region9: #{_lambda_.3} parent=5 // pred_check
      _
    $region10: #{_lambda_.3} parent=5 // pred_check_branch
      %140 = sbr.rel (%p137) target = $region12
    $region11: #{_lambda_.3} parent=5 // pred_region
      %s141 = ssub.s32 %s9, 1
      // Predicated region
      $region13: #{_lambda_.3} parent=11 // pred_check
        %p142 = pneg %p73
      $region14: #{_lambda_.3} parent=11 // pred_check_branch
        %144 = sbr.rel (%p142) target = $region16
      $region15: #{_lambda_.3} parent=11 // pred_region
        %p145 = scmp.lt.s32.totalorder %s19, 0
        %s146 = scalar_select %p145, %s19, 0
        %s147 = smul.addr %s146, 2
        %s148 = scalar_lea.vmem %s1, %s147
      $region16: #{_lambda_.3} parent=11 // pred_fallthru
        _
      // Predicated region
      $region17: #{_lambda_.3} parent=11 // pred_check
        %p149 = pneg %p99
      $region18: #{_lambda_.3} parent=11 // pred_check_branch
        %151 = sbr.rel (%p149) target = $region20
      $region19: #{_lambda_.3} parent=11 // pred_region
        %p152 = scmp.lt.s32.totalorder %s19, 0
        %s153 = scalar_select %p152, %s19, 0
        %s154 = scalar_lea.vmem %s2, %s153
      $region20: #{_lambda_.3} parent=11 // pred_fallthru
        _
    $region12: #{_lambda_.3} parent=5 // pred_fallthru
      _
    %p155 = scmp.lt.s32.totalorder %s9, 2
    // Predicated region
    $region21: #{_lambda_.3} parent=5 // pred_check
      %p156 = pneg %p155
    $region22: #{_lambda_.3} parent=5 // pred_check_branch
      %158 = sbr.rel (%p156) target = $region24
    $region23: #{_lambda_.3} parent=5 // pred_region
      // Predicated region
      $region25: #{_lambda_.3} parent=23 // pred_check
        %p159 = pneg %p41
      $region26: #{_lambda_.3} parent=23 // pred_check_branch
        %161 = sbr.rel (%p159) target = $region28
      $region27: #{_lambda_.3} parent=23 // pred_region
        %p162 = scmp.lt.s32.totalorder %s16, 1
        %s163 = scalar_select %p162, %s16, 1
        %s164 = smul.addr %s163, 72
        %s165 = smul.addr %s164, 4
        %s166 = scalar_lea.vmem %s0, %s165
      $region28: #{_lambda_.3} parent=23 // pred_fallthru
        _
    $region24: #{_lambda_.3} parent=5 // pred_fallthru
      _
    %p167 = scmp.le.s32.totalorder 1, %s9
    %p168 = scmp.lt.s32.totalorder %s9, 3
    %p169 = pnand %p167, %p168
    %p170 = pneg %p169
    // Predicated region
    $region29: #{_lambda_.3} parent=5 // pred_check
      _
    $region30: #{_lambda_.3} parent=5 // pred_check_branch
      %172 = sbr.rel (%p169) target = $region32
    $region31: #{_lambda_.3} parent=5 // pred_region
      %s173 = ssub.s32 %s9, 1
      %p174 = scmp.lt.s32.totalorder %s18, 1
      %s175 = scalar_select %p174, %s18, 1
      %s176 = smul.addr %s175, 72
      %s177 = smul.addr %s176, 4
      %s178 = scalar_lea.vmem %s0, %s177
      %p179 = pneg %p47
      %p180 = pneg %p44
      %p181 = scmp.lt.s32.totalorder %s19, 0
      %s182 = scalar_select %p181, %s19, 0
      %s183 = smul.addr %s182, 2
      %s184 = scalar_lea.vmem %s1, %s183
      %p185 = pneg %p73
      %p186 = pneg %p70
      %p187 = scmp.lt.s32.totalorder %s19, 0
      %s188 = scalar_select %p187, %s19, 0
      %s189 = scalar_lea.vmem %s2, %s188
      %p190 = pneg %p99
      %p191 = pneg %p96
      %p192 = pneg %p127
      %p193 = pneg %p124
      %p194 = scmp.lt.s32.totalorder %s18, 1
      %s195 = scalar_select %p194, %s18, 1
      %p196 = scmp.lt.s32.totalorder %s19, 0
      %s197 = scalar_select %p196, %s19, 0
      %s198 = smul.addr %s195, 8
      %s199 = sadd.s32 %s197, %s198
      %s200 = smul.addr %s199, 4
      %s201 = scalar_lea.vmem %s3, %s200
      %p202 = scmp.lt.s32.totalorder %s18, 1
      %s203 = scalar_select %p202, %s18, 1
      %s204 = smul.addr %s203, 72
      %s205 = smul.addr %s204, 4
      %s206 = scalar_lea.vmem %s0, %s205
      %p207 = scmp.lt.s32.totalorder %s19, 0
      %s208 = scalar_select %p207, %s19, 0
      %s209 = smul.addr %s208, 2
      %s210 = scalar_lea.vmem %s1, %s209
      %p211 = scmp.lt.s32.totalorder %s19, 0
      %s212 = scalar_select %p211, %s19, 0
      %s213 = scalar_lea.vmem %s2, %s212
      %p214 = scmp.lt.s32.totalorder %s18, 1
      %s215 = scalar_select %p214, %s18, 1
      %p216 = scmp.lt.s32.totalorder %s19, 0
      %s217 = scalar_select %p216, %s19, 0
      %s218 = smul.addr %s215, 8
      %s219 = sadd.s32 %s217, %s218
      %s220 = smul.addr %s219, 4
      %s221 = scalar_lea.vmem %s3, %s220
      %v223 = vld [vmem:[%s213] sm:$0x1]
      loop: start=0, step=1, limit=8
      $region33: #{_lambda_.3} parent=31 // loop_pre_header
        _
      $region34: #{_lambda_.3} parent=31 // loop_header
        %s225 = sphi 0, %s229
        %p226 = scmp.ge.s32.totalorder %s225, 8
      $region35: #{_lambda_.3} parent=31 // loop_header_branch
        %228 = sbr.rel (%p226) target = $region39
      $region36: #{_lambda_.3} parent=31 // loop_body
        %s230 = smul.u32 %s225, 8
        %s231 = smul.addr %s230, 4
        %s232 = scalar_lea.vmem %s206, %s231
        %v233 = vld [vmem:[%s232] sm:$0xf]
        %v234 = vld [vmem:[%s210] sm:$0x3]
        %s235 = sadd.s32 2, %s230
        %s236 = smul.addr %s235, 4
        %s237 = scalar_lea.vmem %s206, %s236
        %v238 = vld [vmem:[%s237] sm:$0xf]
        %s239 = scalar_lea.vmem %s210, 2
        %v240 = vld [vmem:[%s239] sm:$0x3]
        %vm241 = vcmask 23552
        %v243 = vsel %vm241, %v238, 0
        %vm245 = vcmask 1040384
        %vm246 = vcmask 1041408
        %v247 = vsel %vm245, 4294967295, 65535
        %v248 = vsel %vm246, %v247, 0
        %v250 = vand.u32 %v240, %v248
        %252 = vmatprep.subr.bf16.mxu0 0
        %253 = vmatpush1.bf16.msra.mxu0 0
        %254 = vmatprep.subr.bf16.mxu0 0
        %255 = vmatpush1.bf16.msra.mxu0 0
        %256 = vmatprep.subr.bf16.mxu0 0
        %257 = vmatpush1.bf16.msra.mxu0 0
        %258 = vmatprep.subr.bf16.mxu0 0
        %259 = vmatpush1.bf16.msra.mxu0 0
        %260 = vmatprep.subr.bf16.mxu0 0
        %261 = vmatpush1.bf16.msra.mxu0 0
        %262 = vmatprep.subr.bf16.mxu0 0
        %263 = vmatpush1.bf16.msra.mxu0 0
        %264 = vmatprep.subr.bf16.mxu0 0
        %265 = vmatpush1.bf16.msra.mxu0 0
        %266 = vmatprep.subr.bf16.mxu0 0
        %267 = vmatpush1.bf16.msra.mxu0 %v250
        %268 = vmatprep.subr.bf16.mxu0 0
        %269 = vmatpush2.bf16.msra.mxu0 0
        %270 = vmatprep.subr.bf16.mxu0 0
        %271 = vmatpush2.bf16.msra.mxu0 0
        %272 = vmatprep.subr.bf16.mxu0 0
        %273 = vmatpush2.bf16.msra.mxu0 0
        %274 = vmatprep.subr.bf16.mxu0 0
        %275 = vmatpush2.bf16.msra.mxu0 0
        %276 = vmatprep.subr.bf16.mxu0 0
        %277 = vmatpush2.bf16.msra.mxu0 0
        %278 = vmatprep.subr.bf16.mxu0 0
        %279 = vmatpush2.bf16.msra.mxu0 0
        %280 = vmatprep.subr.bf16.mxu0 0
        %281 = vmatpush2.bf16.msra.mxu0 0
        %282 = vmatprep.subr.bf16.mxu0 0
        %283 = vmatpush2.bf16.msra.mxu0 0
        %284 = vmatprep.mubr.bf16.mxu0 0
        %285 = vmatmul.mubr.bf16.gmra.mxu0 %v243
        %v286 = vpop.f32.mrf.mxu0
        %v287 = vadd.f32 0.0, %v286
        %v288 = vpop.f32.mrf.mxu0
        %v289 = vpop.f32.mrf.mxu0
        %v290 = vpop.f32.mrf.mxu0
        %291 = vdwg.mxu0
        %v293 = vsel %vm241, %v233, 0
        %v296 = vand.u32 %v234, %v248
        %298 = vmatprep.subr.bf16.mxu0 0
        %299 = vmatpush1.bf16.msra.mxu0 0
        %300 = vmatprep.subr.bf16.mxu0 0
        %301 = vmatpush1.bf16.msra.mxu0 0
        %302 = vmatprep.subr.bf16.mxu0 0
        %303 = vmatpush1.bf16.msra.mxu0 0
        %304 = vmatprep.subr.bf16.mxu0 0
        %305 = vmatpush1.bf16.msra.mxu0 0
        %306 = vmatprep.subr.bf16.mxu0 0
        %307 = vmatpush1.bf16.msra.mxu0 0
        %308 = vmatprep.subr.bf16.mxu0 0
        %309 = vmatpush1.bf16.msra.mxu0 0
        %310 = vmatprep.subr.bf16.mxu0 0
        %311 = vmatpush1.bf16.msra.mxu0 0
        %312 = vmatprep.subr.bf16.mxu0 0
        %313 = vmatpush1.bf16.msra.mxu0 %v296
        %314 = vmatprep.subr.bf16.mxu0 0
        %315 = vmatpush2.bf16.msra.mxu0 0
        %316 = vmatprep.subr.bf16.mxu0 0
        %317 = vmatpush2.bf16.msra.mxu0 0
        %318 = vmatprep.subr.bf16.mxu0 0
        %319 = vmatpush2.bf16.msra.mxu0 0
        %320 = vmatprep.subr.bf16.mxu0 0
        %321 = vmatpush2.bf16.msra.mxu0 0
        %322 = vmatprep.subr.bf16.mxu0 0
        %323 = vmatpush2.bf16.msra.mxu0 0
        %324 = vmatprep.subr.bf16.mxu0 0
        %325 = vmatpush2.bf16.msra.mxu0 0
        %326 = vmatprep.subr.bf16.mxu0 0
        %327 = vmatpush2.bf16.msra.mxu0 0
        %328 = vmatprep.subr.bf16.mxu0 0
        %329 = vmatpush2.bf16.msra.mxu0 0
        %330 = vmatprep.mubr.bf16.mxu0 0
        %331 = vmatmul.mubr.bf16.gmra.mxu0 %v293
        %v332 = vpop.f32.mrf.mxu0
        %v333 = vadd.f32 %v287, %v332
        %v334 = vpop.f32.mrf.mxu0
        %v335 = vpop.f32.mrf.mxu0
        %v336 = vpop.f32.mrf.mxu0
        %337 = vdwg.mxu0
        %v338 = vld [vmem:[%s232] sm:$0xf]
        %v339 = vld [vmem:[%s232 + $0x4] sm:$0x1]
        %s340 = scalar_lea.vmem %s210, 4
        %v341 = vld [vmem:[%s340] sm:$0x3]
        %v344 = vunpack.c.l.b16 %v338
        %v345 = vunpack.c.l.b16 %v339
        %v346 = vpack.c.b16 %v345, %v344
        %v348 = vshrl.u32 %v346, 16
        %v350 = vshll.u32 %v346, 16
        %v352 = vrot.slane %v350, 1
        %v353 = vor.u32 %v348, %v352
        %v355 = vsel %vm241, %v353, 0
        %v358 = vand.u32 %v341, %v248
        %360 = vmatprep.subr.bf16.mxu0 0
        %361 = vmatpush1.bf16.msra.mxu0 0
        %362 = vmatprep.subr.bf16.mxu0 0
        %363 = vmatpush1.bf16.msra.mxu0 0
        %364 = vmatprep.subr.bf16.mxu0 0
        %365 = vmatpush1.bf16.msra.mxu0 0
        %366 = vmatprep.subr.bf16.mxu0 0
        %367 = vmatpush1.bf16.msra.mxu0 0
        %368 = vmatprep.subr.bf16.mxu0 0
        %369 = vmatpush1.bf16.msra.mxu0 0
        %370 = vmatprep.subr.bf16.mxu0 0
        %371 = vmatpush1.bf16.msra.mxu0 0
        %372 = vmatprep.subr.bf16.mxu0 0
        %373 = vmatpush1.bf16.msra.mxu0 0
        %374 = vmatprep.subr.bf16.mxu0 0
        %375 = vmatpush1.bf16.msra.mxu0 %v358
        %376 = vmatprep.subr.bf16.mxu0 0
        %377 = vmatpush2.bf16.msra.mxu0 0
        %378 = vmatprep.subr.bf16.mxu0 0
        %379 = vmatpush2.bf16.msra.mxu0 0
        %380 = vmatprep.subr.bf16.mxu0 0
        %381 = vmatpush2.bf16.msra.mxu0 0
        %382 = vmatprep.subr.bf16.mxu0 0
        %383 = vmatpush2.bf16.msra.mxu0 0
        %384 = vmatprep.subr.bf16.mxu0 0
        %385 = vmatpush2.bf16.msra.mxu0 0
        %386 = vmatprep.subr.bf16.mxu0 0
        %387 = vmatpush2.bf16.msra.mxu0 0
        %388 = vmatprep.subr.bf16.mxu0 0
        %389 = vmatpush2.bf16.msra.mxu0 0
        %390 = vmatprep.subr.bf16.mxu0 0
        %391 = vmatpush2.bf16.msra.mxu0 0
        %392 = vmatprep.mubr.bf16.mxu0 0
        %393 = vmatmul.mubr.bf16.gmra.mxu0 %v355
        %v394 = vpop.f32.mrf.mxu0
        %v395 = vadd.f32 0.0, %v394
        %v396 = vpop.f32.mrf.mxu0
        %v397 = vpop.f32.mrf.mxu0
        %v398 = vpop.f32.mrf.mxu0
        %399 = vdwg.mxu0
        %v400 = vadd.f32 %v333, %v395
        %s401 = sadd.s32 4, %s230
        %s402 = smul.addr %s401, 4
        %s403 = scalar_lea.vmem %s206, %s402
        %v404 = vld [vmem:[%s403] sm:$0xf]
        %s405 = scalar_lea.vmem %s210, 6
        %v406 = vld [vmem:[%s405] sm:$0x3]
        %v408 = vsel %vm241, %v404, 0
        %v411 = vand.u32 %v406, %v248
        %413 = vmatprep.subr.bf16.mxu0 0
        %414 = vmatpush1.bf16.msra.mxu0 0
        %415 = vmatprep.subr.bf16.mxu0 0
        %416 = vmatpush1.bf16.msra.mxu0 0
        %417 = vmatprep.subr.bf16.mxu0 0
        %418 = vmatpush1.bf16.msra.mxu0 0
        %419 = vmatprep.subr.bf16.mxu0 0
        %420 = vmatpush1.bf16.msra.mxu0 0
        %421 = vmatprep.subr.bf16.mxu0 0
        %422 = vmatpush1.bf16.msra.mxu0 0
        %423 = vmatprep.subr.bf16.mxu0 0
        %424 = vmatpush1.bf16.msra.mxu0 0
        %425 = vmatprep.subr.bf16.mxu0 0
        %426 = vmatpush1.bf16.msra.mxu0 0
        %427 = vmatprep.subr.bf16.mxu0 0
        %428 = vmatpush1.bf16.msra.mxu0 %v411
        %429 = vmatprep.subr.bf16.mxu0 0
        %430 = vmatpush2.bf16.msra.mxu0 0
        %431 = vmatprep.subr.bf16.mxu0 0
        %432 = vmatpush2.bf16.msra.mxu0 0
        %433 = vmatprep.subr.bf16.mxu0 0
        %434 = vmatpush2.bf16.msra.mxu0 0
        %435 = vmatprep.subr.bf16.mxu0 0
        %436 = vmatpush2.bf16.msra.mxu0 0
        %437 = vmatprep.subr.bf16.mxu0 0
        %438 = vmatpush2.bf16.msra.mxu0 0
        %439 = vmatprep.subr.bf16.mxu0 0
        %440 = vmatpush2.bf16.msra.mxu0 0
        %441 = vmatprep.subr.bf16.mxu0 0
        %442 = vmatpush2.bf16.msra.mxu0 0
        %443 = vmatprep.subr.bf16.mxu0 0
        %444 = vmatpush2.bf16.msra.mxu0 0
        %445 = vmatprep.mubr.bf16.mxu0 0
        %446 = vmatmul.mubr.bf16.gmra.mxu0 %v408
        %v447 = vpop.f32.mrf.mxu0
        %v448 = vadd.f32 0.0, %v447
        %v449 = vpop.f32.mrf.mxu0
        %v450 = vpop.f32.mrf.mxu0
        %v451 = vpop.f32.mrf.mxu0
        %452 = vdwg.mxu0
        %v453 = vadd.f32 %v400, %v448
        %s454 = sadd.s32 6, %s230
        %s455 = smul.addr %s454, 4
        %s456 = scalar_lea.vmem %s206, %s455
        %v457 = vld [vmem:[%s456] sm:$0xf]
        %s458 = scalar_lea.vmem %s210, 8
        %v459 = vld [vmem:[%s458] sm:$0x3]
        %v461 = vsel %vm241, %v457, 0
        %v464 = vand.u32 %v459, %v248
        %466 = vmatprep.subr.bf16.mxu0 0
        %467 = vmatpush1.bf16.msra.mxu0 0
        %468 = vmatprep.subr.bf16.mxu0 0
        %469 = vmatpush1.bf16.msra.mxu0 0
        %470 = vmatprep.subr.bf16.mxu0 0
        %471 = vmatpush1.bf16.msra.mxu0 0
        %472 = vmatprep.subr.bf16.mxu0 0
        %473 = vmatpush1.bf16.msra.mxu0 0
        %474 = vmatprep.subr.bf16.mxu0 0
        %475 = vmatpush1.bf16.msra.mxu0 0
        %476 = vmatprep.subr.bf16.mxu0 0
        %477 = vmatpush1.bf16.msra.mxu0 0
        %478 = vmatprep.subr.bf16.mxu0 0
        %479 = vmatpush1.bf16.msra.mxu0 0
        %480 = vmatprep.subr.bf16.mxu0 0
        %481 = vmatpush1.bf16.msra.mxu0 %v464
        %482 = vmatprep.subr.bf16.mxu0 0
        %483 = vmatpush2.bf16.msra.mxu0 0
        %484 = vmatprep.subr.bf16.mxu0 0
        %485 = vmatpush2.bf16.msra.mxu0 0
        %486 = vmatprep.subr.bf16.mxu0 0
        %487 = vmatpush2.bf16.msra.mxu0 0
        %488 = vmatprep.subr.bf16.mxu0 0
        %489 = vmatpush2.bf16.msra.mxu0 0
        %490 = vmatprep.subr.bf16.mxu0 0
        %491 = vmatpush2.bf16.msra.mxu0 0
        %492 = vmatprep.subr.bf16.mxu0 0
        %493 = vmatpush2.bf16.msra.mxu0 0
        %494 = vmatprep.subr.bf16.mxu0 0
        %495 = vmatpush2.bf16.msra.mxu0 0
        %496 = vmatprep.subr.bf16.mxu0 0
        %497 = vmatpush2.bf16.msra.mxu0 0
        %498 = vmatprep.mubr.bf16.mxu0 0
        %499 = vmatmul.mubr.bf16.gmra.mxu0 %v461
        %v500 = vpop.f32.mrf.mxu0
        %v501 = vadd.f32 0.0, %v500
        %v502 = vpop.f32.mrf.mxu0
        %v503 = vpop.f32.mrf.mxu0
        %v504 = vpop.f32.mrf.mxu0
        %505 = vdwg.mxu0
        %v506 = vadd.f32 %v453, %v501
        %v507 = vld [vmem:[%s403] sm:$0xf]
        %v508 = vld [vmem:[%s403 + $0x4] sm:$0x1]
        %s509 = scalar_lea.vmem %s210, 10
        %v510 = vld [vmem:[%s509] sm:$0x3]
        %v513 = vunpack.c.l.b16 %v507
        %v514 = vunpack.c.l.b16 %v508
        %v515 = vpack.c.b16 %v514, %v513
        %v517 = vshrl.u32 %v515, 16
        %v519 = vshll.u32 %v515, 16
        %v521 = vrot.slane %v519, 1
        %v522 = vor.u32 %v517, %v521
        %v524 = vsel %vm241, %v522, 0
        %v527 = vand.u32 %v510, %v248
        %529 = vmatprep.subr.bf16.mxu0 0
        %530 = vmatpush1.bf16.msra.mxu0 0
        %531 = vmatprep.subr.bf16.mxu0 0
        %532 = vmatpush1.bf16.msra.mxu0 0
        %533 = vmatprep.subr.bf16.mxu0 0
        %534 = vmatpush1.bf16.msra.mxu0 0
        %535 = vmatprep.subr.bf16.mxu0 0
        %536 = vmatpush1.bf16.msra.mxu0 0
        %537 = vmatprep.subr.bf16.mxu0 0
        %538 = vmatpush1.bf16.msra.mxu0 0
        %539 = vmatprep.subr.bf16.mxu0 0
        %540 = vmatpush1.bf16.msra.mxu0 0
        %541 = vmatprep.subr.bf16.mxu0 0
        %542 = vmatpush1.bf16.msra.mxu0 0
        %543 = vmatprep.subr.bf16.mxu0 0
        %544 = vmatpush1.bf16.msra.mxu0 %v527
        %545 = vmatprep.subr.bf16.mxu0 0
        %546 = vmatpush2.bf16.msra.mxu0 0
        %547 = vmatprep.subr.bf16.mxu0 0
        %548 = vmatpush2.bf16.msra.mxu0 0
        %549 = vmatprep.subr.bf16.mxu0 0
        %550 = vmatpush2.bf16.msra.mxu0 0
        %551 = vmatprep.subr.bf16.mxu0 0
        %552 = vmatpush2.bf16.msra.mxu0 0
        %553 = vmatprep.subr.bf16.mxu0 0
        %554 = vmatpush2.bf16.msra.mxu0 0
        %555 = vmatprep.subr.bf16.mxu0 0
        %556 = vmatpush2.bf16.msra.mxu0 0
        %557 = vmatprep.subr.bf16.mxu0 0
        %558 = vmatpush2.bf16.msra.mxu0 0
        %559 = vmatprep.subr.bf16.mxu0 0
        %560 = vmatpush2.bf16.msra.mxu0 0
        %561 = vmatprep.mubr.bf16.mxu0 0
        %562 = vmatmul.mubr.bf16.gmra.mxu0 %v524
        %v563 = vpop.f32.mrf.mxu0
        %v564 = vadd.f32 0.0, %v563
        %v565 = vpop.f32.mrf.mxu0
        %v566 = vpop.f32.mrf.mxu0
        %v567 = vpop.f32.mrf.mxu0
        %568 = vdwg.mxu0
        %v569 = vadd.f32 %v506, %v564
        %s570 = sadd.s32 %s225, 1
        %s571 = smul.u32 %s570, 8
        %s572 = smul.addr %s571, 4
        %s573 = scalar_lea.vmem %s206, %s572
        %v574 = vld [vmem:[%s573] sm:$0xf]
        %s575 = scalar_lea.vmem %s210, 12
        %v576 = vld [vmem:[%s575] sm:$0x3]
        %v578 = vsel %vm241, %v574, 0
        %v581 = vand.u32 %v576, %v248
        %583 = vmatprep.subr.bf16.mxu0 0
        %584 = vmatpush1.bf16.msra.mxu0 0
        %585 = vmatprep.subr.bf16.mxu0 0
        %586 = vmatpush1.bf16.msra.mxu0 0
        %587 = vmatprep.subr.bf16.mxu0 0
        %588 = vmatpush1.bf16.msra.mxu0 0
        %589 = vmatprep.subr.bf16.mxu0 0
        %590 = vmatpush1.bf16.msra.mxu0 0
        %591 = vmatprep.subr.bf16.mxu0 0
        %592 = vmatpush1.bf16.msra.mxu0 0
        %593 = vmatprep.subr.bf16.mxu0 0
        %594 = vmatpush1.bf16.msra.mxu0 0
        %595 = vmatprep.subr.bf16.mxu0 0
        %596 = vmatpush1.bf16.msra.mxu0 0
        %597 = vmatprep.subr.bf16.mxu0 0
        %598 = vmatpush1.bf16.msra.mxu0 %v581
        %599 = vmatprep.subr.bf16.mxu0 0
        %600 = vmatpush2.bf16.msra.mxu0 0
        %601 = vmatprep.subr.bf16.mxu0 0
        %602 = vmatpush2.bf16.msra.mxu0 0
        %603 = vmatprep.subr.bf16.mxu0 0
        %604 = vmatpush2.bf16.msra.mxu0 0
        %605 = vmatprep.subr.bf16.mxu0 0
        %606 = vmatpush2.bf16.msra.mxu0 0
        %607 = vmatprep.subr.bf16.mxu0 0
        %608 = vmatpush2.bf16.msra.mxu0 0
        %609 = vmatprep.subr.bf16.mxu0 0
        %610 = vmatpush2.bf16.msra.mxu0 0
        %611 = vmatprep.subr.bf16.mxu0 0
        %612 = vmatpush2.bf16.msra.mxu0 0
        %613 = vmatprep.subr.bf16.mxu0 0
        %614 = vmatpush2.bf16.msra.mxu0 0
        %615 = vmatprep.mubr.bf16.mxu0 0
        %616 = vmatmul.mubr.bf16.gmra.mxu0 %v578
        %v617 = vpop.f32.mrf.mxu0
        %v618 = vadd.f32 0.0, %v617
        %v619 = vpop.f32.mrf.mxu0
        %v620 = vpop.f32.mrf.mxu0
        %v621 = vpop.f32.mrf.mxu0
        %622 = vdwg.mxu0
        %v623 = vadd.f32 %v569, %v618
        %s624 = sadd.s32 2, %s571
        %s625 = smul.addr %s624, 4
        %s626 = scalar_lea.vmem %s206, %s625
        %v627 = vld [vmem:[%s626] sm:$0xf]
        %s628 = scalar_lea.vmem %s210, 14
        %v629 = vld [vmem:[%s628] sm:$0x3]
        %v631 = vsel %vm241, %v627, 0
        %v634 = vand.u32 %v629, %v248
        %636 = vmatprep.subr.bf16.mxu0 0
        %637 = vmatpush1.bf16.msra.mxu0 0
        %638 = vmatprep.subr.bf16.mxu0 0
        %639 = vmatpush1.bf16.msra.mxu0 0
        %640 = vmatprep.subr.bf16.mxu0 0
        %641 = vmatpush1.bf16.msra.mxu0 0
        %642 = vmatprep.subr.bf16.mxu0 0
        %643 = vmatpush1.bf16.msra.mxu0 0
        %644 = vmatprep.subr.bf16.mxu0 0
        %645 = vmatpush1.bf16.msra.mxu0 0
        %646 = vmatprep.subr.bf16.mxu0 0
        %647 = vmatpush1.bf16.msra.mxu0 0
        %648 = vmatprep.subr.bf16.mxu0 0
        %649 = vmatpush1.bf16.msra.mxu0 0
        %650 = vmatprep.subr.bf16.mxu0 0
        %651 = vmatpush1.bf16.msra.mxu0 %v634
        %652 = vmatprep.subr.bf16.mxu0 0
        %653 = vmatpush2.bf16.msra.mxu0 0
        %654 = vmatprep.subr.bf16.mxu0 0
        %655 = vmatpush2.bf16.msra.mxu0 0
        %656 = vmatprep.subr.bf16.mxu0 0
        %657 = vmatpush2.bf16.msra.mxu0 0
        %658 = vmatprep.subr.bf16.mxu0 0
        %659 = vmatpush2.bf16.msra.mxu0 0
        %660 = vmatprep.subr.bf16.mxu0 0
        %661 = vmatpush2.bf16.msra.mxu0 0
        %662 = vmatprep.subr.bf16.mxu0 0
        %663 = vmatpush2.bf16.msra.mxu0 0
        %664 = vmatprep.subr.bf16.mxu0 0
        %665 = vmatpush2.bf16.msra.mxu0 0
        %666 = vmatprep.subr.bf16.mxu0 0
        %667 = vmatpush2.bf16.msra.mxu0 0
        %668 = vmatprep.mubr.bf16.mxu0 0
        %669 = vmatmul.mubr.bf16.gmra.mxu0 %v631
        %v670 = vpop.f32.mrf.mxu0
        %v671 = vadd.f32 0.0, %v670
        %v672 = vpop.f32.mrf.mxu0
        %v673 = vpop.f32.mrf.mxu0
        %v674 = vpop.f32.mrf.mxu0
        %675 = vdwg.mxu0
        %v676 = vadd.f32 %v623, %v671
        %v677 = vld [vmem:[%s573] sm:$0xf]
        %v678 = vld [vmem:[%s573 + $0x4] sm:$0x1]
        %s679 = scalar_lea.vmem %s210, 16
        %v680 = vld [vmem:[%s679] sm:$0x3]
        %v683 = vunpack.c.l.b16 %v677
        %v684 = vunpack.c.l.b16 %v678
        %v685 = vpack.c.b16 %v684, %v683
        %v687 = vshrl.u32 %v685, 16
        %v689 = vshll.u32 %v685, 16
        %v691 = vrot.slane %v689, 1
        %v692 = vor.u32 %v687, %v691
        %v694 = vsel %vm241, %v692, 0
        %v697 = vand.u32 %v680, %v248
        %699 = vmatprep.subr.bf16.mxu0 0
        %700 = vmatpush1.bf16.msra.mxu0 0
        %701 = vmatprep.subr.bf16.mxu0 0
        %702 = vmatpush1.bf16.msra.mxu0 0
        %703 = vmatprep.subr.bf16.mxu0 0
        %704 = vmatpush1.bf16.msra.mxu0 0
        %705 = vmatprep.subr.bf16.mxu0 0
        %706 = vmatpush1.bf16.msra.mxu0 0
        %707 = vmatprep.subr.bf16.mxu0 0
        %708 = vmatpush1.bf16.msra.mxu0 0
        %709 = vmatprep.subr.bf16.mxu0 0
        %710 = vmatpush1.bf16.msra.mxu0 0
        %711 = vmatprep.subr.bf16.mxu0 0
        %712 = vmatpush1.bf16.msra.mxu0 0
        %713 = vmatprep.subr.bf16.mxu0 0
        %714 = vmatpush1.bf16.msra.mxu0 %v697
        %715 = vmatprep.subr.bf16.mxu0 0
        %716 = vmatpush2.bf16.msra.mxu0 0
        %717 = vmatprep.subr.bf16.mxu0 0
        %718 = vmatpush2.bf16.msra.mxu0 0
        %719 = vmatprep.subr.bf16.mxu0 0
        %720 = vmatpush2.bf16.msra.mxu0 0
        %721 = vmatprep.subr.bf16.mxu0 0
        %722 = vmatpush2.bf16.msra.mxu0 0
        %723 = vmatprep.subr.bf16.mxu0 0
        %724 = vmatpush2.bf16.msra.mxu0 0
        %725 = vmatprep.subr.bf16.mxu0 0
        %726 = vmatpush2.bf16.msra.mxu0 0
        %727 = vmatprep.subr.bf16.mxu0 0
        %728 = vmatpush2.bf16.msra.mxu0 0
        %729 = vmatprep.subr.bf16.mxu0 0
        %730 = vmatpush2.bf16.msra.mxu0 0
        %731 = vmatprep.mubr.bf16.mxu0 0
        %732 = vmatmul.mubr.bf16.gmra.mxu0 %v694
        %v733 = vpop.f32.mrf.mxu0
        %v734 = vadd.f32 0.0, %v733
        %v735 = vpop.f32.mrf.mxu0
        %v736 = vpop.f32.mrf.mxu0
        %v737 = vpop.f32.mrf.mxu0
        %738 = vdwg.mxu0
        %v739 = vadd.f32 %v676, %v734
        %v741 = vlaneseq
        %v742 = vshrl.u32 %v741, 7
        %v743 = vsub.s32 0, %v742
        %v744 = vrot.slane %v223, %v743
        %v746 = vadd.f32 %v739, %v744
        %v747 = vmax.f32 %v746, 0.0
        %v748 = vpack.c.bf16 %v747, %v747
        %s749 = smul.addr %s225, 4
        %s750 = scalar_lea.vmem %s221, %s749
        %751 = vst [vmem:[%s750] sm:$0xf] %v748
      $region37: #{_lambda_.3} parent=31 // loop_footer
        %s229 = sadd.s32 1, %s225
      $region38: #{_lambda_.3} parent=31 // loop_footer_branch
        %224 = sbr.rel target = $region34
      $region39: #{_lambda_.3} parent=31 // loop_exit
        _
      %p752 = scmp.lt.s32.totalorder %s18, 1
      %s753 = scalar_select %p752, %s18, 1
      %p754 = scmp.lt.s32.totalorder %s19, 0
      %s755 = scalar_select %p754, %s19, 0
      %s756 = smul.addr %s753, 8
      %s757 = sadd.s32 %s755, %s756
      %s758 = smul.addr %s757, 4
      %s759 = scalar_lea.vmem %s3, %s758
      // Predicated region
      $region40: #{_lambda_.3} parent=31 // pred_check
        %p760 = pneg %p124
      $region41: #{_lambda_.3} parent=31 // pred_check_branch
        %762 = sbr.rel (%p760) target = $region43
      $region42: #{_lambda_.3} parent=31 // pred_region
        _
      $region43: #{_lambda_.3} parent=31 // pred_fallthru
        _
    $region32: #{_lambda_.3} parent=5 // pred_fallthru
      _
    %p763 = scmp.le.s32.totalorder 2, %s9
    // Predicated region
    $region44: #{_lambda_.3} parent=5 // pred_check
      %p764 = pneg %p763
    $region45: #{_lambda_.3} parent=5 // pred_check_branch
      %766 = sbr.rel (%p764) target = $region47
    $region46: #{_lambda_.3} parent=5 // pred_region
      %s767 = ssub.s32 %s9, 2
      // Predicated region
      $region48: #{_lambda_.3} parent=46 // pred_check
        %p768 = pneg %p130
      $region49: #{_lambda_.3} parent=46 // pred_check_branch
        %770 = sbr.rel (%p768) target = $region51
      $region50: #{_lambda_.3} parent=46 // pred_region
        %p771 = scmp.lt.s32.totalorder %s20, 1
        %s772 = scalar_select %p771, %s20, 1
        %p773 = scmp.lt.s32.totalorder %s21, 0
        %s774 = scalar_select %p773, %s21, 0
        %s775 = smul.addr %s772, 8
        %s776 = sadd.s32 %s774, %s775
        %s777 = smul.addr %s776, 4
        %s778 = scalar_lea.vmem %s3, %s777
      $region51: #{_lambda_.3} parent=46 // pred_fallthru
        _
    $region47: #{_lambda_.3} parent=5 // pred_fallthru
      _
  $region6: #{_lambda_.3} parent=0 // loop_footer
    %s13 = sadd.s32 1, %s9
  $region7: #{_lambda_.3} parent=0 // loop_footer_branch
    %8 = sbr.rel target = $region3
  $region8: #{_lambda_.3} parent=0 // loop_exit
    _

// kernel: _lambda_.4
$region0: #{_lambda_.4}
  #allocation0 [shape = 'u32[]', space=smem, size = 0x4, offset = 0x4, fixed_abs, tag = 'smem constant byte address 0x4 - core index']
  #allocation1 [shape = 'u32[144,128]{1,0:T(1,128)}', space=vmem, size = 0x12000, scoped, tag = 'internal scratch']
  %s0 = inlined_call_operand.vmem [shape: bf16[2,5,4,5,128], index: 0, kind: input, shape index: {}]
  %s1 = inlined_call_operand.vmem [shape: bf16[9,128,128], index: 1, kind: input, shape index: {}]
  %s2 = inlined_call_operand.vmem [shape: f32[1,128], index: 2, kind: input, shape index: {}]
  %s3 = inlined_call_operand.vmem [shape: bf16[2,4,4,128], index: 3, kind: output, shape index: {}]
  %s4 = sld [smem:[#allocation0]]
  $region52: #{_lambda_.4} parent=0
    _
  %s6 = ssub.s32 1, %s4
  %s7 = scalar_select 0, %s6, %s4
  loop: start=0, step=1, limit=4
  $region2: #{_lambda_.4} parent=0 // loop_pre_header
    _
  $region3: #{_lambda_.4} parent=0 // loop_header
    %s9 = sphi 0, %s13
    %p10 = scmp.ge.s32.totalorder %s9, 4
    %s16 = sphi 0, %s28
    %s17 = sphi 0, %s24
    %s18 = sphi 0, %s16
    %s19 = sphi 0, %s17
    %s20 = sphi 0, %s18
    %s21 = sphi 0, %s19
    %s31 = sphi 0, %s33
    %s34 = sphi 0, %s31
    %s35 = sphi 0, %s34
    %s51 = sphi 0, %s35
    %s57 = sphi 0, %s59
    %s60 = sphi 0, %s57
    %s61 = sphi 0, %s60
    %s77 = sphi 0, %s61
    %s83 = sphi 0, %s85
    %s86 = sphi 0, %s83
    %s87 = sphi 0, %s86
    %s103 = sphi 0, %s87
    %s111 = sphi 0, %s113
    %s114 = sphi 0, %s111
    %s115 = sphi 0, %s114
    %s131 = sphi 0, %s115
  $region4: #{_lambda_.4} parent=0 // loop_header_branch
    %12 = sbr.rel (%p10) target = $region8
  $region5: #{_lambda_.4} parent=0 // loop_body
    %s14 = ssub.s32 %s9, 1
    %s15 = ssub.s32 %s9, 2
    %s22 = sadd.s32 1, %s17
    %p23 = scmp.ge.s32.totalorder %s22, 1
    %s24 = scalar_select %p23, 0, %s22
    %s25 = sadd.s32 1, %s16
    %s26 = scalar_select %p23, %s25, %s16
    %p27 = scmp.ge.s32.totalorder %s26, 2
    %s28 = scalar_select %p27, 0, %s26
    %s29 = ssub.s32 %s16, %s28
    %p30 = scmp.eq.s32.totalorder %s29, 0
    %s32 = sadd.s32 %s31, 1
    %s33 = scalar_select %p30, %s31, %s32
    %p36 = pneg %p30
    %p37 = scmp.eq.s32.totalorder %s9, 1
    %p38 = por %p36, %p37
    %p39 = scmp.ne.s32.totalorder %s31, %s34
    %p40 = scmp.eq.s32.totalorder %s9, 0
    %p41 = por %p39, %p40
    %p42 = scmp.ne.s32.totalorder %s31, %s34
    %p43 = scmp.eq.s32.totalorder %s14, 1
    %p44 = por %p42, %p43
    %p45 = scmp.ne.s32.totalorder %s34, %s35
    %p46 = scmp.eq.s32.totalorder %s14, 0
    %p47 = por %p45, %p46
    %p48 = scmp.ne.s32.totalorder %s34, %s35
    %p49 = scmp.eq.s32.totalorder %s15, 1
    %p50 = por %p48, %p49
    %p52 = scmp.ne.s32.totalorder %s35, %s51
    %p53 = scmp.eq.s32.totalorder %s15, 0
    %p54 = por %p52, %p53
    %s55 = ssub.s32 %s17, %s24
    %p56 = scmp.eq.s32.totalorder %s55, 0
    %s58 = sadd.s32 %s57, 1
    %s59 = scalar_select %p56, %s57, %s58
    %p62 = pneg %p56
    %p63 = scmp.eq.s32.totalorder %s9, 1
    %p64 = por %p62, %p63
    %p65 = scmp.ne.s32.totalorder %s57, %s60
    %p66 = scmp.eq.s32.totalorder %s9, 0
    %p67 = por %p65, %p66
    %p68 = scmp.ne.s32.totalorder %s57, %s60
    %p69 = scmp.eq.s32.totalorder %s14, 1
    %p70 = por %p68, %p69
    %p71 = scmp.ne.s32.totalorder %s60, %s61
    %p72 = scmp.eq.s32.totalorder %s14, 0
    %p73 = por %p71, %p72
    %p74 = scmp.ne.s32.totalorder %s60, %s61
    %p75 = scmp.eq.s32.totalorder %s15, 1
    %p76 = por %p74, %p75
    %p78 = scmp.ne.s32.totalorder %s61, %s77
    %p79 = scmp.eq.s32.totalorder %s15, 0
    %p80 = por %p78, %p79
    %s81 = ssub.s32 %s17, %s24
    %p82 = scmp.eq.s32.totalorder %s81, 0
    %s84 = sadd.s32 %s83, 1
    %s85 = scalar_select %p82, %s83, %s84
    %p88 = pneg %p82
    %p89 = scmp.eq.s32.totalorder %s9, 1
    %p90 = por %p88, %p89
    %p91 = scmp.ne.s32.totalorder %s83, %s86
    %p92 = scmp.eq.s32.totalorder %s9, 0
    %p93 = por %p91, %p92
    %p94 = scmp.ne.s32.totalorder %s83, %s86
    %p95 = scmp.eq.s32.totalorder %s14, 1
    %p96 = por %p94, %p95
    %p97 = scmp.ne.s32.totalorder %s86, %s87
    %p98 = scmp.eq.s32.totalorder %s14, 0
    %p99 = por %p97, %p98
    %p100 = scmp.ne.s32.totalorder %s86, %s87
    %p101 = scmp.eq.s32.totalorder %s15, 1
    %p102 = por %p100, %p101
    %p104 = scmp.ne.s32.totalorder %s87, %s103
    %p105 = scmp.eq.s32.totalorder %s15, 0
    %p106 = por %p104, %p105
    %s107 = ssub.s32 %s16, %s28
    %s108 = ssub.s32 %s17, %s24
    %s109 = sor.u32 %s107, %s108
    %p110 = scmp.eq.s32.totalorder %s109, 0
    %s112 = sadd.s32 %s111, 1
    %s113 = scalar_select %p110, %s111, %s112
    %p116 = pneg %p110
    %p117 = scmp.eq.s32.totalorder %s9, 1
    %p118 = por %p116, %p117
    %p119 = scmp.ne.s32.totalorder %s111, %s114
    %p120 = scmp.eq.s32.totalorder %s9, 0
    %p121 = por %p119, %p120
    %p122 = scmp.ne.s32.totalorder %s111, %s114
    %p123 = scmp.eq.s32.totalorder %s14, 1
    %p124 = por %p122, %p123
    %p125 = scmp.ne.s32.totalorder %s114, %s115
    %p126 = scmp.eq.s32.totalorder %s14, 0
    %p127 = por %p125, %p126
    %p128 = scmp.ne.s32.totalorder %s114, %s115
    %p129 = scmp.eq.s32.totalorder %s15, 1
    %p130 = por %p128, %p129
    %p132 = scmp.ne.s32.totalorder %s115, %s131
    %p133 = scmp.eq.s32.totalorder %s15, 0
    %p134 = por %p132, %p133
    %p135 = scmp.le.s32.totalorder 1, %s9
    %p136 = scmp.lt.s32.totalorder %s9, 3
    %p137 = pnand %p135, %p136
    %p138 = pneg %p137
    // Predicated region
    $region9: #{_lambda_.4} parent=5 // pred_check
      _
    $region10: #{_lambda_.4} parent=5 // pred_check_branch
      %140 = sbr.rel (%p137) target = $region12
    $region11: #{_lambda_.4} parent=5 // pred_region
      %s141 = ssub.s32 %s9, 1
      // Predicated region
      $region13: #{_lambda_.4} parent=11 // pred_check
        %p142 = pneg %p73
      $region14: #{_lambda_.4} parent=11 // pred_check_branch
        %144 = sbr.rel (%p142) target = $region16
      $region15: #{_lambda_.4} parent=11 // pred_region
        %p145 = scmp.lt.s32.totalorder %s19, 0
        %s146 = scalar_select %p145, %s19, 0
        %s147 = smul.addr %s146, 4
        %s148 = scalar_lea.vmem %s1, %s147
      $region16: #{_lambda_.4} parent=11 // pred_fallthru
        _
      // Predicated region
      $region17: #{_lambda_.4} parent=11 // pred_check
        %p149 = pneg %p99
      $region18: #{_lambda_.4} parent=11 // pred_check_branch
        %151 = sbr.rel (%p149) target = $region20
      $region19: #{_lambda_.4} parent=11 // pred_region
        %p152 = scmp.lt.s32.totalorder %s19, 0
        %s153 = scalar_select %p152, %s19, 0
        %s154 = scalar_lea.vmem %s2, %s153
      $region20: #{_lambda_.4} parent=11 // pred_fallthru
        _
    $region12: #{_lambda_.4} parent=5 // pred_fallthru
      _
    %p155 = scmp.lt.s32.totalorder %s9, 2
    // Predicated region
    $region21: #{_lambda_.4} parent=5 // pred_check
      %p156 = pneg %p155
    $region22: #{_lambda_.4} parent=5 // pred_check_branch
      %158 = sbr.rel (%p156) target = $region24
    $region23: #{_lambda_.4} parent=5 // pred_region
      // Predicated region
      $region25: #{_lambda_.4} parent=23 // pred_check
        %p159 = pneg %p41
      $region26: #{_lambda_.4} parent=23 // pred_check_branch
        %161 = sbr.rel (%p159) target = $region28
      $region27: #{_lambda_.4} parent=23 // pred_region
        %p162 = scmp.lt.s32.totalorder %s16, 1
        %s163 = scalar_select %p162, %s16, 1
        %s164 = smul.addr %s163, 20
        %s165 = smul.addr %s164, 4
        %s166 = scalar_lea.vmem %s0, %s165
      $region28: #{_lambda_.4} parent=23 // pred_fallthru
        _
    $region24: #{_lambda_.4} parent=5 // pred_fallthru
      _
    %p167 = scmp.le.s32.totalorder 1, %s9
    %p168 = scmp.lt.s32.totalorder %s9, 3
    %p169 = pnand %p167, %p168
    %p170 = pneg %p169
    // Predicated region
    $region29: #{_lambda_.4} parent=5 // pred_check
      _
    $region30: #{_lambda_.4} parent=5 // pred_check_branch
      %172 = sbr.rel (%p169) target = $region32
    $region31: #{_lambda_.4} parent=5 // pred_region
      %s173 = ssub.s32 %s9, 1
      %p174 = scmp.lt.s32.totalorder %s18, 1
      %s175 = scalar_select %p174, %s18, 1
      %s176 = smul.addr %s175, 20
      %s177 = smul.addr %s176, 4
      %s178 = scalar_lea.vmem %s0, %s177
      %p179 = pneg %p47
      %p180 = pneg %p44
      %p181 = scmp.lt.s32.totalorder %s19, 0
      %s182 = scalar_select %p181, %s19, 0
      %s183 = smul.addr %s182, 4
      %s184 = scalar_lea.vmem %s1, %s183
      %p185 = pneg %p73
      %p186 = pneg %p70
      %p187 = scmp.lt.s32.totalorder %s19, 0
      %s188 = scalar_select %p187, %s19, 0
      %s189 = scalar_lea.vmem %s2, %s188
      %p190 = pneg %p99
      %p191 = pneg %p96
      %p192 = pneg %p127
      %p193 = pneg %p124
      %p194 = scmp.lt.s32.totalorder %s18, 1
      %s195 = scalar_select %p194, %s18, 1
      %p196 = scmp.lt.s32.totalorder %s19, 0
      %s197 = scalar_select %p196, %s19, 0
      %s198 = smul.addr %s195, 4
      %s199 = sadd.s32 %s197, %s198
      %s200 = smul.addr %s199, 2
      %s201 = scalar_lea.vmem %s3, %s200
      %p202 = scmp.lt.s32.totalorder %s18, 1
      %s203 = scalar_select %p202, %s18, 1
      %s204 = smul.addr %s203, 20
      %s205 = smul.addr %s204, 4
      %s206 = scalar_lea.vmem %s0, %s205
      %p207 = scmp.lt.s32.totalorder %s19, 0
      %s208 = scalar_select %p207, %s19, 0
      %s209 = smul.addr %s208, 4
      %s210 = scalar_lea.vmem %s1, %s209
      %p211 = scmp.lt.s32.totalorder %s19, 0
      %s212 = scalar_select %p211, %s19, 0
      %s213 = scalar_lea.vmem %s2, %s212
      %p214 = scmp.lt.s32.totalorder %s18, 1
      %s215 = scalar_select %p214, %s18, 1
      %p216 = scmp.lt.s32.totalorder %s19, 0
      %s217 = scalar_select %p216, %s19, 0
      %s218 = smul.addr %s215, 4
      %s219 = sadd.s32 %s217, %s218
      %s220 = smul.addr %s219, 2
      %s221 = scalar_lea.vmem %s3, %s220
      %v223 = vld [vmem:[%s213] sm:$0x1]
      loop: start=0, step=1, limit=4
      $region33: #{_lambda_.4} parent=31 // loop_pre_header
        _
      $region34: #{_lambda_.4} parent=31 // loop_header
        %s225 = sphi 0, %s229
        %p226 = scmp.ge.s32.totalorder %s225, 4
      $region35: #{_lambda_.4} parent=31 // loop_header_branch
        %228 = sbr.rel (%p226) target = $region39
      $region36: #{_lambda_.4} parent=31 // loop_body
        %s230 = smul.u32 %s225, 4
        %s231 = smul.addr %s230, 4
        %s232 = scalar_lea.vmem %s206, %s231
        %v233 = vld [vmem:[%s232] sm:$0x3]
        %v234 = vld [vmem:[%s210] sm:$0xf]
        %v235 = vld [vmem:[%s210 + $0x4] sm:$0xf]
        %v236 = vld [vmem:[%s210 + $0x8] sm:$0xf]
        %v237 = vld [vmem:[%s210 + $0xc] sm:$0xf]
        %v238 = vld [vmem:[%s210 + $0x10] sm:$0xf]
        %v239 = vld [vmem:[%s210 + $0x14] sm:$0xf]
        %v240 = vld [vmem:[%s210 + $0x18] sm:$0xf]
        %v241 = vld [vmem:[%s210 + $0x1c] sm:$0xf]
        %v242 = vld [vmem:[%s210 + $0x20] sm:$0xf]
        %v243 = vld [vmem:[%s210 + $0x24] sm:$0xf]
        %v244 = vld [vmem:[%s210 + $0x28] sm:$0xf]
        %v245 = vld [vmem:[%s210 + $0x2c] sm:$0xf]
        %v246 = vld [vmem:[%s210 + $0x30] sm:$0xf]
        %v247 = vld [vmem:[%s210 + $0x34] sm:$0xf]
        %v248 = vld [vmem:[%s210 + $0x38] sm:$0xf]
        %v249 = vld [vmem:[%s210 + $0x3c] sm:$0xf]
        %s250 = sadd.s32 1, %s230
        %s251 = smul.addr %s250, 4
        %s252 = scalar_lea.vmem %s206, %s251
        %v253 = vld [vmem:[%s252] sm:$0x3]
        %s254 = scalar_lea.vmem %s210, 64
        %v255 = vld [vmem:[%s254] sm:$0xf]
        %v256 = vld [vmem:[%s254 + $0x4] sm:$0xf]
        %v257 = vld [vmem:[%s254 + $0x8] sm:$0xf]
        %v258 = vld [vmem:[%s254 + $0xc] sm:$0xf]
        %v259 = vld [vmem:[%s254 + $0x10] sm:$0xf]
        %v260 = vld [vmem:[%s254 + $0x14] sm:$0xf]
        %v261 = vld [vmem:[%s254 + $0x18] sm:$0xf]
        %v262 = vld [vmem:[%s254 + $0x1c] sm:$0xf]
        %v263 = vld [vmem:[%s254 + $0x20] sm:$0xf]
        %v264 = vld [vmem:[%s254 + $0x24] sm:$0xf]
        %v265 = vld [vmem:[%s254 + $0x28] sm:$0xf]
        %v266 = vld [vmem:[%s254 + $0x2c] sm:$0xf]
        %v267 = vld [vmem:[%s254 + $0x30] sm:$0xf]
        %v268 = vld [vmem:[%s254 + $0x34] sm:$0xf]
        %v269 = vld [vmem:[%s254 + $0x38] sm:$0xf]
        %v270 = vld [vmem:[%s254 + $0x3c] sm:$0xf]
        %v287 = vunpack.c.l.b16 %v255
        %v288 = vunpack.c.l.b16 %v256
        %v289 = vunpack.c.l.b16 %v257
        %v290 = vunpack.c.l.b16 %v258
        %v291 = vunpack.c.l.b16 %v259
        %v292 = vunpack.c.l.b16 %v260
        %v293 = vunpack.c.l.b16 %v261
        %v294 = vunpack.c.l.b16 %v262
        %v295 = vunpack.c.l.b16 %v263
        %v296 = vunpack.c.l.b16 %v264
        %v297 = vunpack.c.l.b16 %v265
        %v298 = vunpack.c.l.b16 %v266
        %v299 = vunpack.c.l.b16 %v267
        %v300 = vunpack.c.l.b16 %v268
        %v301 = vunpack.c.l.b16 %v269
        %v302 = vunpack.c.l.b16 %v270
        %v303 = vpack.c.b16 %v288, %v287
        %v304 = vpack.c.b16 %v290, %v289
        %v305 = vpack.c.b16 %v292, %v291
        %v306 = vpack.c.b16 %v294, %v293
        %v307 = vpack.c.b16 %v296, %v295
        %v308 = vpack.c.b16 %v298, %v297
        %v309 = vpack.c.b16 %v300, %v299
        %v310 = vpack.c.b16 %v302, %v301
        %319 = vmatprep.subr.bf16.mxu0 0
        %320 = vmatpush1.bf16.msra.mxu0 %v310
        %321 = vmatprep.subr.bf16.mxu0 0
        %322 = vmatpush1.bf16.msra.mxu0 %v309
        %323 = vmatprep.subr.bf16.mxu0 0
        %324 = vmatpush1.bf16.msra.mxu0 %v308
        %325 = vmatprep.subr.bf16.mxu0 0
        %326 = vmatpush1.bf16.msra.mxu0 %v307
        %327 = vmatprep.subr.bf16.mxu0 0
        %328 = vmatpush1.bf16.msra.mxu0 %v306
        %329 = vmatprep.subr.bf16.mxu0 0
        %330 = vmatpush1.bf16.msra.mxu0 %v305
        %331 = vmatprep.subr.bf16.mxu0 0
        %332 = vmatpush1.bf16.msra.mxu0 %v304
        %333 = vmatprep.subr.bf16.mxu0 0
        %334 = vmatpush1.bf16.msra.mxu0 %v303
        %335 = vmatprep.subr.bf16.mxu0 0
        %336 = vmatpush2.bf16.msra.mxu0 0
        %337 = vmatprep.subr.bf16.mxu0 0
        %338 = vmatpush2.bf16.msra.mxu0 0
        %339 = vmatprep.subr.bf16.mxu0 0
        %340 = vmatpush2.bf16.msra.mxu0 0
        %341 = vmatprep.subr.bf16.mxu0 0
        %342 = vmatpush2.bf16.msra.mxu0 0
        %343 = vmatprep.subr.bf16.mxu0 0
        %344 = vmatpush2.bf16.msra.mxu0 0
        %345 = vmatprep.subr.bf16.mxu0 0
        %346 = vmatpush2.bf16.msra.mxu0 0
        %347 = vmatprep.subr.bf16.mxu0 0
        %348 = vmatpush2.bf16.msra.mxu0 0
        %349 = vmatprep.subr.bf16.mxu0 0
        %350 = vmatpush2.bf16.msra.mxu0 0
        %351 = vmatprep.mubr.bf16.mxu0 0
        %352 = vmatmul.mubr.bf16.gmra.mxu0 %v253
        %v353 = vpop.f32.mrf.mxu0
        %v354 = vadd.f32 0.0, %v353
        %v355 = vpop.f32.mrf.mxu0
        %v356 = vpop.f32.mrf.mxu0
        %v357 = vpop.f32.mrf.mxu0
        %358 = vdwg.mxu0
        %v375 = vunpack.c.l.b16 %v234
        %v376 = vunpack.c.l.b16 %v235
        %v377 = vunpack.c.l.b16 %v236
        %v378 = vunpack.c.l.b16 %v237
        %v379 = vunpack.c.l.b16 %v238
        %v380 = vunpack.c.l.b16 %v239
        %v381 = vunpack.c.l.b16 %v240
        %v382 = vunpack.c.l.b16 %v241
        %v383 = vunpack.c.l.b16 %v242
        %v384 = vunpack.c.l.b16 %v243
        %v385 = vunpack.c.l.b16 %v244
        %v386 = vunpack.c.l.b16 %v245
        %v387 = vunpack.c.l.b16 %v246
        %v388 = vunpack.c.l.b16 %v247
        %v389 = vunpack.c.l.b16 %v248
        %v390 = vunpack.c.l.b16 %v249
        %v391 = vpack.c.b16 %v376, %v375
        %v392 = vpack.c.b16 %v378, %v377
        %v393 = vpack.c.b16 %v380, %v379
        %v394 = vpack.c.b16 %v382, %v381
        %v395 = vpack.c.b16 %v384, %v383
        %v396 = vpack.c.b16 %v386, %v385
        %v397 = vpack.c.b16 %v388, %v387
        %v398 = vpack.c.b16 %v390, %v389
        %407 = vmatprep.subr.bf16.mxu0 0
        %408 = vmatpush1.bf16.msra.mxu0 %v398
        %409 = vmatprep.subr.bf16.mxu0 0
        %410 = vmatpush1.bf16.msra.mxu0 %v397
        %411 = vmatprep.subr.bf16.mxu0 0
        %412 = vmatpush1.bf16.msra.mxu0 %v396
        %413 = vmatprep.subr.bf16.mxu0 0
        %414 = vmatpush1.bf16.msra.mxu0 %v395
        %415 = vmatprep.subr.bf16.mxu0 0
        %416 = vmatpush1.bf16.msra.mxu0 %v394
        %417 = vmatprep.subr.bf16.mxu0 0
        %418 = vmatpush1.bf16.msra.mxu0 %v393
        %419 = vmatprep.subr.bf16.mxu0 0
        %420 = vmatpush1.bf16.msra.mxu0 %v392
        %421 = vmatprep.subr.bf16.mxu0 0
        %422 = vmatpush1.bf16.msra.mxu0 %v391
        %423 = vmatprep.subr.bf16.mxu0 0
        %424 = vmatpush2.bf16.msra.mxu0 0
        %425 = vmatprep.subr.bf16.mxu0 0
        %426 = vmatpush2.bf16.msra.mxu0 0
        %427 = vmatprep.subr.bf16.mxu0 0
        %428 = vmatpush2.bf16.msra.mxu0 0
        %429 = vmatprep.subr.bf16.mxu0 0
        %430 = vmatpush2.bf16.msra.mxu0 0
        %431 = vmatprep.subr.bf16.mxu0 0
        %432 = vmatpush2.bf16.msra.mxu0 0
        %433 = vmatprep.subr.bf16.mxu0 0
        %434 = vmatpush2.bf16.msra.mxu0 0
        %435 = vmatprep.subr.bf16.mxu0 0
        %436 = vmatpush2.bf16.msra.mxu0 0
        %437 = vmatprep.subr.bf16.mxu0 0
        %438 = vmatpush2.bf16.msra.mxu0 0
        %439 = vmatprep.mubr.bf16.mxu0 0
        %440 = vmatmul.mubr.bf16.gmra.mxu0 %v233
        %v441 = vpop.f32.mrf.mxu0
        %v442 = vadd.f32 %v354, %v441
        %v443 = vpop.f32.mrf.mxu0
        %v444 = vpop.f32.mrf.mxu0
        %v445 = vpop.f32.mrf.mxu0
        %446 = vdwg.mxu0
        %v447 = vld [vmem:[%s232] sm:$0x7]
        %s448 = scalar_lea.vmem %s210, 128
        %v449 = vld [vmem:[%s448] sm:$0xf]
        %v450 = vld [vmem:[%s448 + $0x4] sm:$0xf]
        %v451 = vld [vmem:[%s448 + $0x8] sm:$0xf]
        %v452 = vld [vmem:[%s448 + $0xc] sm:$0xf]
        %v453 = vld [vmem:[%s448 + $0x10] sm:$0xf]
        %v454 = vld [vmem:[%s448 + $0x14] sm:$0xf]
        %v455 = vld [vmem:[%s448 + $0x18] sm:$0xf]
        %v456 = vld [vmem:[%s448 + $0x1c] sm:$0xf]
        %v457 = vld [vmem:[%s448 + $0x20] sm:$0xf]
        %v458 = vld [vmem:[%s448 + $0x24] sm:$0xf]
        %v459 = vld [vmem:[%s448 + $0x28] sm:$0xf]
        %v460 = vld [vmem:[%s448 + $0x2c] sm:$0xf]
        %v461 = vld [vmem:[%s448 + $0x30] sm:$0xf]
        %v462 = vld [vmem:[%s448 + $0x34] sm:$0xf]
        %v463 = vld [vmem:[%s448 + $0x38] sm:$0xf]
        %v464 = vld [vmem:[%s448 + $0x3c] sm:$0xf]
        %v466 = vunpack.c.l.b16 %v447
        %v467 = vpack.c.b16 %v466, %v466
        %v469 = vshrl.u32 %v467, 16
        %v471 = vshll.u32 %v467, 16
        %v473 = vrot.slane %v471, 1
        %v474 = vor.u32 %v469, %v473
        %v492 = vunpack.c.l.b16 %v449
        %v493 = vunpack.c.l.b16 %v450
        %v494 = vunpack.c.l.b16 %v451
        %v495 = vunpack.c.l.b16 %v452
        %v496 = vunpack.c.l.b16 %v453
        %v497 = vunpack.c.l.b16 %v454
        %v498 = vunpack.c.l.b16 %v455
        %v499 = vunpack.c.l.b16 %v456
        %v500 = vunpack.c.l.b16 %v457
        %v501 = vunpack.c.l.b16 %v458
        %v502 = vunpack.c.l.b16 %v459
        %v503 = vunpack.c.l.b16 %v460
        %v504 = vunpack.c.l.b16 %v461
        %v505 = vunpack.c.l.b16 %v462
        %v506 = vunpack.c.l.b16 %v463
        %v507 = vunpack.c.l.b16 %v464
        %v508 = vpack.c.b16 %v493, %v492
        %v509 = vpack.c.b16 %v495, %v494
        %v510 = vpack.c.b16 %v497, %v496
        %v511 = vpack.c.b16 %v499, %v498
        %v512 = vpack.c.b16 %v501, %v500
        %v513 = vpack.c.b16 %v503, %v502
        %v514 = vpack.c.b16 %v505, %v504
        %v515 = vpack.c.b16 %v507, %v506
        %524 = vmatprep.subr.bf16.mxu0 0
        %525 = vmatpush1.bf16.msra.mxu0 %v515
        %526 = vmatprep.subr.bf16.mxu0 0
        %527 = vmatpush1.bf16.msra.mxu0 %v514
        %528 = vmatprep.subr.bf16.mxu0 0
        %529 = vmatpush1.bf16.msra.mxu0 %v513
        %530 = vmatprep.subr.bf16.mxu0 0
        %531 = vmatpush1.bf16.msra.mxu0 %v512
        %532 = vmatprep.subr.bf16.mxu0 0
        %533 = vmatpush1.bf16.msra.mxu0 %v511
        %534 = vmatprep.subr.bf16.mxu0 0
        %535 = vmatpush1.bf16.msra.mxu0 %v510
        %536 = vmatprep.subr.bf16.mxu0 0
        %537 = vmatpush1.bf16.msra.mxu0 %v509
        %538 = vmatprep.subr.bf16.mxu0 0
        %539 = vmatpush1.bf16.msra.mxu0 %v508
        %540 = vmatprep.subr.bf16.mxu0 0
        %541 = vmatpush2.bf16.msra.mxu0 0
        %542 = vmatprep.subr.bf16.mxu0 0
        %543 = vmatpush2.bf16.msra.mxu0 0
        %544 = vmatprep.subr.bf16.mxu0 0
        %545 = vmatpush2.bf16.msra.mxu0 0
        %546 = vmatprep.subr.bf16.mxu0 0
        %547 = vmatpush2.bf16.msra.mxu0 0
        %548 = vmatprep.subr.bf16.mxu0 0
        %549 = vmatpush2.bf16.msra.mxu0 0
        %550 = vmatprep.subr.bf16.mxu0 0
        %551 = vmatpush2.bf16.msra.mxu0 0
        %552 = vmatprep.subr.bf16.mxu0 0
        %553 = vmatpush2.bf16.msra.mxu0 0
        %554 = vmatprep.subr.bf16.mxu0 0
        %555 = vmatpush2.bf16.msra.mxu0 0
        %556 = vmatprep.mubr.bf16.mxu0 0
        %557 = vmatmul.mubr.bf16.gmra.mxu0 %v474
        %v558 = vpop.f32.mrf.mxu0
        %v559 = vadd.f32 0.0, %v558
        %v560 = vpop.f32.mrf.mxu0
        %v561 = vpop.f32.mrf.mxu0
        %v562 = vpop.f32.mrf.mxu0
        %563 = vdwg.mxu0
        %v564 = vadd.f32 %v442, %v559
        %s565 = sadd.s32 2, %s230
        %s566 = smul.addr %s565, 4
        %s567 = scalar_lea.vmem %s206, %s566
        %v568 = vld [vmem:[%s567] sm:$0x3]
        %s569 = scalar_lea.vmem %s210, 192
        %v570 = vld [vmem:[%s569] sm:$0xf]
        %v571 = vld [vmem:[%s569 + $0x4] sm:$0xf]
        %v572 = vld [vmem:[%s569 + $0x8] sm:$0xf]
        %v573 = vld [vmem:[%s569 + $0xc] sm:$0xf]
        %v574 = vld [vmem:[%s569 + $0x10] sm:$0xf]
        %v575 = vld [vmem:[%s569 + $0x14] sm:$0xf]
        %v576 = vld [vmem:[%s569 + $0x18] sm:$0xf]
        %v577 = vld [vmem:[%s569 + $0x1c] sm:$0xf]
        %v578 = vld [vmem:[%s569 + $0x20] sm:$0xf]
        %v579 = vld [vmem:[%s569 + $0x24] sm:$0xf]
        %v580 = vld [vmem:[%s569 + $0x28] sm:$0xf]
        %v581 = vld [vmem:[%s569 + $0x2c] sm:$0xf]
        %v582 = vld [vmem:[%s569 + $0x30] sm:$0xf]
        %v583 = vld [vmem:[%s569 + $0x34] sm:$0xf]
        %v584 = vld [vmem:[%s569 + $0x38] sm:$0xf]
        %v585 = vld [vmem:[%s569 + $0x3c] sm:$0xf]
        %v602 = vunpack.c.l.b16 %v570
        %v603 = vunpack.c.l.b16 %v571
        %v604 = vunpack.c.l.b16 %v572
        %v605 = vunpack.c.l.b16 %v573
        %v606 = vunpack.c.l.b16 %v574
        %v607 = vunpack.c.l.b16 %v575
        %v608 = vunpack.c.l.b16 %v576
        %v609 = vunpack.c.l.b16 %v577
        %v610 = vunpack.c.l.b16 %v578
        %v611 = vunpack.c.l.b16 %v579
        %v612 = vunpack.c.l.b16 %v580
        %v613 = vunpack.c.l.b16 %v581
        %v614 = vunpack.c.l.b16 %v582
        %v615 = vunpack.c.l.b16 %v583
        %v616 = vunpack.c.l.b16 %v584
        %v617 = vunpack.c.l.b16 %v585
        %v618 = vpack.c.b16 %v603, %v602
        %v619 = vpack.c.b16 %v605, %v604
        %v620 = vpack.c.b16 %v607, %v606
        %v621 = vpack.c.b16 %v609, %v608
        %v622 = vpack.c.b16 %v611, %v610
        %v623 = vpack.c.b16 %v613, %v612
        %v624 = vpack.c.b16 %v615, %v614
        %v625 = vpack.c.b16 %v617, %v616
        %634 = vmatprep.subr.bf16.mxu0 0
        %635 = vmatpush1.bf16.msra.mxu0 %v625
        %636 = vmatprep.subr.bf16.mxu0 0
        %637 = vmatpush1.bf16.msra.mxu0 %v624
        %638 = vmatprep.subr.bf16.mxu0 0
        %639 = vmatpush1.bf16.msra.mxu0 %v623
        %640 = vmatprep.subr.bf16.mxu0 0
        %641 = vmatpush1.bf16.msra.mxu0 %v622
        %642 = vmatprep.subr.bf16.mxu0 0
        %643 = vmatpush1.bf16.msra.mxu0 %v621
        %644 = vmatprep.subr.bf16.mxu0 0
        %645 = vmatpush1.bf16.msra.mxu0 %v620
        %646 = vmatprep.subr.bf16.mxu0 0
        %647 = vmatpush1.bf16.msra.mxu0 %v619
        %648 = vmatprep.subr.bf16.mxu0 0
        %649 = vmatpush1.bf16.msra.mxu0 %v618
        %650 = vmatprep.subr.bf16.mxu0 0
        %651 = vmatpush2.bf16.msra.mxu0 0
        %652 = vmatprep.subr.bf16.mxu0 0
        %653 = vmatpush2.bf16.msra.mxu0 0
        %654 = vmatprep.subr.bf16.mxu0 0
        %655 = vmatpush2.bf16.msra.mxu0 0
        %656 = vmatprep.subr.bf16.mxu0 0
        %657 = vmatpush2.bf16.msra.mxu0 0
        %658 = vmatprep.subr.bf16.mxu0 0
        %659 = vmatpush2.bf16.msra.mxu0 0
        %660 = vmatprep.subr.bf16.mxu0 0
        %661 = vmatpush2.bf16.msra.mxu0 0
        %662 = vmatprep.subr.bf16.mxu0 0
        %663 = vmatpush2.bf16.msra.mxu0 0
        %664 = vmatprep.subr.bf16.mxu0 0
        %665 = vmatpush2.bf16.msra.mxu0 0
        %666 = vmatprep.mubr.bf16.mxu0 0
        %667 = vmatmul.mubr.bf16.gmra.mxu0 %v568
        %v668 = vpop.f32.mrf.mxu0
        %v669 = vadd.f32 0.0, %v668
        %v670 = vpop.f32.mrf.mxu0
        %v671 = vpop.f32.mrf.mxu0
        %v672 = vpop.f32.mrf.mxu0
        %673 = vdwg.mxu0
        %v674 = vadd.f32 %v564, %v669
        %s675 = sadd.s32 3, %s230
        %s676 = smul.addr %s675, 4
        %s677 = scalar_lea.vmem %s206, %s676
        %v678 = vld [vmem:[%s677] sm:$0x3]
        %s679 = scalar_lea.vmem %s210, 256
        %v680 = vld [vmem:[%s679] sm:$0xf]
        %v681 = vld [vmem:[%s679 + $0x4] sm:$0xf]
        %v682 = vld [vmem:[%s679 + $0x8] sm:$0xf]
        %v683 = vld [vmem:[%s679 + $0xc] sm:$0xf]
        %v684 = vld [vmem:[%s679 + $0x10] sm:$0xf]
        %v685 = vld [vmem:[%s679 + $0x14] sm:$0xf]
        %v686 = vld [vmem:[%s679 + $0x18] sm:$0xf]
        %v687 = vld [vmem:[%s679 + $0x1c] sm:$0xf]
        %v688 = vld [vmem:[%s679 + $0x20] sm:$0xf]
        %v689 = vld [vmem:[%s679 + $0x24] sm:$0xf]
        %v690 = vld [vmem:[%s679 + $0x28] sm:$0xf]
        %v691 = vld [vmem:[%s679 + $0x2c] sm:$0xf]
        %v692 = vld [vmem:[%s679 + $0x30] sm:$0xf]
        %v693 = vld [vmem:[%s679 + $0x34] sm:$0xf]
        %v694 = vld [vmem:[%s679 + $0x38] sm:$0xf]
        %v695 = vld [vmem:[%s679 + $0x3c] sm:$0xf]
        %v712 = vunpack.c.l.b16 %v680
        %v713 = vunpack.c.l.b16 %v681
        %v714 = vunpack.c.l.b16 %v682
        %v715 = vunpack.c.l.b16 %v683
        %v716 = vunpack.c.l.b16 %v684
        %v717 = vunpack.c.l.b16 %v685
        %v718 = vunpack.c.l.b16 %v686
        %v719 = vunpack.c.l.b16 %v687
        %v720 = vunpack.c.l.b16 %v688
        %v721 = vunpack.c.l.b16 %v689
        %v722 = vunpack.c.l.b16 %v690
        %v723 = vunpack.c.l.b16 %v691
        %v724 = vunpack.c.l.b16 %v692
        %v725 = vunpack.c.l.b16 %v693
        %v726 = vunpack.c.l.b16 %v694
        %v727 = vunpack.c.l.b16 %v695
        %v728 = vpack.c.b16 %v713, %v712
        %v729 = vpack.c.b16 %v715, %v714
        %v730 = vpack.c.b16 %v717, %v716
        %v731 = vpack.c.b16 %v719, %v718
        %v732 = vpack.c.b16 %v721, %v720
        %v733 = vpack.c.b16 %v723, %v722
        %v734 = vpack.c.b16 %v725, %v724
        %v735 = vpack.c.b16 %v727, %v726
        %744 = vmatprep.subr.bf16.mxu0 0
        %745 = vmatpush1.bf16.msra.mxu0 %v735
        %746 = vmatprep.subr.bf16.mxu0 0
        %747 = vmatpush1.bf16.msra.mxu0 %v734
        %748 = vmatprep.subr.bf16.mxu0 0
        %749 = vmatpush1.bf16.msra.mxu0 %v733
        %750 = vmatprep.subr.bf16.mxu0 0
        %751 = vmatpush1.bf16.msra.mxu0 %v732
        %752 = vmatprep.subr.bf16.mxu0 0
        %753 = vmatpush1.bf16.msra.mxu0 %v731
        %754 = vmatprep.subr.bf16.mxu0 0
        %755 = vmatpush1.bf16.msra.mxu0 %v730
        %756 = vmatprep.subr.bf16.mxu0 0
        %757 = vmatpush1.bf16.msra.mxu0 %v729
        %758 = vmatprep.subr.bf16.mxu0 0
        %759 = vmatpush1.bf16.msra.mxu0 %v728
        %760 = vmatprep.subr.bf16.mxu0 0
        %761 = vmatpush2.bf16.msra.mxu0 0
        %762 = vmatprep.subr.bf16.mxu0 0
        %763 = vmatpush2.bf16.msra.mxu0 0
        %764 = vmatprep.subr.bf16.mxu0 0
        %765 = vmatpush2.bf16.msra.mxu0 0
        %766 = vmatprep.subr.bf16.mxu0 0
        %767 = vmatpush2.bf16.msra.mxu0 0
        %768 = vmatprep.subr.bf16.mxu0 0
        %769 = vmatpush2.bf16.msra.mxu0 0
        %770 = vmatprep.subr.bf16.mxu0 0
        %771 = vmatpush2.bf16.msra.mxu0 0
        %772 = vmatprep.subr.bf16.mxu0 0
        %773 = vmatpush2.bf16.msra.mxu0 0
        %774 = vmatprep.subr.bf16.mxu0 0
        %775 = vmatpush2.bf16.msra.mxu0 0
        %776 = vmatprep.mubr.bf16.mxu0 0
        %777 = vmatmul.mubr.bf16.gmra.mxu0 %v678
        %v778 = vpop.f32.mrf.mxu0
        %v779 = vadd.f32 0.0, %v778
        %v780 = vpop.f32.mrf.mxu0
        %v781 = vpop.f32.mrf.mxu0
        %v782 = vpop.f32.mrf.mxu0
        %783 = vdwg.mxu0
        %v784 = vadd.f32 %v674, %v779
        %v785 = vld [vmem:[%s567] sm:$0x7]
        %s786 = scalar_lea.vmem %s210, 320
        %v787 = vld [vmem:[%s786] sm:$0xf]
        %v788 = vld [vmem:[%s786 + $0x4] sm:$0xf]
        %v789 = vld [vmem:[%s786 + $0x8] sm:$0xf]
        %v790 = vld [vmem:[%s786 + $0xc] sm:$0xf]
        %v791 = vld [vmem:[%s786 + $0x10] sm:$0xf]
        %v792 = vld [vmem:[%s786 + $0x14] sm:$0xf]
        %v793 = vld [vmem:[%s786 + $0x18] sm:$0xf]
        %v794 = vld [vmem:[%s786 + $0x1c] sm:$0xf]
        %v795 = vld [vmem:[%s786 + $0x20] sm:$0xf]
        %v796 = vld [vmem:[%s786 + $0x24] sm:$0xf]
        %v797 = vld [vmem:[%s786 + $0x28] sm:$0xf]
        %v798 = vld [vmem:[%s786 + $0x2c] sm:$0xf]
        %v799 = vld [vmem:[%s786 + $0x30] sm:$0xf]
        %v800 = vld [vmem:[%s786 + $0x34] sm:$0xf]
        %v801 = vld [vmem:[%s786 + $0x38] sm:$0xf]
        %v802 = vld [vmem:[%s786 + $0x3c] sm:$0xf]
        %v804 = vunpack.c.l.b16 %v785
        %v805 = vpack.c.b16 %v804, %v804
        %v807 = vshrl.u32 %v805, 16
        %v809 = vshll.u32 %v805, 16
        %v811 = vrot.slane %v809, 1
        %v812 = vor.u32 %v807, %v811
        %v830 = vunpack.c.l.b16 %v787
        %v831 = vunpack.c.l.b16 %v788
        %v832 = vunpack.c.l.b16 %v789
        %v833 = vunpack.c.l.b16 %v790
        %v834 = vunpack.c.l.b16 %v791
        %v835 = vunpack.c.l.b16 %v792
        %v836 = vunpack.c.l.b16 %v793
        %v837 = vunpack.c.l.b16 %v794
        %v838 = vunpack.c.l.b16 %v795
        %v839 = vunpack.c.l.b16 %v796
        %v840 = vunpack.c.l.b16 %v797
        %v841 = vunpack.c.l.b16 %v798
        %v842 = vunpack.c.l.b16 %v799
        %v843 = vunpack.c.l.b16 %v800
        %v844 = vunpack.c.l.b16 %v801
        %v845 = vunpack.c.l.b16 %v802
        %v846 = vpack.c.b16 %v831, %v830
        %v847 = vpack.c.b16 %v833, %v832
        %v848 = vpack.c.b16 %v835, %v834
        %v849 = vpack.c.b16 %v837, %v836
        %v850 = vpack.c.b16 %v839, %v838
        %v851 = vpack.c.b16 %v841, %v840
        %v852 = vpack.c.b16 %v843, %v842
        %v853 = vpack.c.b16 %v845, %v844
        %862 = vmatprep.subr.bf16.mxu0 0
        %863 = vmatpush1.bf16.msra.mxu0 %v853
        %864 = vmatprep.subr.bf16.mxu0 0
        %865 = vmatpush1.bf16.msra.mxu0 %v852
        %866 = vmatprep.subr.bf16.mxu0 0
        %867 = vmatpush1.bf16.msra.mxu0 %v851
        %868 = vmatprep.subr.bf16.mxu0 0
        %869 = vmatpush1.bf16.msra.mxu0 %v850
        %870 = vmatprep.subr.bf16.mxu0 0
        %871 = vmatpush1.bf16.msra.mxu0 %v849
        %872 = vmatprep.subr.bf16.mxu0 0
        %873 = vmatpush1.bf16.msra.mxu0 %v848
        %874 = vmatprep.subr.bf16.mxu0 0
        %875 = vmatpush1.bf16.msra.mxu0 %v847
        %876 = vmatprep.subr.bf16.mxu0 0
        %877 = vmatpush1.bf16.msra.mxu0 %v846
        %878 = vmatprep.subr.bf16.mxu0 0
        %879 = vmatpush2.bf16.msra.mxu0 0
        %880 = vmatprep.subr.bf16.mxu0 0
        %881 = vmatpush2.bf16.msra.mxu0 0
        %882 = vmatprep.subr.bf16.mxu0 0
        %883 = vmatpush2.bf16.msra.mxu0 0
        %884 = vmatprep.subr.bf16.mxu0 0
        %885 = vmatpush2.bf16.msra.mxu0 0
        %886 = vmatprep.subr.bf16.mxu0 0
        %887 = vmatpush2.bf16.msra.mxu0 0
        %888 = vmatprep.subr.bf16.mxu0 0
        %889 = vmatpush2.bf16.msra.mxu0 0
        %890 = vmatprep.subr.bf16.mxu0 0
        %891 = vmatpush2.bf16.msra.mxu0 0
        %892 = vmatprep.subr.bf16.mxu0 0
        %893 = vmatpush2.bf16.msra.mxu0 0
        %894 = vmatprep.mubr.bf16.mxu0 0
        %895 = vmatmul.mubr.bf16.gmra.mxu0 %v812
        %v896 = vpop.f32.mrf.mxu0
        %v897 = vadd.f32 0.0, %v896
        %v898 = vpop.f32.mrf.mxu0
        %v899 = vpop.f32.mrf.mxu0
        %v900 = vpop.f32.mrf.mxu0
        %901 = vdwg.mxu0
        %v902 = vadd.f32 %v784, %v897
        %s903 = sadd.s32 %s225, 1
        %s904 = smul.u32 %s903, 4
        %s905 = smul.addr %s904, 4
        %s906 = scalar_lea.vmem %s206, %s905
        %v907 = vld [vmem:[%s906] sm:$0x3]
        %s908 = scalar_lea.vmem %s210, 384
        %v909 = vld [vmem:[%s908] sm:$0xf]
        %v910 = vld [vmem:[%s908 + $0x4] sm:$0xf]
        %v911 = vld [vmem:[%s908 + $0x8] sm:$0xf]
        %v912 = vld [vmem:[%s908 + $0xc] sm:$0xf]
        %v913 = vld [vmem:[%s908 + $0x10] sm:$0xf]
        %v914 = vld [vmem:[%s908 + $0x14] sm:$0xf]
        %v915 = vld [vmem:[%s908 + $0x18] sm:$0xf]
        %v916 = vld [vmem:[%s908 + $0x1c] sm:$0xf]
        %v917 = vld [vmem:[%s908 + $0x20] sm:$0xf]
        %v918 = vld [vmem:[%s908 + $0x24] sm:$0xf]
        %v919 = vld [vmem:[%s908 + $0x28] sm:$0xf]
        %v920 = vld [vmem:[%s908 + $0x2c] sm:$0xf]
        %v921 = vld [vmem:[%s908 + $0x30] sm:$0xf]
        %v922 = vld [vmem:[%s908 + $0x34] sm:$0xf]
        %v923 = vld [vmem:[%s908 + $0x38] sm:$0xf]
        %v924 = vld [vmem:[%s908 + $0x3c] sm:$0xf]
        %v941 = vunpack.c.l.b16 %v909
        %v942 = vunpack.c.l.b16 %v910
        %v943 = vunpack.c.l.b16 %v911
        %v944 = vunpack.c.l.b16 %v912
        %v945 = vunpack.c.l.b16 %v913
        %v946 = vunpack.c.l.b16 %v914
        %v947 = vunpack.c.l.b16 %v915
        %v948 = vunpack.c.l.b16 %v916
        %v949 = vunpack.c.l.b16 %v917
        %v950 = vunpack.c.l.b16 %v918
        %v951 = vunpack.c.l.b16 %v919
        %v952 = vunpack.c.l.b16 %v920
        %v953 = vunpack.c.l.b16 %v921
        %v954 = vunpack.c.l.b16 %v922
        %v955 = vunpack.c.l.b16 %v923
        %v956 = vunpack.c.l.b16 %v924
        %v957 = vpack.c.b16 %v942, %v941
        %v958 = vpack.c.b16 %v944, %v943
        %v959 = vpack.c.b16 %v946, %v945
        %v960 = vpack.c.b16 %v948, %v947
        %v961 = vpack.c.b16 %v950, %v949
        %v962 = vpack.c.b16 %v952, %v951
        %v963 = vpack.c.b16 %v954, %v953
        %v964 = vpack.c.b16 %v956, %v955
        %973 = vmatprep.subr.bf16.mxu0 0
        %974 = vmatpush1.bf16.msra.mxu0 %v964
        %975 = vmatprep.subr.bf16.mxu0 0
        %976 = vmatpush1.bf16.msra.mxu0 %v963
        %977 = vmatprep.subr.bf16.mxu0 0
        %978 = vmatpush1.bf16.msra.mxu0 %v962
        %979 = vmatprep.subr.bf16.mxu0 0
        %980 = vmatpush1.bf16.msra.mxu0 %v961
        %981 = vmatprep.subr.bf16.mxu0 0
        %982 = vmatpush1.bf16.msra.mxu0 %v960
        %983 = vmatprep.subr.bf16.mxu0 0
        %984 = vmatpush1.bf16.msra.mxu0 %v959
        %985 = vmatprep.subr.bf16.mxu0 0
        %986 = vmatpush1.bf16.msra.mxu0 %v958
        %987 = vmatprep.subr.bf16.mxu0 0
        %988 = vmatpush1.bf16.msra.mxu0 %v957
        %989 = vmatprep.subr.bf16.mxu0 0
        %990 = vmatpush2.bf16.msra.mxu0 0
        %991 = vmatprep.subr.bf16.mxu0 0
        %992 = vmatpush2.bf16.msra.mxu0 0
        %993 = vmatprep.subr.bf16.mxu0 0
        %994 = vmatpush2.bf16.msra.mxu0 0
        %995 = vmatprep.subr.bf16.mxu0 0
        %996 = vmatpush2.bf16.msra.mxu0 0
        %997 = vmatprep.subr.bf16.mxu0 0
        %998 = vmatpush2.bf16.msra.mxu0 0
        %999 = vmatprep.subr.bf16.mxu0 0
        %1000 = vmatpush2.bf16.msra.mxu0 0
        %1001 = vmatprep.subr.bf16.mxu0 0
        %1002 = vmatpush2.bf16.msra.mxu0 0
        %1003 = vmatprep.subr.bf16.mxu0 0
        %1004 = vmatpush2.bf16.msra.mxu0 0
        %1005 = vmatprep.mubr.bf16.mxu0 0
        %1006 = vmatmul.mubr.bf16.gmra.mxu0 %v907
        %v1007 = vpop.f32.mrf.mxu0
        %v1008 = vadd.f32 0.0, %v1007
        %v1009 = vpop.f32.mrf.mxu0
        %v1010 = vpop.f32.mrf.mxu0
        %v1011 = vpop.f32.mrf.mxu0
        %1012 = vdwg.mxu0
        %v1013 = vadd.f32 %v902, %v1008
        %s1014 = sadd.s32 1, %s904
        %s1015 = smul.addr %s1014, 4
        %s1016 = scalar_lea.vmem %s206, %s1015
        %v1017 = vld [vmem:[%s1016] sm:$0x3]
        %s1018 = scalar_lea.vmem %s210, 448
        %v1019 = vld [vmem:[%s1018] sm:$0xf]
        %v1020 = vld [vmem:[%s1018 + $0x4] sm:$0xf]
        %v1021 = vld [vmem:[%s1018 + $0x8] sm:$0xf]
        %v1022 = vld [vmem:[%s1018 + $0xc] sm:$0xf]
        %v1023 = vld [vmem:[%s1018 + $0x10] sm:$0xf]
        %v1024 = vld [vmem:[%s1018 + $0x14] sm:$0xf]
        %v1025 = vld [vmem:[%s1018 + $0x18] sm:$0xf]
        %v1026 = vld [vmem:[%s1018 + $0x1c] sm:$0xf]
        %v1027 = vld [vmem:[%s1018 + $0x20] sm:$0xf]
        %v1028 = vld [vmem:[%s1018 + $0x24] sm:$0xf]
        %v1029 = vld [vmem:[%s1018 + $0x28] sm:$0xf]
        %v1030 = vld [vmem:[%s1018 + $0x2c] sm:$0xf]
        %v1031 = vld [vmem:[%s1018 + $0x30] sm:$0xf]
        %v1032 = vld [vmem:[%s1018 + $0x34] sm:$0xf]
        %v1033 = vld [vmem:[%s1018 + $0x38] sm:$0xf]
        %v1034 = vld [vmem:[%s1018 + $0x3c] sm:$0xf]
        %v1051 = vunpack.c.l.b16 %v1019
        %v1052 = vunpack.c.l.b16 %v1020
        %v1053 = vunpack.c.l.b16 %v1021
        %v1054 = vunpack.c.l.b16 %v1022
        %v1055 = vunpack.c.l.b16 %v1023
        %v1056 = vunpack.c.l.b16 %v1024
        %v1057 = vunpack.c.l.b16 %v1025
        %v1058 = vunpack.c.l.b16 %v1026
        %v1059 = vunpack.c.l.b16 %v1027
        %v1060 = vunpack.c.l.b16 %v1028
        %v1061 = vunpack.c.l.b16 %v1029
        %v1062 = vunpack.c.l.b16 %v1030
        %v1063 = vunpack.c.l.b16 %v1031
        %v1064 = vunpack.c.l.b16 %v1032
        %v1065 = vunpack.c.l.b16 %v1033
        %v1066 = vunpack.c.l.b16 %v1034
        %v1067 = vpack.c.b16 %v1052, %v1051
        %v1068 = vpack.c.b16 %v1054, %v1053
        %v1069 = vpack.c.b16 %v1056, %v1055
        %v1070 = vpack.c.b16 %v1058, %v1057
        %v1071 = vpack.c.b16 %v1060, %v1059
        %v1072 = vpack.c.b16 %v1062, %v1061
        %v1073 = vpack.c.b16 %v1064, %v1063
        %v1074 = vpack.c.b16 %v1066, %v1065
        %1083 = vmatprep.subr.bf16.mxu0 0
        %1084 = vmatpush1.bf16.msra.mxu0 %v1074
        %1085 = vmatprep.subr.bf16.mxu0 0
        %1086 = vmatpush1.bf16.msra.mxu0 %v1073
        %1087 = vmatprep.subr.bf16.mxu0 0
        %1088 = vmatpush1.bf16.msra.mxu0 %v1072
        %1089 = vmatprep.subr.bf16.mxu0 0
        %1090 = vmatpush1.bf16.msra.mxu0 %v1071
        %1091 = vmatprep.subr.bf16.mxu0 0
        %1092 = vmatpush1.bf16.msra.mxu0 %v1070
        %1093 = vmatprep.subr.bf16.mxu0 0
        %1094 = vmatpush1.bf16.msra.mxu0 %v1069
        %1095 = vmatprep.subr.bf16.mxu0 0
        %1096 = vmatpush1.bf16.msra.mxu0 %v1068
        %1097 = vmatprep.subr.bf16.mxu0 0
        %1098 = vmatpush1.bf16.msra.mxu0 %v1067
        %1099 = vmatprep.subr.bf16.mxu0 0
        %1100 = vmatpush2.bf16.msra.mxu0 0
        %1101 = vmatprep.subr.bf16.mxu0 0
        %1102 = vmatpush2.bf16.msra.mxu0 0
        %1103 = vmatprep.subr.bf16.mxu0 0
        %1104 = vmatpush2.bf16.msra.mxu0 0
        %1105 = vmatprep.subr.bf16.mxu0 0
        %1106 = vmatpush2.bf16.msra.mxu0 0
        %1107 = vmatprep.subr.bf16.mxu0 0
        %1108 = vmatpush2.bf16.msra.mxu0 0
        %1109 = vmatprep.subr.bf16.mxu0 0
        %1110 = vmatpush2.bf16.msra.mxu0 0
        %1111 = vmatprep.subr.bf16.mxu0 0
        %1112 = vmatpush2.bf16.msra.mxu0 0
        %1113 = vmatprep.subr.bf16.mxu0 0
        %1114 = vmatpush2.bf16.msra.mxu0 0
        %1115 = vmatprep.mubr.bf16.mxu0 0
        %1116 = vmatmul.mubr.bf16.gmra.mxu0 %v1017
        %v1117 = vpop.f32.mrf.mxu0
        %v1118 = vadd.f32 0.0, %v1117
        %v1119 = vpop.f32.mrf.mxu0
        %v1120 = vpop.f32.mrf.mxu0
        %v1121 = vpop.f32.mrf.mxu0
        %1122 = vdwg.mxu0
        %v1123 = vadd.f32 %v1013, %v1118
        %v1124 = vld [vmem:[%s906] sm:$0x7]
        %s1125 = scalar_lea.vmem %s210, 512
        %v1126 = vld [vmem:[%s1125] sm:$0xf]
        %v1127 = vld [vmem:[%s1125 + $0x4] sm:$0xf]
        %v1128 = vld [vmem:[%s1125 + $0x8] sm:$0xf]
        %v1129 = vld [vmem:[%s1125 + $0xc] sm:$0xf]
        %v1130 = vld [vmem:[%s1125 + $0x10] sm:$0xf]
        %v1131 = vld [vmem:[%s1125 + $0x14] sm:$0xf]
        %v1132 = vld [vmem:[%s1125 + $0x18] sm:$0xf]
        %v1133 = vld [vmem:[%s1125 + $0x1c] sm:$0xf]
        %v1134 = vld [vmem:[%s1125 + $0x20] sm:$0xf]
        %v1135 = vld [vmem:[%s1125 + $0x24] sm:$0xf]
        %v1136 = vld [vmem:[%s1125 + $0x28] sm:$0xf]
        %v1137 = vld [vmem:[%s1125 + $0x2c] sm:$0xf]
        %v1138 = vld [vmem:[%s1125 + $0x30] sm:$0xf]
        %v1139 = vld [vmem:[%s1125 + $0x34] sm:$0xf]
        %v1140 = vld [vmem:[%s1125 + $0x38] sm:$0xf]
        %v1141 = vld [vmem:[%s1125 + $0x3c] sm:$0xf]
        %v1143 = vunpack.c.l.b16 %v1124
        %v1144 = vpack.c.b16 %v1143, %v1143
        %v1146 = vshrl.u32 %v1144, 16
        %v1148 = vshll.u32 %v1144, 16
        %v1150 = vrot.slane %v1148, 1
        %v1151 = vor.u32 %v1146, %v1150
        %v1169 = vunpack.c.l.b16 %v1126
        %v1170 = vunpack.c.l.b16 %v1127
        %v1171 = vunpack.c.l.b16 %v1128
        %v1172 = vunpack.c.l.b16 %v1129
        %v1173 = vunpack.c.l.b16 %v1130
        %v1174 = vunpack.c.l.b16 %v1131
        %v1175 = vunpack.c.l.b16 %v1132
        %v1176 = vunpack.c.l.b16 %v1133
        %v1177 = vunpack.c.l.b16 %v1134
        %v1178 = vunpack.c.l.b16 %v1135
        %v1179 = vunpack.c.l.b16 %v1136
        %v1180 = vunpack.c.l.b16 %v1137
        %v1181 = vunpack.c.l.b16 %v1138
        %v1182 = vunpack.c.l.b16 %v1139
        %v1183 = vunpack.c.l.b16 %v1140
        %v1184 = vunpack.c.l.b16 %v1141
        %v1185 = vpack.c.b16 %v1170, %v1169
        %v1186 = vpack.c.b16 %v1172, %v1171
        %v1187 = vpack.c.b16 %v1174, %v1173
        %v1188 = vpack.c.b16 %v1176, %v1175
        %v1189 = vpack.c.b16 %v1178, %v1177
        %v1190 = vpack.c.b16 %v1180, %v1179
        %v1191 = vpack.c.b16 %v1182, %v1181
        %v1192 = vpack.c.b16 %v1184, %v1183
        %1201 = vmatprep.subr.bf16.mxu0 0
        %1202 = vmatpush1.bf16.msra.mxu0 %v1192
        %1203 = vmatprep.subr.bf16.mxu0 0
        %1204 = vmatpush1.bf16.msra.mxu0 %v1191
        %1205 = vmatprep.subr.bf16.mxu0 0
        %1206 = vmatpush1.bf16.msra.mxu0 %v1190
        %1207 = vmatprep.subr.bf16.mxu0 0
        %1208 = vmatpush1.bf16.msra.mxu0 %v1189
        %1209 = vmatprep.subr.bf16.mxu0 0
        %1210 = vmatpush1.bf16.msra.mxu0 %v1188
        %1211 = vmatprep.subr.bf16.mxu0 0
        %1212 = vmatpush1.bf16.msra.mxu0 %v1187
        %1213 = vmatprep.subr.bf16.mxu0 0
        %1214 = vmatpush1.bf16.msra.mxu0 %v1186
        %1215 = vmatprep.subr.bf16.mxu0 0
        %1216 = vmatpush1.bf16.msra.mxu0 %v1185
        %1217 = vmatprep.subr.bf16.mxu0 0
        %1218 = vmatpush2.bf16.msra.mxu0 0
        %1219 = vmatprep.subr.bf16.mxu0 0
        %1220 = vmatpush2.bf16.msra.mxu0 0
        %1221 = vmatprep.subr.bf16.mxu0 0
        %1222 = vmatpush2.bf16.msra.mxu0 0
        %1223 = vmatprep.subr.bf16.mxu0 0
        %1224 = vmatpush2.bf16.msra.mxu0 0
        %1225 = vmatprep.subr.bf16.mxu0 0
        %1226 = vmatpush2.bf16.msra.mxu0 0
        %1227 = vmatprep.subr.bf16.mxu0 0
        %1228 = vmatpush2.bf16.msra.mxu0 0
        %1229 = vmatprep.subr.bf16.mxu0 0
        %1230 = vmatpush2.bf16.msra.mxu0 0
        %1231 = vmatprep.subr.bf16.mxu0 0
        %1232 = vmatpush2.bf16.msra.mxu0 0
        %1233 = vmatprep.mubr.bf16.mxu0 0
        %1234 = vmatmul.mubr.bf16.gmra.mxu0 %v1151
        %v1235 = vpop.f32.mrf.mxu0
        %v1236 = vadd.f32 0.0, %v1235
        %v1237 = vpop.f32.mrf.mxu0
        %v1238 = vpop.f32.mrf.mxu0
        %v1239 = vpop.f32.mrf.mxu0
        %1240 = vdwg.mxu0
        %v1241 = vadd.f32 %v1123, %v1236
        %v1243 = vlaneseq
        %v1244 = vshrl.u32 %v1243, 7
        %v1245 = vsub.s32 0, %v1244
        %v1246 = vrot.slane %v223, %v1245
        %v1248 = vadd.f32 %v1241, %v1246
        %v1249 = vmax.f32 %v1248, 0.0
        %v1250 = vpack.c.bf16 %v1249, %v1249
        %s1251 = smul.addr %s225, 2
        %s1252 = scalar_lea.vmem %s221, %s1251
        %1253 = vst [vmem:[%s1252] sm:$0x3] %v1250
      $region37: #{_lambda_.4} parent=31 // loop_footer
        %s229 = sadd.s32 1, %s225
      $region38: #{_lambda_.4} parent=31 // loop_footer_branch
        %224 = sbr.rel target = $region34
      $region39: #{_lambda_.4} parent=31 // loop_exit
        _
      %p1254 = scmp.lt.s32.totalorder %s18, 1
      %s1255 = scalar_select %p1254, %s18, 1
      %p1256 = scmp.lt.s32.totalorder %s19, 0
      %s1257 = scalar_select %p1256, %s19, 0
      %s1258 = smul.addr %s1255, 4
      %s1259 = sadd.s32 %s1257, %s1258
      %s1260 = smul.addr %s1259, 2
      %s1261 = scalar_lea.vmem %s3, %s1260
      // Predicated region
      $region40: #{_lambda_.4} parent=31 // pred_check
        %p1262 = pneg %p124
      $region41: #{_lambda_.4} parent=31 // pred_check_branch
        %1264 = sbr.rel (%p1262) target = $region43
      $region42: #{_lambda_.4} parent=31 // pred_region
        _
      $region43: #{_lambda_.4} parent=31 // pred_fallthru
        _
    $region32: #{_lambda_.4} parent=5 // pred_fallthru
      _
    %p1265 = scmp.le.s32.totalorder 2, %s9
    // Predicated region
    $region44: #{_lambda_.4} parent=5 // pred_check
      %p1266 = pneg %p1265
    $region45: #{_lambda_.4} parent=5 // pred_check_branch
      %1268 = sbr.rel (%p1266) target = $region47
    $region46: #{_lambda_.4} parent=5 // pred_region
      %s1269 = ssub.s32 %s9, 2
      // Predicated region
      $region48: #{_lambda_.4} parent=46 // pred_check
        %p1270 = pneg %p130
      $region49: #{_lambda_.4} parent=46 // pred_check_branch
        %1272 = sbr.rel (%p1270) target = $region51
      $region50: #{_lambda_.4} parent=46 // pred_region
        %p1273 = scmp.lt.s32.totalorder %s20, 1
        %s1274 = scalar_select %p1273, %s20, 1
        %p1275 = scmp.lt.s32.totalorder %s21, 0
        %s1276 = scalar_select %p1275, %s21, 0
        %s1277 = smul.addr %s1274, 4
        %s1278 = sadd.s32 %s1276, %s1277
        %s1279 = smul.addr %s1278, 2
        %s1280 = scalar_lea.vmem %s3, %s1279
      $region51: #{_lambda_.4} parent=46 // pred_fallthru
        _
    $region47: #{_lambda_.4} parent=5 // pred_fallthru
      _
  $region6: #{_lambda_.4} parent=0 // loop_footer
    %s13 = sadd.s32 1, %s9
  $region7: #{_lambda_.4} parent=0 // loop_footer_branch
    %8 = sbr.rel target = $region3
  $region8: #{_lambda_.4} parent=0 // loop_exit
    _

// kernel: _lambda_.5
$region0: #{_lambda_.5}
  #allocation0 [shape = 'u32[]', space=smem, size = 0x4, offset = 0x4, fixed_abs, tag = 'smem constant byte address 0x4 - core index']
  #allocation1 [shape = 'u32[144,128]{1,0:T(1,128)}', space=vmem, size = 0x12000, scoped, tag = 'internal scratch']
  %s0 = inlined_call_operand.vmem [shape: bf16[2,3,4,3,128], index: 0, kind: input, shape index: {}]
  %s1 = inlined_call_operand.vmem [shape: bf16[9,128,256], index: 1, kind: input, shape index: {}]
  %s2 = inlined_call_operand.vmem [shape: f32[1,256], index: 2, kind: input, shape index: {}]
  %s3 = inlined_call_operand.vmem [shape: bf16[2,2,2,256], index: 3, kind: output, shape index: {}]
  %s4 = sld [smem:[#allocation0]]
  $region123: #{_lambda_.5} parent=0
    _
  %s6 = ssub.s32 1, %s4
  %s7 = scalar_select 0, %s6, %s4
  $region1: #{_lambda_.5} parent=0
    #allocation2 [shape = 'u8[589824]{0}', space=vmem, size = 0x90000, scoped, tag = 'input window, operand 1']
    #allocation3 [shape = 'u8[2048]{0}', space=vmem, size = 0x800, scoped, tag = 'output window, operand 0']
    loop: start=0, step=1, limit=6
    $region2: #{_lambda_.5} parent=1 // loop_pre_header
      _
    $region3: #{_lambda_.5} parent=1 // loop_header
      %s9 = sphi 0, %s13
      %p10 = scmp.ge.s32.totalorder %s9, 6
      %s16 = sphi 0, %s28
      %s17 = sphi 0, %s24
      %s18 = sphi 0, %s16
      %s19 = sphi 0, %s17
      %s20 = sphi 0, %s18
      %s21 = sphi 0, %s19
      %s31 = sphi 0, %s33
      %s34 = sphi 0, %s31
      %s35 = sphi 0, %s34
      %s51 = sphi 0, %s35
      %s57 = sphi 0, %s59
      %s60 = sphi 0, %s57
      %s61 = sphi 0, %s60
      %s77 = sphi 0, %s61
      %s83 = sphi 0, %s85
      %s86 = sphi 0, %s83
      %s87 = sphi 0, %s86
      %s103 = sphi 0, %s87
      %s111 = sphi 0, %s113
      %s114 = sphi 0, %s111
      %s115 = sphi 0, %s114
      %s131 = sphi 0, %s115
    $region4: #{_lambda_.5} parent=1 // loop_header_branch
      %12 = sbr.rel (%p10) target = $region8
    $region5: #{_lambda_.5} parent=1 // loop_body
      %s14 = ssub.s32 %s9, 1
      %s15 = ssub.s32 %s9, 2
      %s22 = sadd.s32 1, %s17
      %p23 = scmp.ge.s32.totalorder %s22, 2
      %s24 = scalar_select %p23, 0, %s22
      %s25 = sadd.s32 1, %s16
      %s26 = scalar_select %p23, %s25, %s16
      %p27 = scmp.ge.s32.totalorder %s26, 2
      %s28 = scalar_select %p27, 0, %s26
      %s29 = ssub.s32 %s16, %s28
      %p30 = scmp.eq.s32.totalorder %s29, 0
      %s32 = sadd.s32 %s31, 1
      %s33 = scalar_select %p30, %s31, %s32
      %p36 = pneg %p30
      %p37 = scmp.eq.s32.totalorder %s9, 3
      %p38 = por %p36, %p37
      %p39 = scmp.ne.s32.totalorder %s31, %s34
      %p40 = scmp.eq.s32.totalorder %s9, 0
      %p41 = por %p39, %p40
      %p42 = scmp.ne.s32.totalorder %s31, %s34
      %p43 = scmp.eq.s32.totalorder %s14, 3
      %p44 = por %p42, %p43
      %p45 = scmp.ne.s32.totalorder %s34, %s35
      %p46 = scmp.eq.s32.totalorder %s14, 0
      %p47 = por %p45, %p46
      %p48 = scmp.ne.s32.totalorder %s34, %s35
      %p49 = scmp.eq.s32.totalorder %s15, 3
      %p50 = por %p48, %p49
      %p52 = scmp.ne.s32.totalorder %s35, %s51
      %p53 = scmp.eq.s32.totalorder %s15, 0
      %p54 = por %p52, %p53
      %s55 = ssub.s32 %s17, %s24
      %p56 = scmp.eq.s32.totalorder %s55, 0
      %s58 = sadd.s32 %s57, 1
      %s59 = scalar_select %p56, %s57, %s58
      %p62 = pneg %p56
      %p63 = scmp.eq.s32.totalorder %s9, 3
      %p64 = por %p62, %p63
      %p65 = scmp.ne.s32.totalorder %s57, %s60
      %p66 = scmp.eq.s32.totalorder %s9, 0
      %p67 = por %p65, %p66
      %p68 = scmp.ne.s32.totalorder %s57, %s60
      %p69 = scmp.eq.s32.totalorder %s14, 3
      %p70 = por %p68, %p69
      %p71 = scmp.ne.s32.totalorder %s60, %s61
      %p72 = scmp.eq.s32.totalorder %s14, 0
      %p73 = por %p71, %p72
      %p74 = scmp.ne.s32.totalorder %s60, %s61
      %p75 = scmp.eq.s32.totalorder %s15, 3
      %p76 = por %p74, %p75
      %p78 = scmp.ne.s32.totalorder %s61, %s77
      %p79 = scmp.eq.s32.totalorder %s15, 0
      %p80 = por %p78, %p79
      %s81 = ssub.s32 %s17, %s24
      %p82 = scmp.eq.s32.totalorder %s81, 0
      %s84 = sadd.s32 %s83, 1
      %s85 = scalar_select %p82, %s83, %s84
      %p88 = pneg %p82
      %p89 = scmp.eq.s32.totalorder %s9, 3
      %p90 = por %p88, %p89
      %p91 = scmp.ne.s32.totalorder %s83, %s86
      %p92 = scmp.eq.s32.totalorder %s9, 0
      %p93 = por %p91, %p92
      %p94 = scmp.ne.s32.totalorder %s83, %s86
      %p95 = scmp.eq.s32.totalorder %s14, 3
      %p96 = por %p94, %p95
      %p97 = scmp.ne.s32.totalorder %s86, %s87
      %p98 = scmp.eq.s32.totalorder %s14, 0
      %p99 = por %p97, %p98
      %p100 = scmp.ne.s32.totalorder %s86, %s87
      %p101 = scmp.eq.s32.totalorder %s15, 3
      %p102 = por %p100, %p101
      %p104 = scmp.ne.s32.totalorder %s87, %s103
      %p105 = scmp.eq.s32.totalorder %s15, 0
      %p106 = por %p104, %p105
      %s107 = ssub.s32 %s16, %s28
      %s108 = ssub.s32 %s17, %s24
      %s109 = sor.u32 %s107, %s108
      %p110 = scmp.eq.s32.totalorder %s109, 0
      %s112 = sadd.s32 %s111, 1
      %s113 = scalar_select %p110, %s111, %s112
      %p116 = pneg %p110
      %p117 = scmp.eq.s32.totalorder %s9, 3
      %p118 = por %p116, %p117
      %p119 = scmp.ne.s32.totalorder %s111, %s114
      %p120 = scmp.eq.s32.totalorder %s9, 0
      %p121 = por %p119, %p120
      %p122 = scmp.ne.s32.totalorder %s111, %s114
      %p123 = scmp.eq.s32.totalorder %s14, 3
      %p124 = por %p122, %p123
      %p125 = scmp.ne.s32.totalorder %s114, %s115
      %p126 = scmp.eq.s32.totalorder %s14, 0
      %p127 = por %p125, %p126
      %p128 = scmp.ne.s32.totalorder %s114, %s115
      %p129 = scmp.eq.s32.totalorder %s15, 3
      %p130 = por %p128, %p129
      %p132 = scmp.ne.s32.totalorder %s115, %s131
      %p133 = scmp.eq.s32.totalorder %s15, 0
      %p134 = por %p132, %p133
      %p135 = scmp.le.s32.totalorder 1, %s9
      %p136 = scmp.lt.s32.totalorder %s9, 5
      %p137 = pnand %p135, %p136
      %p138 = pneg %p137
      // Predicated region
      $region9: #{_lambda_.5} parent=5 // pred_check
        _
      $region10: #{_lambda_.5} parent=5 // pred_check_branch
        %140 = sbr.rel (%p137) target = $region12
      $region11: #{_lambda_.5} parent=5 // pred_region
        %s141 = ssub.s32 %s9, 1
      $region12: #{_lambda_.5} parent=5 // pred_fallthru
        _
      %p142 = scmp.lt.s32.totalorder %s9, 4
      // Predicated region
      $region13: #{_lambda_.5} parent=5 // pred_check
        %p143 = pneg %p142
      $region14: #{_lambda_.5} parent=5 // pred_check_branch
        %145 = sbr.rel (%p143) target = $region16
      $region15: #{_lambda_.5} parent=5 // pred_region
        // Predicated region
        $region17: #{_lambda_.5} parent=15 // pred_check
          %p146 = pneg %p41
        $region18: #{_lambda_.5} parent=15 // pred_check_branch
          %148 = sbr.rel (%p146) target = $region20
        $region19: #{_lambda_.5} parent=15 // pred_region
          %p149 = scmp.lt.s32.totalorder %s16, 1
          %s150 = scalar_select %p149, %s16, 1
          %s151 = smul.addr %s150, 12
          %s152 = smul.addr %s151, 2
          %s153 = scalar_lea.vmem %s0, %s152
        $region20: #{_lambda_.5} parent=15 // pred_fallthru
          _
        // Predicated region
        $region21: #{_lambda_.5} parent=15 // pred_check
          %p154 = pneg %p67
        $region22: #{_lambda_.5} parent=15 // pred_check_branch
          %156 = sbr.rel (%p154) target = $region24
        $region23: #{_lambda_.5} parent=15 // pred_region
          %s157 = sand.u32 %s57, 1
          %s158 = sand.u32 %s57, 1
          %s159 = smul.addr %s158, 576
          %s160 = scalar_lea.vmem [#allocation2], %s159
          %s161 = smul.addr %s17, 4
          %s162 = scalar_lea.vmem %s1, %s161
          // Predicated region
          $region25: #{_lambda_.5} parent=23 // pred_check
            _
          $region26: #{_lambda_.5} parent=23 // pred_check_branch
            %164 = sbr.rel (0) target = $region28
          $region27: #{_lambda_.5} parent=23 // pred_region
            // Predicated region
            $region29: #{_lambda_.5} parent=27 // pred_check
              _
            $region30: #{_lambda_.5} parent=27 // pred_check_branch
              %166 = sbr.rel target = $region32
            $region31: #{_lambda_.5} parent=27 // pred_region
              // Predicated region
              $region44: #{_lambda_.5} parent=31 // pred_check
                _
              $region45: #{_lambda_.5} parent=31 // pred_check_branch
                %468 = sbr.rel (0) target = $region47
              $region46: #{_lambda_.5} parent=31 // pred_region
                loop: start=0, step=1, limit=1
                $region48: #{_lambda_.5} parent=46 // loop_pre_header
                  _
                $region49: #{_lambda_.5} parent=46 // loop_header
                  %s470 = sphi 0, %s474
                  %p471 = scmp.ge.s32.totalorder %s470, 1
                  %s475 = sphi %s162, %s162
                  %s476 = sphi %s160, %s160
                $region50: #{_lambda_.5} parent=46 // loop_header_branch
                  %473 = sbr.rel (%p471) target = $region54
                $region51: #{_lambda_.5} parent=46 // loop_body
                  _
                $region52: #{_lambda_.5} parent=46 // loop_footer
                  %s474 = sadd.s32 1, %s470
                $region53: #{_lambda_.5} parent=46 // loop_footer_branch
                  %469 = sbr.rel target = $region49
                $region54: #{_lambda_.5} parent=46 // loop_exit
                  _
                %s478 = ssub.s32 16, 1
                loop: start=0, step=1, limit=1
                $region55: #{_lambda_.5} parent=46 // loop_pre_header
                  _
                $region56: #{_lambda_.5} parent=46 // loop_header
                  %s480 = sphi 0, %s484
                  %p481 = scmp.ge.s32.totalorder %s480, 1
                  %s485 = sphi %s162, %s162
                  %s486 = sphi %s160, %s160
                $region57: #{_lambda_.5} parent=46 // loop_header_branch
                  %483 = sbr.rel (%p481) target = $region61
                $region58: #{_lambda_.5} parent=46 // loop_body
                  %v487 = vld [vmem:[%s485] sm:%s478]
                  %488 = vst [vmem:[%s486] sm:%s478] %v487
                  %v489 = vld [vmem:[%s485 + $0x8] sm:%s478]
                  %490 = vst [vmem:[%s486 + $0x4] sm:%s478] %v489
                  %v491 = vld [vmem:[%s485 + $0x10] sm:%s478]
                  %492 = vst [vmem:[%s486 + $0x8] sm:%s478] %v491
                  %v493 = vld [vmem:[%s485 + $0x18] sm:%s478]
                  %494 = vst [vmem:[%s486 + $0xc] sm:%s478] %v493
                  %v495 = vld [vmem:[%s485 + $0x20] sm:%s478]
                  %496 = vst [vmem:[%s486 + $0x10] sm:%s478] %v495
                  %v497 = vld [vmem:[%s485 + $0x28] sm:%s478]
                  %498 = vst [vmem:[%s486 + $0x14] sm:%s478] %v497
                  %v499 = vld [vmem:[%s485 + $0x30] sm:%s478]
                  %500 = vst [vmem:[%s486 + $0x18] sm:%s478] %v499
                  %v501 = vld [vmem:[%s485 + $0x38] sm:%s478]
                  %502 = vst [vmem:[%s486 + $0x1c] sm:%s478] %v501
                  %v503 = vld [vmem:[%s485 + $0x40] sm:%s478]
                  %504 = vst [vmem:[%s486 + $0x20] sm:%s478] %v503
                  %v505 = vld [vmem:[%s485 + $0x48] sm:%s478]
                  %506 = vst [vmem:[%s486 + $0x24] sm:%s478] %v505
                  %v507 = vld [vmem:[%s485 + $0x50] sm:%s478]
                  %508 = vst [vmem:[%s486 + $0x28] sm:%s478] %v507
                  %v509 = vld [vmem:[%s485 + $0x58] sm:%s478]
                  %510 = vst [vmem:[%s486 + $0x2c] sm:%s478] %v509
                  %v511 = vld [vmem:[%s485 + $0x60] sm:%s478]
                  %512 = vst [vmem:[%s486 + $0x30] sm:%s478] %v511
                  %v513 = vld [vmem:[%s485 + $0x68] sm:%s478]
                  %514 = vst [vmem:[%s486 + $0x34] sm:%s478] %v513
                  %v515 = vld [vmem:[%s485 + $0x70] sm:%s478]
                  %516 = vst [vmem:[%s486 + $0x38] sm:%s478] %v515
                  %v517 = vld [vmem:[%s485 + $0x78] sm:%s478]
                  %518 = vst [vmem:[%s486 + $0x3c] sm:%s478] %v517
                  %v519 = vld [vmem:[%s485 + $0x80] sm:%s478]
                  %520 = vst [vmem:[%s486 + $0x40] sm:%s478] %v519
                  %v521 = vld [vmem:[%s485 + $0x88] sm:%s478]
                  %522 = vst [vmem:[%s486 + $0x44] sm:%s478] %v521
                  %v523 = vld [vmem:[%s485 + $0x90] sm:%s478]
                  %524 = vst [vmem:[%s486 + $0x48] sm:%s478] %v523
                  %v525 = vld [vmem:[%s485 + $0x98] sm:%s478]
                  %526 = vst [vmem:[%s486 + $0x4c] sm:%s478] %v525
                  %v527 = vld [vmem:[%s485 + $0xa0] sm:%s478]
                  %528 = vst [vmem:[%s486 + $0x50] sm:%s478] %v527
                  %v529 = vld [vmem:[%s485 + $0xa8] sm:%s478]
                  %530 = vst [vmem:[%s486 + $0x54] sm:%s478] %v529
                  %v531 = vld [vmem:[%s485 + $0xb0] sm:%s478]
                  %532 = vst [vmem:[%s486 + $0x58] sm:%s478] %v531
                  %v533 = vld [vmem:[%s485 + $0xb8] sm:%s478]
                  %534 = vst [vmem:[%s486 + $0x5c] sm:%s478] %v533
                  %v535 = vld [vmem:[%s485 + $0xc0] sm:%s478]
                  %536 = vst [vmem:[%s486 + $0x60] sm:%s478] %v535
                  %v537 = vld [vmem:[%s485 + $0xc8] sm:%s478]
                  %538 = vst [vmem:[%s486 + $0x64] sm:%s478] %v537
                  %v539 = vld [vmem:[%s485 + $0xd0] sm:%s478]
                  %540 = vst [vmem:[%s486 + $0x68] sm:%s478] %v539
                  %v541 = vld [vmem:[%s485 + $0xd8] sm:%s478]
                  %542 = vst [vmem:[%s486 + $0x6c] sm:%s478] %v541
                  %v543 = vld [vmem:[%s485 + $0xe0] sm:%s478]
                  %544 = vst [vmem:[%s486 + $0x70] sm:%s478] %v543
                  %v545 = vld [vmem:[%s485 + $0xe8] sm:%s478]
                  %546 = vst [vmem:[%s486 + $0x74] sm:%s478] %v545
                  %v547 = vld [vmem:[%s485 + $0xf0] sm:%s478]
                  %548 = vst [vmem:[%s486 + $0x78] sm:%s478] %v547
                  %v549 = vld [vmem:[%s485 + $0xf8] sm:%s478]
                  %550 = vst [vmem:[%s486 + $0x7c] sm:%s478] %v549
                  %v551 = vld [vmem:[%s485 + $0x100] sm:%s478]
                  %552 = vst [vmem:[%s486 + $0x80] sm:%s478] %v551
                  %v553 = vld [vmem:[%s485 + $0x108] sm:%s478]
                  %554 = vst [vmem:[%s486 + $0x84] sm:%s478] %v553
                  %v555 = vld [vmem:[%s485 + $0x110] sm:%s478]
                  %556 = vst [vmem:[%s486 + $0x88] sm:%s478] %v555
                  %v557 = vld [vmem:[%s485 + $0x118] sm:%s478]
                  %558 = vst [vmem:[%s486 + $0x8c] sm:%s478] %v557
                  %v559 = vld [vmem:[%s485 + $0x120] sm:%s478]
                  %560 = vst [vmem:[%s486 + $0x90] sm:%s478] %v559
                  %v561 = vld [vmem:[%s485 + $0x128] sm:%s478]
                  %562 = vst [vmem:[%s486 + $0x94] sm:%s478] %v561
                  %v563 = vld [vmem:[%s485 + $0x130] sm:%s478]
                  %564 = vst [vmem:[%s486 + $0x98] sm:%s478] %v563
                  %v565 = vld [vmem:[%s485 + $0x138] sm:%s478]
                  %566 = vst [vmem:[%s486 + $0x9c] sm:%s478] %v565
                  %v567 = vld [vmem:[%s485 + $0x140] sm:%s478]
                  %568 = vst [vmem:[%s486 + $0xa0] sm:%s478] %v567
                  %v569 = vld [vmem:[%s485 + $0x148] sm:%s478]
                  %570 = vst [vmem:[%s486 + $0xa4] sm:%s478] %v569
                  %v571 = vld [vmem:[%s485 + $0x150] sm:%s478]
                  %572 = vst [vmem:[%s486 + $0xa8] sm:%s478] %v571
                  %v573 = vld [vmem:[%s485 + $0x158] sm:%s478]
                  %574 = vst [vmem:[%s486 + $0xac] sm:%s478] %v573
                  %v575 = vld [vmem:[%s485 + $0x160] sm:%s478]
                  %576 = vst [vmem:[%s486 + $0xb0] sm:%s478] %v575
                  %v577 = vld [vmem:[%s485 + $0x168] sm:%s478]
                  %578 = vst [vmem:[%s486 + $0xb4] sm:%s478] %v577
                  %v579 = vld [vmem:[%s485 + $0x170] sm:%s478]
                  %580 = vst [vmem:[%s486 + $0xb8] sm:%s478] %v579
                  %v581 = vld [vmem:[%s485 + $0x178] sm:%s478]
                  %582 = vst [vmem:[%s486 + $0xbc] sm:%s478] %v581
                  %v583 = vld [vmem:[%s485 + $0x180] sm:%s478]
                  %584 = vst [vmem:[%s486 + $0xc0] sm:%s478] %v583
                  %v585 = vld [vmem:[%s485 + $0x188] sm:%s478]
                  %586 = vst [vmem:[%s486 + $0xc4] sm:%s478] %v585
                  %v587 = vld [vmem:[%s485 + $0x190] sm:%s478]
                  %588 = vst [vmem:[%s486 + $0xc8] sm:%s478] %v587
                  %v589 = vld [vmem:[%s485 + $0x198] sm:%s478]
                  %590 = vst [vmem:[%s486 + $0xcc] sm:%s478] %v589
                  %v591 = vld [vmem:[%s485 + $0x1a0] sm:%s478]
                  %592 = vst [vmem:[%s486 + $0xd0] sm:%s478] %v591
                  %v593 = vld [vmem:[%s485 + $0x1a8] sm:%s478]
                  %594 = vst [vmem:[%s486 + $0xd4] sm:%s478] %v593
                  %v595 = vld [vmem:[%s485 + $0x1b0] sm:%s478]
                  %596 = vst [vmem:[%s486 + $0xd8] sm:%s478] %v595
                  %v597 = vld [vmem:[%s485 + $0x1b8] sm:%s478]
                  %598 = vst [vmem:[%s486 + $0xdc] sm:%s478] %v597
                  %v599 = vld [vmem:[%s485 + $0x1c0] sm:%s478]
                  %600 = vst [vmem:[%s486 + $0xe0] sm:%s478] %v599
                  %v601 = vld [vmem:[%s485 + $0x1c8] sm:%s478]
                  %602 = vst [vmem:[%s486 + $0xe4] sm:%s478] %v601
                  %v603 = vld [vmem:[%s485 + $0x1d0] sm:%s478]
                  %604 = vst [vmem:[%s486 + $0xe8] sm:%s478] %v603
                  %v605 = vld [vmem:[%s485 + $0x1d8] sm:%s478]
                  %606 = vst [vmem:[%s486 + $0xec] sm:%s478] %v605
                  %v607 = vld [vmem:[%s485 + $0x1e0] sm:%s478]
                  %608 = vst [vmem:[%s486 + $0xf0] sm:%s478] %v607
                  %v609 = vld [vmem:[%s485 + $0x1e8] sm:%s478]
                  %610 = vst [vmem:[%s486 + $0xf4] sm:%s478] %v609
                  %v611 = vld [vmem:[%s485 + $0x1f0] sm:%s478]
                  %612 = vst [vmem:[%s486 + $0xf8] sm:%s478] %v611
                  %v613 = vld [vmem:[%s485 + $0x1f8] sm:%s478]
                  %614 = vst [vmem:[%s486 + $0xfc] sm:%s478] %v613
                  %v615 = vld [vmem:[%s485 + $0x200] sm:%s478]
                  %616 = vst [vmem:[%s486 + $0x100] sm:%s478] %v615
                  %v617 = vld [vmem:[%s485 + $0x208] sm:%s478]
                  %618 = vst [vmem:[%s486 + $0x104] sm:%s478] %v617
                  %v619 = vld [vmem:[%s485 + $0x210] sm:%s478]
                  %620 = vst [vmem:[%s486 + $0x108] sm:%s478] %v619
                  %v621 = vld [vmem:[%s485 + $0x218] sm:%s478]
                  %622 = vst [vmem:[%s486 + $0x10c] sm:%s478] %v621
                  %v623 = vld [vmem:[%s485 + $0x220] sm:%s478]
                  %624 = vst [vmem:[%s486 + $0x110] sm:%s478] %v623
                  %v625 = vld [vmem:[%s485 + $0x228] sm:%s478]
                  %626 = vst [vmem:[%s486 + $0x114] sm:%s478] %v625
                  %v627 = vld [vmem:[%s485 + $0x230] sm:%s478]
                  %628 = vst [vmem:[%s486 + $0x118] sm:%s478] %v627
                  %v629 = vld [vmem:[%s485 + $0x238] sm:%s478]
                  %630 = vst [vmem:[%s486 + $0x11c] sm:%s478] %v629
                  %v631 = vld [vmem:[%s485 + $0x240] sm:%s478]
                  %632 = vst [vmem:[%s486 + $0x120] sm:%s478] %v631
                  %v633 = vld [vmem:[%s485 + $0x248] sm:%s478]
                  %634 = vst [vmem:[%s486 + $0x124] sm:%s478] %v633
                  %v635 = vld [vmem:[%s485 + $0x250] sm:%s478]
                  %636 = vst [vmem:[%s486 + $0x128] sm:%s478] %v635
                  %v637 = vld [vmem:[%s485 + $0x258] sm:%s478]
                  %638 = vst [vmem:[%s486 + $0x12c] sm:%s478] %v637
                  %v639 = vld [vmem:[%s485 + $0x260] sm:%s478]
                  %640 = vst [vmem:[%s486 + $0x130] sm:%s478] %v639
                  %v641 = vld [vmem:[%s485 + $0x268] sm:%s478]
                  %642 = vst [vmem:[%s486 + $0x134] sm:%s478] %v641
                  %v643 = vld [vmem:[%s485 + $0x270] sm:%s478]
                  %644 = vst [vmem:[%s486 + $0x138] sm:%s478] %v643
                  %v645 = vld [vmem:[%s485 + $0x278] sm:%s478]
                  %646 = vst [vmem:[%s486 + $0x13c] sm:%s478] %v645
                  %v647 = vld [vmem:[%s485 + $0x280] sm:%s478]
                  %648 = vst [vmem:[%s486 + $0x140] sm:%s478] %v647
                  %v649 = vld [vmem:[%s485 + $0x288] sm:%s478]
                  %650 = vst [vmem:[%s486 + $0x144] sm:%s478] %v649
                  %v651 = vld [vmem:[%s485 + $0x290] sm:%s478]
                  %652 = vst [vmem:[%s486 + $0x148] sm:%s478] %v651
                  %v653 = vld [vmem:[%s485 + $0x298] sm:%s478]
                  %654 = vst [vmem:[%s486 + $0x14c] sm:%s478] %v653
                  %v655 = vld [vmem:[%s485 + $0x2a0] sm:%s478]
                  %656 = vst [vmem:[%s486 + $0x150] sm:%s478] %v655
                  %v657 = vld [vmem:[%s485 + $0x2a8] sm:%s478]
                  %658 = vst [vmem:[%s486 + $0x154] sm:%s478] %v657
                  %v659 = vld [vmem:[%s485 + $0x2b0] sm:%s478]
                  %660 = vst [vmem:[%s486 + $0x158] sm:%s478] %v659
                  %v661 = vld [vmem:[%s485 + $0x2b8] sm:%s478]
                  %662 = vst [vmem:[%s486 + $0x15c] sm:%s478] %v661
                  %v663 = vld [vmem:[%s485 + $0x2c0] sm:%s478]
                  %664 = vst [vmem:[%s486 + $0x160] sm:%s478] %v663
                  %v665 = vld [vmem:[%s485 + $0x2c8] sm:%s478]
                  %666 = vst [vmem:[%s486 + $0x164] sm:%s478] %v665
                  %v667 = vld [vmem:[%s485 + $0x2d0] sm:%s478]
                  %668 = vst [vmem:[%s486 + $0x168] sm:%s478] %v667
                  %v669 = vld [vmem:[%s485 + $0x2d8] sm:%s478]
                  %670 = vst [vmem:[%s486 + $0x16c] sm:%s478] %v669
                  %v671 = vld [vmem:[%s485 + $0x2e0] sm:%s478]
                  %672 = vst [vmem:[%s486 + $0x170] sm:%s478] %v671
                  %v673 = vld [vmem:[%s485 + $0x2e8] sm:%s478]
                  %674 = vst [vmem:[%s486 + $0x174] sm:%s478] %v673
                  %v675 = vld [vmem:[%s485 + $0x2f0] sm:%s478]
                  %676 = vst [vmem:[%s486 + $0x178] sm:%s478] %v675
                  %v677 = vld [vmem:[%s485 + $0x2f8] sm:%s478]
                  %678 = vst [vmem:[%s486 + $0x17c] sm:%s478] %v677
                  %v679 = vld [vmem:[%s485 + $0x300] sm:%s478]
                  %680 = vst [vmem:[%s486 + $0x180] sm:%s478] %v679
                  %v681 = vld [vmem:[%s485 + $0x308] sm:%s478]
                  %682 = vst [vmem:[%s486 + $0x184] sm:%s478] %v681
                  %v683 = vld [vmem:[%s485 + $0x310] sm:%s478]
                  %684 = vst [vmem:[%s486 + $0x188] sm:%s478] %v683
                  %v685 = vld [vmem:[%s485 + $0x318] sm:%s478]
                  %686 = vst [vmem:[%s486 + $0x18c] sm:%s478] %v685
                  %v687 = vld [vmem:[%s485 + $0x320] sm:%s478]
                  %688 = vst [vmem:[%s486 + $0x190] sm:%s478] %v687
                  %v689 = vld [vmem:[%s485 + $0x328] sm:%s478]
                  %690 = vst [vmem:[%s486 + $0x194] sm:%s478] %v689
                  %v691 = vld [vmem:[%s485 + $0x330] sm:%s478]
                  %692 = vst [vmem:[%s486 + $0x198] sm:%s478] %v691
                  %v693 = vld [vmem:[%s485 + $0x338] sm:%s478]
                  %694 = vst [vmem:[%s486 + $0x19c] sm:%s478] %v693
                  %v695 = vld [vmem:[%s485 + $0x340] sm:%s478]
                  %696 = vst [vmem:[%s486 + $0x1a0] sm:%s478] %v695
                  %v697 = vld [vmem:[%s485 + $0x348] sm:%s478]
                  %698 = vst [vmem:[%s486 + $0x1a4] sm:%s478] %v697
                  %v699 = vld [vmem:[%s485 + $0x350] sm:%s478]
                  %700 = vst [vmem:[%s486 + $0x1a8] sm:%s478] %v699
                  %v701 = vld [vmem:[%s485 + $0x358] sm:%s478]
                  %702 = vst [vmem:[%s486 + $0x1ac] sm:%s478] %v701
                  %v703 = vld [vmem:[%s485 + $0x360] sm:%s478]
                  %704 = vst [vmem:[%s486 + $0x1b0] sm:%s478] %v703
                  %v705 = vld [vmem:[%s485 + $0x368] sm:%s478]
                  %706 = vst [vmem:[%s486 + $0x1b4] sm:%s478] %v705
                  %v707 = vld [vmem:[%s485 + $0x370] sm:%s478]
                  %708 = vst [vmem:[%s486 + $0x1b8] sm:%s478] %v707
                  %v709 = vld [vmem:[%s485 + $0x378] sm:%s478]
                  %710 = vst [vmem:[%s486 + $0x1bc] sm:%s478] %v709
                  %v711 = vld [vmem:[%s485 + $0x380] sm:%s478]
                  %712 = vst [vmem:[%s486 + $0x1c0] sm:%s478] %v711
                  %v713 = vld [vmem:[%s485 + $0x388] sm:%s478]
                  %714 = vst [vmem:[%s486 + $0x1c4] sm:%s478] %v713
                  %v715 = vld [vmem:[%s485 + $0x390] sm:%s478]
                  %716 = vst [vmem:[%s486 + $0x1c8] sm:%s478] %v715
                  %v717 = vld [vmem:[%s485 + $0x398] sm:%s478]
                  %718 = vst [vmem:[%s486 + $0x1cc] sm:%s478] %v717
                  %v719 = vld [vmem:[%s485 + $0x3a0] sm:%s478]
                  %720 = vst [vmem:[%s486 + $0x1d0] sm:%s478] %v719
                  %v721 = vld [vmem:[%s485 + $0x3a8] sm:%s478]
                  %722 = vst [vmem:[%s486 + $0x1d4] sm:%s478] %v721
                  %v723 = vld [vmem:[%s485 + $0x3b0] sm:%s478]
                  %724 = vst [vmem:[%s486 + $0x1d8] sm:%s478] %v723
                  %v725 = vld [vmem:[%s485 + $0x3b8] sm:%s478]
                  %726 = vst [vmem:[%s486 + $0x1dc] sm:%s478] %v725
                  %v727 = vld [vmem:[%s485 + $0x3c0] sm:%s478]
                  %728 = vst [vmem:[%s486 + $0x1e0] sm:%s478] %v727
                  %v729 = vld [vmem:[%s485 + $0x3c8] sm:%s478]
                  %730 = vst [vmem:[%s486 + $0x1e4] sm:%s478] %v729
                  %v731 = vld [vmem:[%s485 + $0x3d0] sm:%s478]
                  %732 = vst [vmem:[%s486 + $0x1e8] sm:%s478] %v731
                  %v733 = vld [vmem:[%s485 + $0x3d8] sm:%s478]
                  %734 = vst [vmem:[%s486 + $0x1ec] sm:%s478] %v733
                  %v735 = vld [vmem:[%s485 + $0x3e0] sm:%s478]
                  %736 = vst [vmem:[%s486 + $0x1f0] sm:%s478] %v735
                  %v737 = vld [vmem:[%s485 + $0x3e8] sm:%s478]
                  %738 = vst [vmem:[%s486 + $0x1f4] sm:%s478] %v737
                  %v739 = vld [vmem:[%s485 + $0x3f0] sm:%s478]
                  %740 = vst [vmem:[%s486 + $0x1f8] sm:%s478] %v739
                  %v741 = vld [vmem:[%s485 + $0x3f8] sm:%s478]
                  %742 = vst [vmem:[%s486 + $0x1fc] sm:%s478] %v741
                  %v743 = vld [vmem:[%s485 + $0x400] sm:%s478]
                  %744 = vst [vmem:[%s486 + $0x200] sm:%s478] %v743
                  %v745 = vld [vmem:[%s485 + $0x408] sm:%s478]
                  %746 = vst [vmem:[%s486 + $0x204] sm:%s478] %v745
                  %v747 = vld [vmem:[%s485 + $0x410] sm:%s478]
                  %748 = vst [vmem:[%s486 + $0x208] sm:%s478] %v747
                  %v749 = vld [vmem:[%s485 + $0x418] sm:%s478]
                  %750 = vst [vmem:[%s486 + $0x20c] sm:%s478] %v749
                  %v751 = vld [vmem:[%s485 + $0x420] sm:%s478]
                  %752 = vst [vmem:[%s486 + $0x210] sm:%s478] %v751
                  %v753 = vld [vmem:[%s485 + $0x428] sm:%s478]
                  %754 = vst [vmem:[%s486 + $0x214] sm:%s478] %v753
                  %v755 = vld [vmem:[%s485 + $0x430] sm:%s478]
                  %756 = vst [vmem:[%s486 + $0x218] sm:%s478] %v755
                  %v757 = vld [vmem:[%s485 + $0x438] sm:%s478]
                  %758 = vst [vmem:[%s486 + $0x21c] sm:%s478] %v757
                  %v759 = vld [vmem:[%s485 + $0x440] sm:%s478]
                  %760 = vst [vmem:[%s486 + $0x220] sm:%s478] %v759
                  %v761 = vld [vmem:[%s485 + $0x448] sm:%s478]
                  %762 = vst [vmem:[%s486 + $0x224] sm:%s478] %v761
                  %v763 = vld [vmem:[%s485 + $0x450] sm:%s478]
                  %764 = vst [vmem:[%s486 + $0x228] sm:%s478] %v763
                  %v765 = vld [vmem:[%s485 + $0x458] sm:%s478]
                  %766 = vst [vmem:[%s486 + $0x22c] sm:%s478] %v765
                  %v767 = vld [vmem:[%s485 + $0x460] sm:%s478]
                  %768 = vst [vmem:[%s486 + $0x230] sm:%s478] %v767
                  %v769 = vld [vmem:[%s485 + $0x468] sm:%s478]
                  %770 = vst [vmem:[%s486 + $0x234] sm:%s478] %v769
                  %v771 = vld [vmem:[%s485 + $0x470] sm:%s478]
                  %772 = vst [vmem:[%s486 + $0x238] sm:%s478] %v771
                  %v773 = vld [vmem:[%s485 + $0x478] sm:%s478]
                  %774 = vst [vmem:[%s486 + $0x23c] sm:%s478] %v773
                $region59: #{_lambda_.5} parent=46 // loop_footer
                  %s484 = sadd.s32 1, %s480
                $region60: #{_lambda_.5} parent=46 // loop_footer_branch
                  %479 = sbr.rel target = $region56
                $region61: #{_lambda_.5} parent=46 // loop_exit
                  _
              $region47: #{_lambda_.5} parent=31 // pred_fallthru
                _
            $region32: #{_lambda_.5} parent=27 // pred_fallthru
              _
            // Predicated region
            $region33: #{_lambda_.5} parent=27 // pred_check
              _
            $region34: #{_lambda_.5} parent=27 // pred_check_branch
              %168 = sbr.rel (0) target = $region36
            $region35: #{_lambda_.5} parent=27 // pred_region
              %s170 = ssub.s32 16, 1
              loop: start=0, step=1, limit=1
              $region37: #{_lambda_.5} parent=35 // loop_pre_header
                _
              $region38: #{_lambda_.5} parent=35 // loop_header
                %s172 = sphi 0, %s176
                %p173 = scmp.ge.s32.totalorder %s172, 1
                %s177 = sphi %s162, %s162
                %s178 = sphi %s160, %s160
              $region39: #{_lambda_.5} parent=35 // loop_header_branch
                %175 = sbr.rel (%p173) target = $region43
              $region40: #{_lambda_.5} parent=35 // loop_body
                %v179 = vld [vmem:[%s177] sm:%s170]
                %180 = vst [vmem:[%s178] sm:%s170] %v179
                %v181 = vld [vmem:[%s177 + $0x8] sm:%s170]
                %182 = vst [vmem:[%s178 + $0x4] sm:%s170] %v181
                %v183 = vld [vmem:[%s177 + $0x10] sm:%s170]
                %184 = vst [vmem:[%s178 + $0x8] sm:%s170] %v183
                %v185 = vld [vmem:[%s177 + $0x18] sm:%s170]
                %186 = vst [vmem:[%s178 + $0xc] sm:%s170] %v185
                %v187 = vld [vmem:[%s177 + $0x20] sm:%s170]
                %188 = vst [vmem:[%s178 + $0x10] sm:%s170] %v187
                %v189 = vld [vmem:[%s177 + $0x28] sm:%s170]
                %190 = vst [vmem:[%s178 + $0x14] sm:%s170] %v189
                %v191 = vld [vmem:[%s177 + $0x30] sm:%s170]
                %192 = vst [vmem:[%s178 + $0x18] sm:%s170] %v191
                %v193 = vld [vmem:[%s177 + $0x38] sm:%s170]
                %194 = vst [vmem:[%s178 + $0x1c] sm:%s170] %v193
                %v195 = vld [vmem:[%s177 + $0x40] sm:%s170]
                %196 = vst [vmem:[%s178 + $0x20] sm:%s170] %v195
                %v197 = vld [vmem:[%s177 + $0x48] sm:%s170]
                %198 = vst [vmem:[%s178 + $0x24] sm:%s170] %v197
                %v199 = vld [vmem:[%s177 + $0x50] sm:%s170]
                %200 = vst [vmem:[%s178 + $0x28] sm:%s170] %v199
                %v201 = vld [vmem:[%s177 + $0x58] sm:%s170]
                %202 = vst [vmem:[%s178 + $0x2c] sm:%s170] %v201
                %v203 = vld [vmem:[%s177 + $0x60] sm:%s170]
                %204 = vst [vmem:[%s178 + $0x30] sm:%s170] %v203
                %v205 = vld [vmem:[%s177 + $0x68] sm:%s170]
                %206 = vst [vmem:[%s178 + $0x34] sm:%s170] %v205
                %v207 = vld [vmem:[%s177 + $0x70] sm:%s170]
                %208 = vst [vmem:[%s178 + $0x38] sm:%s170] %v207
                %v209 = vld [vmem:[%s177 + $0x78] sm:%s170]
                %210 = vst [vmem:[%s178 + $0x3c] sm:%s170] %v209
                %v211 = vld [vmem:[%s177 + $0x80] sm:%s170]
                %212 = vst [vmem:[%s178 + $0x40] sm:%s170] %v211
                %v213 = vld [vmem:[%s177 + $0x88] sm:%s170]
                %214 = vst [vmem:[%s178 + $0x44] sm:%s170] %v213
                %v215 = vld [vmem:[%s177 + $0x90] sm:%s170]
                %216 = vst [vmem:[%s178 + $0x48] sm:%s170] %v215
                %v217 = vld [vmem:[%s177 + $0x98] sm:%s170]
                %218 = vst [vmem:[%s178 + $0x4c] sm:%s170] %v217
                %v219 = vld [vmem:[%s177 + $0xa0] sm:%s170]
                %220 = vst [vmem:[%s178 + $0x50] sm:%s170] %v219
                %v221 = vld [vmem:[%s177 + $0xa8] sm:%s170]
                %222 = vst [vmem:[%s178 + $0x54] sm:%s170] %v221
                %v223 = vld [vmem:[%s177 + $0xb0] sm:%s170]
                %224 = vst [vmem:[%s178 + $0x58] sm:%s170] %v223
                %v225 = vld [vmem:[%s177 + $0xb8] sm:%s170]
                %226 = vst [vmem:[%s178 + $0x5c] sm:%s170] %v225
                %v227 = vld [vmem:[%s177 + $0xc0] sm:%s170]
                %228 = vst [vmem:[%s178 + $0x60] sm:%s170] %v227
                %v229 = vld [vmem:[%s177 + $0xc8] sm:%s170]
                %230 = vst [vmem:[%s178 + $0x64] sm:%s170] %v229
                %v231 = vld [vmem:[%s177 + $0xd0] sm:%s170]
                %232 = vst [vmem:[%s178 + $0x68] sm:%s170] %v231
                %v233 = vld [vmem:[%s177 + $0xd8] sm:%s170]
                %234 = vst [vmem:[%s178 + $0x6c] sm:%s170] %v233
                %v235 = vld [vmem:[%s177 + $0xe0] sm:%s170]
                %236 = vst [vmem:[%s178 + $0x70] sm:%s170] %v235
                %v237 = vld [vmem:[%s177 + $0xe8] sm:%s170]
                %238 = vst [vmem:[%s178 + $0x74] sm:%s170] %v237
                %v239 = vld [vmem:[%s177 + $0xf0] sm:%s170]
                %240 = vst [vmem:[%s178 + $0x78] sm:%s170] %v239
                %v241 = vld [vmem:[%s177 + $0xf8] sm:%s170]
                %242 = vst [vmem:[%s178 + $0x7c] sm:%s170] %v241
                %v243 = vld [vmem:[%s177 + $0x100] sm:%s170]
                %244 = vst [vmem:[%s178 + $0x80] sm:%s170] %v243
                %v245 = vld [vmem:[%s177 + $0x108] sm:%s170]
                %246 = vst [vmem:[%s178 + $0x84] sm:%s170] %v245
                %v247 = vld [vmem:[%s177 + $0x110] sm:%s170]
                %248 = vst [vmem:[%s178 + $0x88] sm:%s170] %v247
                %v249 = vld [vmem:[%s177 + $0x118] sm:%s170]
                %250 = vst [vmem:[%s178 + $0x8c] sm:%s170] %v249
                %v251 = vld [vmem:[%s177 + $0x120] sm:%s170]
                %252 = vst [vmem:[%s178 + $0x90] sm:%s170] %v251
                %v253 = vld [vmem:[%s177 + $0x128] sm:%s170]
                %254 = vst [vmem:[%s178 + $0x94] sm:%s170] %v253
                %v255 = vld [vmem:[%s177 + $0x130] sm:%s170]
                %256 = vst [vmem:[%s178 + $0x98] sm:%s170] %v255
                %v257 = vld [vmem:[%s177 + $0x138] sm:%s170]
                %258 = vst [vmem:[%s178 + $0x9c] sm:%s170] %v257
                %v259 = vld [vmem:[%s177 + $0x140] sm:%s170]
                %260 = vst [vmem:[%s178 + $0xa0] sm:%s170] %v259
                %v261 = vld [vmem:[%s177 + $0x148] sm:%s170]
                %262 = vst [vmem:[%s178 + $0xa4] sm:%s170] %v261
                %v263 = vld [vmem:[%s177 + $0x150] sm:%s170]
                %264 = vst [vmem:[%s178 + $0xa8] sm:%s170] %v263
                %v265 = vld [vmem:[%s177 + $0x158] sm:%s170]
                %266 = vst [vmem:[%s178 + $0xac] sm:%s170] %v265
                %v267 = vld [vmem:[%s177 + $0x160] sm:%s170]
                %268 = vst [vmem:[%s178 + $0xb0] sm:%s170] %v267
                %v269 = vld [vmem:[%s177 + $0x168] sm:%s170]
                %270 = vst [vmem:[%s178 + $0xb4] sm:%s170] %v269
                %v271 = vld [vmem:[%s177 + $0x170] sm:%s170]
                %272 = vst [vmem:[%s178 + $0xb8] sm:%s170] %v271
                %v273 = vld [vmem:[%s177 + $0x178] sm:%s170]
                %274 = vst [vmem:[%s178 + $0xbc] sm:%s170] %v273
                %v275 = vld [vmem:[%s177 + $0x180] sm:%s170]
                %276 = vst [vmem:[%s178 + $0xc0] sm:%s170] %v275
                %v277 = vld [vmem:[%s177 + $0x188] sm:%s170]
                %278 = vst [vmem:[%s178 + $0xc4] sm:%s170] %v277
                %v279 = vld [vmem:[%s177 + $0x190] sm:%s170]
                %280 = vst [vmem:[%s178 + $0xc8] sm:%s170] %v279
                %v281 = vld [vmem:[%s177 + $0x198] sm:%s170]
                %282 = vst [vmem:[%s178 + $0xcc] sm:%s170] %v281
                %v283 = vld [vmem:[%s177 + $0x1a0] sm:%s170]
                %284 = vst [vmem:[%s178 + $0xd0] sm:%s170] %v283
                %v285 = vld [vmem:[%s177 + $0x1a8] sm:%s170]
                %286 = vst [vmem:[%s178 + $0xd4] sm:%s170] %v285
                %v287 = vld [vmem:[%s177 + $0x1b0] sm:%s170]
                %288 = vst [vmem:[%s178 + $0xd8] sm:%s170] %v287
                %v289 = vld [vmem:[%s177 + $0x1b8] sm:%s170]
                %290 = vst [vmem:[%s178 + $0xdc] sm:%s170] %v289
                %v291 = vld [vmem:[%s177 + $0x1c0] sm:%s170]
                %292 = vst [vmem:[%s178 + $0xe0] sm:%s170] %v291
                %v293 = vld [vmem:[%s177 + $0x1c8] sm:%s170]
                %294 = vst [vmem:[%s178 + $0xe4] sm:%s170] %v293
                %v295 = vld [vmem:[%s177 + $0x1d0] sm:%s170]
                %296 = vst [vmem:[%s178 + $0xe8] sm:%s170] %v295
                %v297 = vld [vmem:[%s177 + $0x1d8] sm:%s170]
                %298 = vst [vmem:[%s178 + $0xec] sm:%s170] %v297
                %v299 = vld [vmem:[%s177 + $0x1e0] sm:%s170]
                %300 = vst [vmem:[%s178 + $0xf0] sm:%s170] %v299
                %v301 = vld [vmem:[%s177 + $0x1e8] sm:%s170]
                %302 = vst [vmem:[%s178 + $0xf4] sm:%s170] %v301
                %v303 = vld [vmem:[%s177 + $0x1f0] sm:%s170]
                %304 = vst [vmem:[%s178 + $0xf8] sm:%s170] %v303
                %v305 = vld [vmem:[%s177 + $0x1f8] sm:%s170]
                %306 = vst [vmem:[%s178 + $0xfc] sm:%s170] %v305
                %v307 = vld [vmem:[%s177 + $0x200] sm:%s170]
                %308 = vst [vmem:[%s178 + $0x100] sm:%s170] %v307
                %v309 = vld [vmem:[%s177 + $0x208] sm:%s170]
                %310 = vst [vmem:[%s178 + $0x104] sm:%s170] %v309
                %v311 = vld [vmem:[%s177 + $0x210] sm:%s170]
                %312 = vst [vmem:[%s178 + $0x108] sm:%s170] %v311
                %v313 = vld [vmem:[%s177 + $0x218] sm:%s170]
                %314 = vst [vmem:[%s178 + $0x10c] sm:%s170] %v313
                %v315 = vld [vmem:[%s177 + $0x220] sm:%s170]
                %316 = vst [vmem:[%s178 + $0x110] sm:%s170] %v315
                %v317 = vld [vmem:[%s177 + $0x228] sm:%s170]
                %318 = vst [vmem:[%s178 + $0x114] sm:%s170] %v317
                %v319 = vld [vmem:[%s177 + $0x230] sm:%s170]
                %320 = vst [vmem:[%s178 + $0x118] sm:%s170] %v319
                %v321 = vld [vmem:[%s177 + $0x238] sm:%s170]
                %322 = vst [vmem:[%s178 + $0x11c] sm:%s170] %v321
                %v323 = vld [vmem:[%s177 + $0x240] sm:%s170]
                %324 = vst [vmem:[%s178 + $0x120] sm:%s170] %v323
                %v325 = vld [vmem:[%s177 + $0x248] sm:%s170]
                %326 = vst [vmem:[%s178 + $0x124] sm:%s170] %v325
                %v327 = vld [vmem:[%s177 + $0x250] sm:%s170]
                %328 = vst [vmem:[%s178 + $0x128] sm:%s170] %v327
                %v329 = vld [vmem:[%s177 + $0x258] sm:%s170]
                %330 = vst [vmem:[%s178 + $0x12c] sm:%s170] %v329
                %v331 = vld [vmem:[%s177 + $0x260] sm:%s170]
                %332 = vst [vmem:[%s178 + $0x130] sm:%s170] %v331
                %v333 = vld [vmem:[%s177 + $0x268] sm:%s170]
                %334 = vst [vmem:[%s178 + $0x134] sm:%s170] %v333
                %v335 = vld [vmem:[%s177 + $0x270] sm:%s170]
                %336 = vst [vmem:[%s178 + $0x138] sm:%s170] %v335
                %v337 = vld [vmem:[%s177 + $0x278] sm:%s170]
                %338 = vst [vmem:[%s178 + $0x13c] sm:%s170] %v337
                %v339 = vld [vmem:[%s177 + $0x280] sm:%s170]
                %340 = vst [vmem:[%s178 + $0x140] sm:%s170] %v339
                %v341 = vld [vmem:[%s177 + $0x288] sm:%s170]
                %342 = vst [vmem:[%s178 + $0x144] sm:%s170] %v341
                %v343 = vld [vmem:[%s177 + $0x290] sm:%s170]
                %344 = vst [vmem:[%s178 + $0x148] sm:%s170] %v343
                %v345 = vld [vmem:[%s177 + $0x298] sm:%s170]
                %346 = vst [vmem:[%s178 + $0x14c] sm:%s170] %v345
                %v347 = vld [vmem:[%s177 + $0x2a0] sm:%s170]
                %348 = vst [vmem:[%s178 + $0x150] sm:%s170] %v347
                %v349 = vld [vmem:[%s177 + $0x2a8] sm:%s170]
                %350 = vst [vmem:[%s178 + $0x154] sm:%s170] %v349
                %v351 = vld [vmem:[%s177 + $0x2b0] sm:%s170]
                %352 = vst [vmem:[%s178 + $0x158] sm:%s170] %v351
                %v353 = vld [vmem:[%s177 + $0x2b8] sm:%s170]
                %354 = vst [vmem:[%s178 + $0x15c] sm:%s170] %v353
                %v355 = vld [vmem:[%s177 + $0x2c0] sm:%s170]
                %356 = vst [vmem:[%s178 + $0x160] sm:%s170] %v355
                %v357 = vld [vmem:[%s177 + $0x2c8] sm:%s170]
                %358 = vst [vmem:[%s178 + $0x164] sm:%s170] %v357
                %v359 = vld [vmem:[%s177 + $0x2d0] sm:%s170]
                %360 = vst [vmem:[%s178 + $0x168] sm:%s170] %v359
                %v361 = vld [vmem:[%s177 + $0x2d8] sm:%s170]
                %362 = vst [vmem:[%s178 + $0x16c] sm:%s170] %v361
                %v363 = vld [vmem:[%s177 + $0x2e0] sm:%s170]
                %364 = vst [vmem:[%s178 + $0x170] sm:%s170] %v363
                %v365 = vld [vmem:[%s177 + $0x2e8] sm:%s170]
                %366 = vst [vmem:[%s178 + $0x174] sm:%s170] %v365
                %v367 = vld [vmem:[%s177 + $0x2f0] sm:%s170]
                %368 = vst [vmem:[%s178 + $0x178] sm:%s170] %v367
                %v369 = vld [vmem:[%s177 + $0x2f8] sm:%s170]
                %370 = vst [vmem:[%s178 + $0x17c] sm:%s170] %v369
                %v371 = vld [vmem:[%s177 + $0x300] sm:%s170]
                %372 = vst [vmem:[%s178 + $0x180] sm:%s170] %v371
                %v373 = vld [vmem:[%s177 + $0x308] sm:%s170]
                %374 = vst [vmem:[%s178 + $0x184] sm:%s170] %v373
                %v375 = vld [vmem:[%s177 + $0x310] sm:%s170]
                %376 = vst [vmem:[%s178 + $0x188] sm:%s170] %v375
                %v377 = vld [vmem:[%s177 + $0x318] sm:%s170]
                %378 = vst [vmem:[%s178 + $0x18c] sm:%s170] %v377
                %v379 = vld [vmem:[%s177 + $0x320] sm:%s170]
                %380 = vst [vmem:[%s178 + $0x190] sm:%s170] %v379
                %v381 = vld [vmem:[%s177 + $0x328] sm:%s170]
                %382 = vst [vmem:[%s178 + $0x194] sm:%s170] %v381
                %v383 = vld [vmem:[%s177 + $0x330] sm:%s170]
                %384 = vst [vmem:[%s178 + $0x198] sm:%s170] %v383
                %v385 = vld [vmem:[%s177 + $0x338] sm:%s170]
                %386 = vst [vmem:[%s178 + $0x19c] sm:%s170] %v385
                %v387 = vld [vmem:[%s177 + $0x340] sm:%s170]
                %388 = vst [vmem:[%s178 + $0x1a0] sm:%s170] %v387
                %v389 = vld [vmem:[%s177 + $0x348] sm:%s170]
                %390 = vst [vmem:[%s178 + $0x1a4] sm:%s170] %v389
                %v391 = vld [vmem:[%s177 + $0x350] sm:%s170]
                %392 = vst [vmem:[%s178 + $0x1a8] sm:%s170] %v391
                %v393 = vld [vmem:[%s177 + $0x358] sm:%s170]
                %394 = vst [vmem:[%s178 + $0x1ac] sm:%s170] %v393
                %v395 = vld [vmem:[%s177 + $0x360] sm:%s170]
                %396 = vst [vmem:[%s178 + $0x1b0] sm:%s170] %v395
                %v397 = vld [vmem:[%s177 + $0x368] sm:%s170]
                %398 = vst [vmem:[%s178 + $0x1b4] sm:%s170] %v397
                %v399 = vld [vmem:[%s177 + $0x370] sm:%s170]
                %400 = vst [vmem:[%s178 + $0x1b8] sm:%s170] %v399
                %v401 = vld [vmem:[%s177 + $0x378] sm:%s170]
                %402 = vst [vmem:[%s178 + $0x1bc] sm:%s170] %v401
                %v403 = vld [vmem:[%s177 + $0x380] sm:%s170]
                %404 = vst [vmem:[%s178 + $0x1c0] sm:%s170] %v403
                %v405 = vld [vmem:[%s177 + $0x388] sm:%s170]
                %406 = vst [vmem:[%s178 + $0x1c4] sm:%s170] %v405
                %v407 = vld [vmem:[%s177 + $0x390] sm:%s170]
                %408 = vst [vmem:[%s178 + $0x1c8] sm:%s170] %v407
                %v409 = vld [vmem:[%s177 + $0x398] sm:%s170]
                %410 = vst [vmem:[%s178 + $0x1cc] sm:%s170] %v409
                %v411 = vld [vmem:[%s177 + $0x3a0] sm:%s170]
                %412 = vst [vmem:[%s178 + $0x1d0] sm:%s170] %v411
                %v413 = vld [vmem:[%s177 + $0x3a8] sm:%s170]
                %414 = vst [vmem:[%s178 + $0x1d4] sm:%s170] %v413
                %v415 = vld [vmem:[%s177 + $0x3b0] sm:%s170]
                %416 = vst [vmem:[%s178 + $0x1d8] sm:%s170] %v415
                %v417 = vld [vmem:[%s177 + $0x3b8] sm:%s170]
                %418 = vst [vmem:[%s178 + $0x1dc] sm:%s170] %v417
                %v419 = vld [vmem:[%s177 + $0x3c0] sm:%s170]
                %420 = vst [vmem:[%s178 + $0x1e0] sm:%s170] %v419
                %v421 = vld [vmem:[%s177 + $0x3c8] sm:%s170]
                %422 = vst [vmem:[%s178 + $0x1e4] sm:%s170] %v421
                %v423 = vld [vmem:[%s177 + $0x3d0] sm:%s170]
                %424 = vst [vmem:[%s178 + $0x1e8] sm:%s170] %v423
                %v425 = vld [vmem:[%s177 + $0x3d8] sm:%s170]
                %426 = vst [vmem:[%s178 + $0x1ec] sm:%s170] %v425
                %v427 = vld [vmem:[%s177 + $0x3e0] sm:%s170]
                %428 = vst [vmem:[%s178 + $0x1f0] sm:%s170] %v427
                %v429 = vld [vmem:[%s177 + $0x3e8] sm:%s170]
                %430 = vst [vmem:[%s178 + $0x1f4] sm:%s170] %v429
                %v431 = vld [vmem:[%s177 + $0x3f0] sm:%s170]
                %432 = vst [vmem:[%s178 + $0x1f8] sm:%s170] %v431
                %v433 = vld [vmem:[%s177 + $0x3f8] sm:%s170]
                %434 = vst [vmem:[%s178 + $0x1fc] sm:%s170] %v433
                %v435 = vld [vmem:[%s177 + $0x400] sm:%s170]
                %436 = vst [vmem:[%s178 + $0x200] sm:%s170] %v435
                %v437 = vld [vmem:[%s177 + $0x408] sm:%s170]
                %438 = vst [vmem:[%s178 + $0x204] sm:%s170] %v437
                %v439 = vld [vmem:[%s177 + $0x410] sm:%s170]
                %440 = vst [vmem:[%s178 + $0x208] sm:%s170] %v439
                %v441 = vld [vmem:[%s177 + $0x418] sm:%s170]
                %442 = vst [vmem:[%s178 + $0x20c] sm:%s170] %v441
                %v443 = vld [vmem:[%s177 + $0x420] sm:%s170]
                %444 = vst [vmem:[%s178 + $0x210] sm:%s170] %v443
                %v445 = vld [vmem:[%s177 + $0x428] sm:%s170]
                %446 = vst [vmem:[%s178 + $0x214] sm:%s170] %v445
                %v447 = vld [vmem:[%s177 + $0x430] sm:%s170]
                %448 = vst [vmem:[%s178 + $0x218] sm:%s170] %v447
                %v449 = vld [vmem:[%s177 + $0x438] sm:%s170]
                %450 = vst [vmem:[%s178 + $0x21c] sm:%s170] %v449
                %v451 = vld [vmem:[%s177 + $0x440] sm:%s170]
                %452 = vst [vmem:[%s178 + $0x220] sm:%s170] %v451
                %v453 = vld [vmem:[%s177 + $0x448] sm:%s170]
                %454 = vst [vmem:[%s178 + $0x224] sm:%s170] %v453
                %v455 = vld [vmem:[%s177 + $0x450] sm:%s170]
                %456 = vst [vmem:[%s178 + $0x228] sm:%s170] %v455
                %v457 = vld [vmem:[%s177 + $0x458] sm:%s170]
                %458 = vst [vmem:[%s178 + $0x22c] sm:%s170] %v457
                %v459 = vld [vmem:[%s177 + $0x460] sm:%s170]
                %460 = vst [vmem:[%s178 + $0x230] sm:%s170] %v459
                %v461 = vld [vmem:[%s177 + $0x468] sm:%s170]
                %462 = vst [vmem:[%s178 + $0x234] sm:%s170] %v461
                %v463 = vld [vmem:[%s177 + $0x470] sm:%s170]
                %464 = vst [vmem:[%s178 + $0x238] sm:%s170] %v463
                %v465 = vld [vmem:[%s177 + $0x478] sm:%s170]
                %466 = vst [vmem:[%s178 + $0x23c] sm:%s170] %v465
              $region41: #{_lambda_.5} parent=35 // loop_footer
                %s176 = sadd.s32 1, %s172
              $region42: #{_lambda_.5} parent=35 // loop_footer_branch
                %171 = sbr.rel target = $region38
              $region43: #{_lambda_.5} parent=35 // loop_exit
                _
            $region36: #{_lambda_.5} parent=27 // pred_fallthru
              _
          $region28: #{_lambda_.5} parent=23 // pred_fallthru
            _
          %775 = vnop
        $region24: #{_lambda_.5} parent=15 // pred_fallthru
          _
        // Predicated region
        $region62: #{_lambda_.5} parent=15 // pred_check
          %p776 = pneg %p93
        $region63: #{_lambda_.5} parent=15 // pred_check_branch
          %778 = sbr.rel (%p776) target = $region65
        $region64: #{_lambda_.5} parent=15 // pred_region
          %p779 = scmp.lt.s32.totalorder %s17, 1
          %s780 = scalar_select %p779, %s17, 1
          %s781 = scalar_lea.vmem %s2, %s780
        $region65: #{_lambda_.5} parent=15 // pred_fallthru
          _
      $region16: #{_lambda_.5} parent=5 // pred_fallthru
        _
      %p782 = scmp.le.s32.totalorder 1, %s9
      %p783 = scmp.lt.s32.totalorder %s9, 5
      %p784 = pnand %p782, %p783
      %p785 = pneg %p784
      // Predicated region
      $region66: #{_lambda_.5} parent=5 // pred_check
        _
      $region67: #{_lambda_.5} parent=5 // pred_check_branch
        %787 = sbr.rel (%p784) target = $region69
      $region68: #{_lambda_.5} parent=5 // pred_region
        %s788 = ssub.s32 %s9, 1
        %s789 = sand.u32 %s60, 1
        %s790 = sand.u32 %s60, 1
        %s791 = smul.addr %s790, 576
        %s792 = scalar_lea.vmem [#allocation2], %s791
        // Predicated region
        $region70: #{_lambda_.5} parent=68 // pred_check
          %p793 = pneg %p73
        $region71: #{_lambda_.5} parent=68 // pred_check_branch
          %795 = sbr.rel (%p793) target = $region73
        $region72: #{_lambda_.5} parent=68 // pred_region
          _
        $region73: #{_lambda_.5} parent=68 // pred_fallthru
          _
        %p796 = scmp.lt.s32.totalorder %s18, 1
        %s797 = scalar_select %p796, %s18, 1
        %s798 = smul.addr %s797, 12
        %s799 = smul.addr %s798, 2
        %s800 = scalar_lea.vmem %s0, %s799
        %p801 = pneg %p47
        %p802 = pneg %p44
        %s803 = sand.u32 %s60, 1
        %s804 = sand.u32 %s60, 1
        %s805 = smul.addr %s804, 576
        %s806 = scalar_lea.vmem [#allocation2], %s805
        %p807 = pneg %p73
        %p808 = pneg %p70
        %p809 = scmp.lt.s32.totalorder %s19, 1
        %s810 = scalar_select %p809, %s19, 1
        %s811 = scalar_lea.vmem %s2, %s810
        %p812 = pneg %p99
        %p813 = pneg %p96
        %p814 = pneg %p127
        %p815 = pneg %p124
        %s816 = sand.u32 %s114, 1
        %s817 = sand.u32 %s114, 1
        %s818 = smul.addr %s817, 2
        %s819 = scalar_lea.vmem [#allocation3], %s818
        %p820 = scmp.lt.s32.totalorder %s18, 1
        %s821 = scalar_select %p820, %s18, 1
        %s822 = smul.addr %s821, 12
        %s823 = smul.addr %s822, 2
        %s824 = scalar_lea.vmem %s0, %s823
        %p825 = scmp.lt.s32.totalorder %s19, 1
        %s826 = scalar_select %p825, %s19, 1
        %s827 = scalar_lea.vmem %s2, %s826
        %v829 = vld [vmem:[%s827] sm:$0x1]
        loop: start=0, step=1, limit=2
        $region74: #{_lambda_.5} parent=68 // loop_pre_header
          _
        $region75: #{_lambda_.5} parent=68 // loop_header
          %s831 = sphi 0, %s835
          %p832 = scmp.ge.s32.totalorder %s831, 2
        $region76: #{_lambda_.5} parent=68 // loop_header_branch
          %834 = sbr.rel (%p832) target = $region80
        $region77: #{_lambda_.5} parent=68 // loop_body
          %s836 = smul.u32 %s831, 4
          %s837 = smul.addr %s836, 2
          %s838 = scalar_lea.vmem %s824, %s837
          %v839 = vld [vmem:[%s838] sm:$0x1]
          %v840 = vld [vmem:[%s792] sm:$0xf]
          %v841 = vld [vmem:[%s792 + $0x4] sm:$0xf]
          %v842 = vld [vmem:[%s792 + $0x8] sm:$0xf]
          %v843 = vld [vmem:[%s792 + $0xc] sm:$0xf]
          %v844 = vld [vmem:[%s792 + $0x10] sm:$0xf]
          %v845 = vld [vmem:[%s792 + $0x14] sm:$0xf]
          %v846 = vld [vmem:[%s792 + $0x18] sm:$0xf]
          %v847 = vld [vmem:[%s792 + $0x1c] sm:$0xf]
          %v848 = vld [vmem:[%s792 + $0x20] sm:$0xf]
          %v849 = vld [vmem:[%s792 + $0x24] sm:$0xf]
          %v850 = vld [vmem:[%s792 + $0x28] sm:$0xf]
          %v851 = vld [vmem:[%s792 + $0x2c] sm:$0xf]
          %v852 = vld [vmem:[%s792 + $0x30] sm:$0xf]
          %v853 = vld [vmem:[%s792 + $0x34] sm:$0xf]
          %v854 = vld [vmem:[%s792 + $0x38] sm:$0xf]
          %v855 = vld [vmem:[%s792 + $0x3c] sm:$0xf]
          %s856 = sadd.s32 1, %s836
          %s857 = smul.addr %s856, 2
          %s858 = scalar_lea.vmem %s824, %s857
          %v859 = vld [vmem:[%s858] sm:$0x1]
          %s860 = scalar_lea.vmem %s792, 64 [#allocation2]
          %v861 = vld [vmem:[%s860] sm:$0xf]
          %v862 = vld [vmem:[%s860 + $0x4] sm:$0xf]
          %v863 = vld [vmem:[%s860 + $0x8] sm:$0xf]
          %v864 = vld [vmem:[%s860 + $0xc] sm:$0xf]
          %v865 = vld [vmem:[%s860 + $0x10] sm:$0xf]
          %v866 = vld [vmem:[%s860 + $0x14] sm:$0xf]
          %v867 = vld [vmem:[%s860 + $0x18] sm:$0xf]
          %v868 = vld [vmem:[%s860 + $0x1c] sm:$0xf]
          %v869 = vld [vmem:[%s860 + $0x20] sm:$0xf]
          %v870 = vld [vmem:[%s860 + $0x24] sm:$0xf]
          %v871 = vld [vmem:[%s860 + $0x28] sm:$0xf]
          %v872 = vld [vmem:[%s860 + $0x2c] sm:$0xf]
          %v873 = vld [vmem:[%s860 + $0x30] sm:$0xf]
          %v874 = vld [vmem:[%s860 + $0x34] sm:$0xf]
          %v875 = vld [vmem:[%s860 + $0x38] sm:$0xf]
          %v876 = vld [vmem:[%s860 + $0x3c] sm:$0xf]
          %v893 = vunpack.c.l.b16 %v861
          %v894 = vunpack.c.l.b16 %v862
          %v895 = vunpack.c.l.b16 %v863
          %v896 = vunpack.c.l.b16 %v864
          %v897 = vunpack.c.l.b16 %v865
          %v898 = vunpack.c.l.b16 %v866
          %v899 = vunpack.c.l.b16 %v867
          %v900 = vunpack.c.l.b16 %v868
          %v901 = vunpack.c.l.b16 %v869
          %v902 = vunpack.c.l.b16 %v870
          %v903 = vunpack.c.l.b16 %v871
          %v904 = vunpack.c.l.b16 %v872
          %v905 = vunpack.c.l.b16 %v873
          %v906 = vunpack.c.l.b16 %v874
          %v907 = vunpack.c.l.b16 %v875
          %v908 = vunpack.c.l.b16 %v876
          %v909 = vpack.c.b16 %v894, %v893
          %v910 = vpack.c.b16 %v896, %v895
          %v911 = vpack.c.b16 %v898, %v897
          %v912 = vpack.c.b16 %v900, %v899
          %v913 = vpack.c.b16 %v902, %v901
          %v914 = vpack.c.b16 %v904, %v903
          %v915 = vpack.c.b16 %v906, %v905
          %v916 = vpack.c.b16 %v908, %v907
          %925 = vmatprep.subr.bf16.mxu0 0
          %926 = vmatpush1.bf16.msra.mxu0 %v916
          %927 = vmatprep.subr.bf16.mxu0 0
          %928 = vmatpush1.bf16.msra.mxu0 %v915
          %929 = vmatprep.subr.bf16.mxu0 0
          %930 = vmatpush1.bf16.msra.mxu0 %v914
          %931 = vmatprep.subr.bf16.mxu0 0
          %932 = vmatpush1.bf16.msra.mxu0 %v913
          %933 = vmatprep.subr.bf16.mxu0 0
          %934 = vmatpush1.bf16.msra.mxu0 %v912
          %935 = vmatprep.subr.bf16.mxu0 0
          %936 = vmatpush1.bf16.msra.mxu0 %v911
          %937 = vmatprep.subr.bf16.mxu0 0
          %938 = vmatpush1.bf16.msra.mxu0 %v910
          %939 = vmatprep.subr.bf16.mxu0 0
          %940 = vmatpush1.bf16.msra.mxu0 %v909
          %941 = vmatprep.subr.bf16.mxu0 0
          %942 = vmatpush2.bf16.msra.mxu0 0
          %943 = vmatprep.subr.bf16.mxu0 0
          %944 = vmatpush2.bf16.msra.mxu0 0
          %945 = vmatprep.subr.bf16.mxu0 0
          %946 = vmatpush2.bf16.msra.mxu0 0
          %947 = vmatprep.subr.bf16.mxu0 0
          %948 = vmatpush2.bf16.msra.mxu0 0
          %949 = vmatprep.subr.bf16.mxu0 0
          %950 = vmatpush2.bf16.msra.mxu0 0
          %951 = vmatprep.subr.bf16.mxu0 0
          %952 = vmatpush2.bf16.msra.mxu0 0
          %953 = vmatprep.subr.bf16.mxu0 0
          %954 = vmatpush2.bf16.msra.mxu0 0
          %955 = vmatprep.subr.bf16.mxu0 0
          %956 = vmatpush2.bf16.msra.mxu0 0
          %957 = vmatprep.mubr.bf16.mxu0 0
          %958 = vmatmul.mubr.bf16.gmra.mxu0 %v859
          %v959 = vpop.f32.mrf.mxu0
          %v960 = vadd.f32 0.0, %v959
          %v961 = vpop.f32.mrf.mxu0
          %v962 = vpop.f32.mrf.mxu0
          %v963 = vpop.f32.mrf.mxu0
          %964 = vdwg.mxu0
          %v981 = vunpack.c.l.b16 %v840
          %v982 = vunpack.c.l.b16 %v841
          %v983 = vunpack.c.l.b16 %v842
          %v984 = vunpack.c.l.b16 %v843
          %v985 = vunpack.c.l.b16 %v844
          %v986 = vunpack.c.l.b16 %v845
          %v987 = vunpack.c.l.b16 %v846
          %v988 = vunpack.c.l.b16 %v847
          %v989 = vunpack.c.l.b16 %v848
          %v990 = vunpack.c.l.b16 %v849
          %v991 = vunpack.c.l.b16 %v850
          %v992 = vunpack.c.l.b16 %v851
          %v993 = vunpack.c.l.b16 %v852
          %v994 = vunpack.c.l.b16 %v853
          %v995 = vunpack.c.l.b16 %v854
          %v996 = vunpack.c.l.b16 %v855
          %v997 = vpack.c.b16 %v982, %v981
          %v998 = vpack.c.b16 %v984, %v983
          %v999 = vpack.c.b16 %v986, %v985
          %v1000 = vpack.c.b16 %v988, %v987
          %v1001 = vpack.c.b16 %v990, %v989
          %v1002 = vpack.c.b16 %v992, %v991
          %v1003 = vpack.c.b16 %v994, %v993
          %v1004 = vpack.c.b16 %v996, %v995
          %1013 = vmatprep.subr.bf16.mxu0 0
          %1014 = vmatpush1.bf16.msra.mxu0 %v1004
          %1015 = vmatprep.subr.bf16.mxu0 0
          %1016 = vmatpush1.bf16.msra.mxu0 %v1003
          %1017 = vmatprep.subr.bf16.mxu0 0
          %1018 = vmatpush1.bf16.msra.mxu0 %v1002
          %1019 = vmatprep.subr.bf16.mxu0 0
          %1020 = vmatpush1.bf16.msra.mxu0 %v1001
          %1021 = vmatprep.subr.bf16.mxu0 0
          %1022 = vmatpush1.bf16.msra.mxu0 %v1000
          %1023 = vmatprep.subr.bf16.mxu0 0
          %1024 = vmatpush1.bf16.msra.mxu0 %v999
          %1025 = vmatprep.subr.bf16.mxu0 0
          %1026 = vmatpush1.bf16.msra.mxu0 %v998
          %1027 = vmatprep.subr.bf16.mxu0 0
          %1028 = vmatpush1.bf16.msra.mxu0 %v997
          %1029 = vmatprep.subr.bf16.mxu0 0
          %1030 = vmatpush2.bf16.msra.mxu0 0
          %1031 = vmatprep.subr.bf16.mxu0 0
          %1032 = vmatpush2.bf16.msra.mxu0 0
          %1033 = vmatprep.subr.bf16.mxu0 0
          %1034 = vmatpush2.bf16.msra.mxu0 0
          %1035 = vmatprep.subr.bf16.mxu0 0
          %1036 = vmatpush2.bf16.msra.mxu0 0
          %1037 = vmatprep.subr.bf16.mxu0 0
          %1038 = vmatpush2.bf16.msra.mxu0 0
          %1039 = vmatprep.subr.bf16.mxu0 0
          %1040 = vmatpush2.bf16.msra.mxu0 0
          %1041 = vmatprep.subr.bf16.mxu0 0
          %1042 = vmatpush2.bf16.msra.mxu0 0
          %1043 = vmatprep.subr.bf16.mxu0 0
          %1044 = vmatpush2.bf16.msra.mxu0 0
          %1045 = vmatprep.mubr.bf16.mxu0 0
          %1046 = vmatmul.mubr.bf16.gmra.mxu0 %v839
          %v1047 = vpop.f32.mrf.mxu0
          %v1048 = vadd.f32 %v960, %v1047
          %v1049 = vpop.f32.mrf.mxu0
          %v1050 = vpop.f32.mrf.mxu0
          %v1051 = vpop.f32.mrf.mxu0
          %1052 = vdwg.mxu0
          %v1053 = vld [vmem:[%s838] sm:$0x3]
          %s1054 = scalar_lea.vmem %s792, 128 [#allocation2]
          %v1055 = vld [vmem:[%s1054] sm:$0xf]
          %v1056 = vld [vmem:[%s1054 + $0x4] sm:$0xf]
          %v1057 = vld [vmem:[%s1054 + $0x8] sm:$0xf]
          %v1058 = vld [vmem:[%s1054 + $0xc] sm:$0xf]
          %v1059 = vld [vmem:[%s1054 + $0x10] sm:$0xf]
          %v1060 = vld [vmem:[%s1054 + $0x14] sm:$0xf]
          %v1061 = vld [vmem:[%s1054 + $0x18] sm:$0xf]
          %v1062 = vld [vmem:[%s1054 + $0x1c] sm:$0xf]
          %v1063 = vld [vmem:[%s1054 + $0x20] sm:$0xf]
          %v1064 = vld [vmem:[%s1054 + $0x24] sm:$0xf]
          %v1065 = vld [vmem:[%s1054 + $0x28] sm:$0xf]
          %v1066 = vld [vmem:[%s1054 + $0x2c] sm:$0xf]
          %v1067 = vld [vmem:[%s1054 + $0x30] sm:$0xf]
          %v1068 = vld [vmem:[%s1054 + $0x34] sm:$0xf]
          %v1069 = vld [vmem:[%s1054 + $0x38] sm:$0xf]
          %v1070 = vld [vmem:[%s1054 + $0x3c] sm:$0xf]
          %v1073 = vunpack.c.l.s4 1983009808
          %v1074 = vunpack.c.0.s8 %v1073
          %v1075 = vlaneseq
          %v1076 = vshrl.u32 %v1075, 7
          %v1077 = vsub.s32 %v1074, %v1076
          %v1078 = vrot.slane %v1053, %v1077
          %v1080 = vshrl.u32 %v1078, 16
          %v1082 = vshll.u32 %v1078, 16
          %v1084 = vrot.slane %v1082, 1
          %v1085 = vor.u32 %v1080, %v1084
          %v1103 = vunpack.c.l.b16 %v1055
          %v1104 = vunpack.c.l.b16 %v1056
          %v1105 = vunpack.c.l.b16 %v1057
          %v1106 = vunpack.c.l.b16 %v1058
          %v1107 = vunpack.c.l.b16 %v1059
          %v1108 = vunpack.c.l.b16 %v1060
          %v1109 = vunpack.c.l.b16 %v1061
          %v1110 = vunpack.c.l.b16 %v1062
          %v1111 = vunpack.c.l.b16 %v1063
          %v1112 = vunpack.c.l.b16 %v1064
          %v1113 = vunpack.c.l.b16 %v1065
          %v1114 = vunpack.c.l.b16 %v1066
          %v1115 = vunpack.c.l.b16 %v1067
          %v1116 = vunpack.c.l.b16 %v1068
          %v1117 = vunpack.c.l.b16 %v1069
          %v1118 = vunpack.c.l.b16 %v1070
          %v1119 = vpack.c.b16 %v1104, %v1103
          %v1120 = vpack.c.b16 %v1106, %v1105
          %v1121 = vpack.c.b16 %v1108, %v1107
          %v1122 = vpack.c.b16 %v1110, %v1109
          %v1123 = vpack.c.b16 %v1112, %v1111
          %v1124 = vpack.c.b16 %v1114, %v1113
          %v1125 = vpack.c.b16 %v1116, %v1115
          %v1126 = vpack.c.b16 %v1118, %v1117
          %1135 = vmatprep.subr.bf16.mxu0 0
          %1136 = vmatpush1.bf16.msra.mxu0 %v1126
          %1137 = vmatprep.subr.bf16.mxu0 0
          %1138 = vmatpush1.bf16.msra.mxu0 %v1125
          %1139 = vmatprep.subr.bf16.mxu0 0
          %1140 = vmatpush1.bf16.msra.mxu0 %v1124
          %1141 = vmatprep.subr.bf16.mxu0 0
          %1142 = vmatpush1.bf16.msra.mxu0 %v1123
          %1143 = vmatprep.subr.bf16.mxu0 0
          %1144 = vmatpush1.bf16.msra.mxu0 %v1122
          %1145 = vmatprep.subr.bf16.mxu0 0
          %1146 = vmatpush1.bf16.msra.mxu0 %v1121
          %1147 = vmatprep.subr.bf16.mxu0 0
          %1148 = vmatpush1.bf16.msra.mxu0 %v1120
          %1149 = vmatprep.subr.bf16.mxu0 0
          %1150 = vmatpush1.bf16.msra.mxu0 %v1119
          %1151 = vmatprep.subr.bf16.mxu0 0
          %1152 = vmatpush2.bf16.msra.mxu0 0
          %1153 = vmatprep.subr.bf16.mxu0 0
          %1154 = vmatpush2.bf16.msra.mxu0 0
          %1155 = vmatprep.subr.bf16.mxu0 0
          %1156 = vmatpush2.bf16.msra.mxu0 0
          %1157 = vmatprep.subr.bf16.mxu0 0
          %1158 = vmatpush2.bf16.msra.mxu0 0
          %1159 = vmatprep.subr.bf16.mxu0 0
          %1160 = vmatpush2.bf16.msra.mxu0 0
          %1161 = vmatprep.subr.bf16.mxu0 0
          %1162 = vmatpush2.bf16.msra.mxu0 0
          %1163 = vmatprep.subr.bf16.mxu0 0
          %1164 = vmatpush2.bf16.msra.mxu0 0
          %1165 = vmatprep.subr.bf16.mxu0 0
          %1166 = vmatpush2.bf16.msra.mxu0 0
          %1167 = vmatprep.mubr.bf16.mxu0 0
          %1168 = vmatmul.mubr.bf16.gmra.mxu0 %v1085
          %v1169 = vpop.f32.mrf.mxu0
          %v1170 = vadd.f32 0.0, %v1169
          %v1171 = vpop.f32.mrf.mxu0
          %v1172 = vpop.f32.mrf.mxu0
          %v1173 = vpop.f32.mrf.mxu0
          %1174 = vdwg.mxu0
          %v1175 = vadd.f32 %v1048, %v1170
          %s1176 = sadd.s32 2, %s836
          %s1177 = smul.addr %s1176, 2
          %s1178 = scalar_lea.vmem %s824, %s1177
          %v1179 = vld [vmem:[%s1178] sm:$0x1]
          %s1180 = scalar_lea.vmem %s792, 192 [#allocation2]
          %v1181 = vld [vmem:[%s1180] sm:$0xf]
          %v1182 = vld [vmem:[%s1180 + $0x4] sm:$0xf]
          %v1183 = vld [vmem:[%s1180 + $0x8] sm:$0xf]
          %v1184 = vld [vmem:[%s1180 + $0xc] sm:$0xf]
          %v1185 = vld [vmem:[%s1180 + $0x10] sm:$0xf]
          %v1186 = vld [vmem:[%s1180 + $0x14] sm:$0xf]
          %v1187 = vld [vmem:[%s1180 + $0x18] sm:$0xf]
          %v1188 = vld [vmem:[%s1180 + $0x1c] sm:$0xf]
          %v1189 = vld [vmem:[%s1180 + $0x20] sm:$0xf]
          %v1190 = vld [vmem:[%s1180 + $0x24] sm:$0xf]
          %v1191 = vld [vmem:[%s1180 + $0x28] sm:$0xf]
          %v1192 = vld [vmem:[%s1180 + $0x2c] sm:$0xf]
          %v1193 = vld [vmem:[%s1180 + $0x30] sm:$0xf]
          %v1194 = vld [vmem:[%s1180 + $0x34] sm:$0xf]
          %v1195 = vld [vmem:[%s1180 + $0x38] sm:$0xf]
          %v1196 = vld [vmem:[%s1180 + $0x3c] sm:$0xf]
          %v1213 = vunpack.c.l.b16 %v1181
          %v1214 = vunpack.c.l.b16 %v1182
          %v1215 = vunpack.c.l.b16 %v1183
          %v1216 = vunpack.c.l.b16 %v1184
          %v1217 = vunpack.c.l.b16 %v1185
          %v1218 = vunpack.c.l.b16 %v1186
          %v1219 = vunpack.c.l.b16 %v1187
          %v1220 = vunpack.c.l.b16 %v1188
          %v1221 = vunpack.c.l.b16 %v1189
          %v1222 = vunpack.c.l.b16 %v1190
          %v1223 = vunpack.c.l.b16 %v1191
          %v1224 = vunpack.c.l.b16 %v1192
          %v1225 = vunpack.c.l.b16 %v1193
          %v1226 = vunpack.c.l.b16 %v1194
          %v1227 = vunpack.c.l.b16 %v1195
          %v1228 = vunpack.c.l.b16 %v1196
          %v1229 = vpack.c.b16 %v1214, %v1213
          %v1230 = vpack.c.b16 %v1216, %v1215
          %v1231 = vpack.c.b16 %v1218, %v1217
          %v1232 = vpack.c.b16 %v1220, %v1219
          %v1233 = vpack.c.b16 %v1222, %v1221
          %v1234 = vpack.c.b16 %v1224, %v1223
          %v1235 = vpack.c.b16 %v1226, %v1225
          %v1236 = vpack.c.b16 %v1228, %v1227
          %1245 = vmatprep.subr.bf16.mxu0 0
          %1246 = vmatpush1.bf16.msra.mxu0 %v1236
          %1247 = vmatprep.subr.bf16.mxu0 0
          %1248 = vmatpush1.bf16.msra.mxu0 %v1235
          %1249 = vmatprep.subr.bf16.mxu0 0
          %1250 = vmatpush1.bf16.msra.mxu0 %v1234
          %1251 = vmatprep.subr.bf16.mxu0 0
          %1252 = vmatpush1.bf16.msra.mxu0 %v1233
          %1253 = vmatprep.subr.bf16.mxu0 0
          %1254 = vmatpush1.bf16.msra.mxu0 %v1232
          %1255 = vmatprep.subr.bf16.mxu0 0
          %1256 = vmatpush1.bf16.msra.mxu0 %v1231
          %1257 = vmatprep.subr.bf16.mxu0 0
          %1258 = vmatpush1.bf16.msra.mxu0 %v1230
          %1259 = vmatprep.subr.bf16.mxu0 0
          %1260 = vmatpush1.bf16.msra.mxu0 %v1229
          %1261 = vmatprep.subr.bf16.mxu0 0
          %1262 = vmatpush2.bf16.msra.mxu0 0
          %1263 = vmatprep.subr.bf16.mxu0 0
          %1264 = vmatpush2.bf16.msra.mxu0 0
          %1265 = vmatprep.subr.bf16.mxu0 0
          %1266 = vmatpush2.bf16.msra.mxu0 0
          %1267 = vmatprep.subr.bf16.mxu0 0
          %1268 = vmatpush2.bf16.msra.mxu0 0
          %1269 = vmatprep.subr.bf16.mxu0 0
          %1270 = vmatpush2.bf16.msra.mxu0 0
          %1271 = vmatprep.subr.bf16.mxu0 0
          %1272 = vmatpush2.bf16.msra.mxu0 0
          %1273 = vmatprep.subr.bf16.mxu0 0
          %1274 = vmatpush2.bf16.msra.mxu0 0
          %1275 = vmatprep.subr.bf16.mxu0 0
          %1276 = vmatpush2.bf16.msra.mxu0 0
          %1277 = vmatprep.mubr.bf16.mxu0 0
          %1278 = vmatmul.mubr.bf16.gmra.mxu0 %v1179
          %v1279 = vpop.f32.mrf.mxu0
          %v1280 = vadd.f32 0.0, %v1279
          %v1281 = vpop.f32.mrf.mxu0
          %v1282 = vpop.f32.mrf.mxu0
          %v1283 = vpop.f32.mrf.mxu0
          %1284 = vdwg.mxu0
          %v1285 = vadd.f32 %v1175, %v1280
          %s1286 = sadd.s32 3, %s836
          %s1287 = smul.addr %s1286, 2
          %s1288 = scalar_lea.vmem %s824, %s1287
          %v1289 = vld [vmem:[%s1288] sm:$0x1]
          %s1290 = scalar_lea.vmem %s792, 256 [#allocation2]
          %v1291 = vld [vmem:[%s1290] sm:$0xf]
          %v1292 = vld [vmem:[%s1290 + $0x4] sm:$0xf]
          %v1293 = vld [vmem:[%s1290 + $0x8] sm:$0xf]
          %v1294 = vld [vmem:[%s1290 + $0xc] sm:$0xf]
          %v1295 = vld [vmem:[%s1290 + $0x10] sm:$0xf]
          %v1296 = vld [vmem:[%s1290 + $0x14] sm:$0xf]
          %v1297 = vld [vmem:[%s1290 + $0x18] sm:$0xf]
          %v1298 = vld [vmem:[%s1290 + $0x1c] sm:$0xf]
          %v1299 = vld [vmem:[%s1290 + $0x20] sm:$0xf]
          %v1300 = vld [vmem:[%s1290 + $0x24] sm:$0xf]
          %v1301 = vld [vmem:[%s1290 + $0x28] sm:$0xf]
          %v1302 = vld [vmem:[%s1290 + $0x2c] sm:$0xf]
          %v1303 = vld [vmem:[%s1290 + $0x30] sm:$0xf]
          %v1304 = vld [vmem:[%s1290 + $0x34] sm:$0xf]
          %v1305 = vld [vmem:[%s1290 + $0x38] sm:$0xf]
          %v1306 = vld [vmem:[%s1290 + $0x3c] sm:$0xf]
          %v1323 = vunpack.c.l.b16 %v1291
          %v1324 = vunpack.c.l.b16 %v1292
          %v1325 = vunpack.c.l.b16 %v1293
          %v1326 = vunpack.c.l.b16 %v1294
          %v1327 = vunpack.c.l.b16 %v1295
          %v1328 = vunpack.c.l.b16 %v1296
          %v1329 = vunpack.c.l.b16 %v1297
          %v1330 = vunpack.c.l.b16 %v1298
          %v1331 = vunpack.c.l.b16 %v1299
          %v1332 = vunpack.c.l.b16 %v1300
          %v1333 = vunpack.c.l.b16 %v1301
          %v1334 = vunpack.c.l.b16 %v1302
          %v1335 = vunpack.c.l.b16 %v1303
          %v1336 = vunpack.c.l.b16 %v1304
          %v1337 = vunpack.c.l.b16 %v1305
          %v1338 = vunpack.c.l.b16 %v1306
          %v1339 = vpack.c.b16 %v1324, %v1323
          %v1340 = vpack.c.b16 %v1326, %v1325
          %v1341 = vpack.c.b16 %v1328, %v1327
          %v1342 = vpack.c.b16 %v1330, %v1329
          %v1343 = vpack.c.b16 %v1332, %v1331
          %v1344 = vpack.c.b16 %v1334, %v1333
          %v1345 = vpack.c.b16 %v1336, %v1335
          %v1346 = vpack.c.b16 %v1338, %v1337
          %1355 = vmatprep.subr.bf16.mxu0 0
          %1356 = vmatpush1.bf16.msra.mxu0 %v1346
          %1357 = vmatprep.subr.bf16.mxu0 0
          %1358 = vmatpush1.bf16.msra.mxu0 %v1345
          %1359 = vmatprep.subr.bf16.mxu0 0
          %1360 = vmatpush1.bf16.msra.mxu0 %v1344
          %1361 = vmatprep.subr.bf16.mxu0 0
          %1362 = vmatpush1.bf16.msra.mxu0 %v1343
          %1363 = vmatprep.subr.bf16.mxu0 0
          %1364 = vmatpush1.bf16.msra.mxu0 %v1342
          %1365 = vmatprep.subr.bf16.mxu0 0
          %1366 = vmatpush1.bf16.msra.mxu0 %v1341
          %1367 = vmatprep.subr.bf16.mxu0 0
          %1368 = vmatpush1.bf16.msra.mxu0 %v1340
          %1369 = vmatprep.subr.bf16.mxu0 0
          %1370 = vmatpush1.bf16.msra.mxu0 %v1339
          %1371 = vmatprep.subr.bf16.mxu0 0
          %1372 = vmatpush2.bf16.msra.mxu0 0
          %1373 = vmatprep.subr.bf16.mxu0 0
          %1374 = vmatpush2.bf16.msra.mxu0 0
          %1375 = vmatprep.subr.bf16.mxu0 0
          %1376 = vmatpush2.bf16.msra.mxu0 0
          %1377 = vmatprep.subr.bf16.mxu0 0
          %1378 = vmatpush2.bf16.msra.mxu0 0
          %1379 = vmatprep.subr.bf16.mxu0 0
          %1380 = vmatpush2.bf16.msra.mxu0 0
          %1381 = vmatprep.subr.bf16.mxu0 0
          %1382 = vmatpush2.bf16.msra.mxu0 0
          %1383 = vmatprep.subr.bf16.mxu0 0
          %1384 = vmatpush2.bf16.msra.mxu0 0
          %1385 = vmatprep.subr.bf16.mxu0 0
          %1386 = vmatpush2.bf16.msra.mxu0 0
          %1387 = vmatprep.mubr.bf16.mxu0 0
          %1388 = vmatmul.mubr.bf16.gmra.mxu0 %v1289
          %v1389 = vpop.f32.mrf.mxu0
          %v1390 = vadd.f32 0.0, %v1389
          %v1391 = vpop.f32.mrf.mxu0
          %v1392 = vpop.f32.mrf.mxu0
          %v1393 = vpop.f32.mrf.mxu0
          %1394 = vdwg.mxu0
          %v1395 = vadd.f32 %v1285, %v1390
          %v1396 = vld [vmem:[%s1178] sm:$0x3]
          %s1397 = scalar_lea.vmem %s792, 320 [#allocation2]
          %v1398 = vld [vmem:[%s1397] sm:$0xf]
          %v1399 = vld [vmem:[%s1397 + $0x4] sm:$0xf]
          %v1400 = vld [vmem:[%s1397 + $0x8] sm:$0xf]
          %v1401 = vld [vmem:[%s1397 + $0xc] sm:$0xf]
          %v1402 = vld [vmem:[%s1397 + $0x10] sm:$0xf]
          %v1403 = vld [vmem:[%s1397 + $0x14] sm:$0xf]
          %v1404 = vld [vmem:[%s1397 + $0x18] sm:$0xf]
          %v1405 = vld [vmem:[%s1397 + $0x1c] sm:$0xf]
          %v1406 = vld [vmem:[%s1397 + $0x20] sm:$0xf]
          %v1407 = vld [vmem:[%s1397 + $0x24] sm:$0xf]
          %v1408 = vld [vmem:[%s1397 + $0x28] sm:$0xf]
          %v1409 = vld [vmem:[%s1397 + $0x2c] sm:$0xf]
          %v1410 = vld [vmem:[%s1397 + $0x30] sm:$0xf]
          %v1411 = vld [vmem:[%s1397 + $0x34] sm:$0xf]
          %v1412 = vld [vmem:[%s1397 + $0x38] sm:$0xf]
          %v1413 = vld [vmem:[%s1397 + $0x3c] sm:$0xf]
          %v1416 = vunpack.c.l.s4 1983009808
          %v1417 = vunpack.c.0.s8 %v1416
          %v1418 = vlaneseq
          %v1419 = vshrl.u32 %v1418, 7
          %v1420 = vsub.s32 %v1417, %v1419
          %v1421 = vrot.slane %v1396, %v1420
          %v1423 = vshrl.u32 %v1421, 16
          %v1425 = vshll.u32 %v1421, 16
          %v1427 = vrot.slane %v1425, 1
          %v1428 = vor.u32 %v1423, %v1427
          %v1446 = vunpack.c.l.b16 %v1398
          %v1447 = vunpack.c.l.b16 %v1399
          %v1448 = vunpack.c.l.b16 %v1400
          %v1449 = vunpack.c.l.b16 %v1401
          %v1450 = vunpack.c.l.b16 %v1402
          %v1451 = vunpack.c.l.b16 %v1403
          %v1452 = vunpack.c.l.b16 %v1404
          %v1453 = vunpack.c.l.b16 %v1405
          %v1454 = vunpack.c.l.b16 %v1406
          %v1455 = vunpack.c.l.b16 %v1407
          %v1456 = vunpack.c.l.b16 %v1408
          %v1457 = vunpack.c.l.b16 %v1409
          %v1458 = vunpack.c.l.b16 %v1410
          %v1459 = vunpack.c.l.b16 %v1411
          %v1460 = vunpack.c.l.b16 %v1412
          %v1461 = vunpack.c.l.b16 %v1413
          %v1462 = vpack.c.b16 %v1447, %v1446
          %v1463 = vpack.c.b16 %v1449, %v1448
          %v1464 = vpack.c.b16 %v1451, %v1450
          %v1465 = vpack.c.b16 %v1453, %v1452
          %v1466 = vpack.c.b16 %v1455, %v1454
          %v1467 = vpack.c.b16 %v1457, %v1456
          %v1468 = vpack.c.b16 %v1459, %v1458
          %v1469 = vpack.c.b16 %v1461, %v1460
          %1478 = vmatprep.subr.bf16.mxu0 0
          %1479 = vmatpush1.bf16.msra.mxu0 %v1469
          %1480 = vmatprep.subr.bf16.mxu0 0
          %1481 = vmatpush1.bf16.msra.mxu0 %v1468
          %1482 = vmatprep.subr.bf16.mxu0 0
          %1483 = vmatpush1.bf16.msra.mxu0 %v1467
          %1484 = vmatprep.subr.bf16.mxu0 0
          %1485 = vmatpush1.bf16.msra.mxu0 %v1466
          %1486 = vmatprep.subr.bf16.mxu0 0
          %1487 = vmatpush1.bf16.msra.mxu0 %v1465
          %1488 = vmatprep.subr.bf16.mxu0 0
          %1489 = vmatpush1.bf16.msra.mxu0 %v1464
          %1490 = vmatprep.subr.bf16.mxu0 0
          %1491 = vmatpush1.bf16.msra.mxu0 %v1463
          %1492 = vmatprep.subr.bf16.mxu0 0
          %1493 = vmatpush1.bf16.msra.mxu0 %v1462
          %1494 = vmatprep.subr.bf16.mxu0 0
          %1495 = vmatpush2.bf16.msra.mxu0 0
          %1496 = vmatprep.subr.bf16.mxu0 0
          %1497 = vmatpush2.bf16.msra.mxu0 0
          %1498 = vmatprep.subr.bf16.mxu0 0
          %1499 = vmatpush2.bf16.msra.mxu0 0
          %1500 = vmatprep.subr.bf16.mxu0 0
          %1501 = vmatpush2.bf16.msra.mxu0 0
          %1502 = vmatprep.subr.bf16.mxu0 0
          %1503 = vmatpush2.bf16.msra.mxu0 0
          %1504 = vmatprep.subr.bf16.mxu0 0
          %1505 = vmatpush2.bf16.msra.mxu0 0
          %1506 = vmatprep.subr.bf16.mxu0 0
          %1507 = vmatpush2.bf16.msra.mxu0 0
          %1508 = vmatprep.subr.bf16.mxu0 0
          %1509 = vmatpush2.bf16.msra.mxu0 0
          %1510 = vmatprep.mubr.bf16.mxu0 0
          %1511 = vmatmul.mubr.bf16.gmra.mxu0 %v1428
          %v1512 = vpop.f32.mrf.mxu0
          %v1513 = vadd.f32 0.0, %v1512
          %v1514 = vpop.f32.mrf.mxu0
          %v1515 = vpop.f32.mrf.mxu0
          %v1516 = vpop.f32.mrf.mxu0
          %1517 = vdwg.mxu0
          %v1518 = vadd.f32 %v1395, %v1513
          %s1519 = sadd.s32 %s831, 1
          %s1520 = smul.u32 %s1519, 4
          %s1521 = smul.addr %s1520, 2
          %s1522 = scalar_lea.vmem %s824, %s1521
          %v1523 = vld [vmem:[%s1522] sm:$0x1]
          %s1524 = scalar_lea.vmem %s792, 384 [#allocation2]
          %v1525 = vld [vmem:[%s1524] sm:$0xf]
          %v1526 = vld [vmem:[%s1524 + $0x4] sm:$0xf]
          %v1527 = vld [vmem:[%s1524 + $0x8] sm:$0xf]
          %v1528 = vld [vmem:[%s1524 + $0xc] sm:$0xf]
          %v1529 = vld [vmem:[%s1524 + $0x10] sm:$0xf]
          %v1530 = vld [vmem:[%s1524 + $0x14] sm:$0xf]
          %v1531 = vld [vmem:[%s1524 + $0x18] sm:$0xf]
          %v1532 = vld [vmem:[%s1524 + $0x1c] sm:$0xf]
          %v1533 = vld [vmem:[%s1524 + $0x20] sm:$0xf]
          %v1534 = vld [vmem:[%s1524 + $0x24] sm:$0xf]
          %v1535 = vld [vmem:[%s1524 + $0x28] sm:$0xf]
          %v1536 = vld [vmem:[%s1524 + $0x2c] sm:$0xf]
          %v1537 = vld [vmem:[%s1524 + $0x30] sm:$0xf]
          %v1538 = vld [vmem:[%s1524 + $0x34] sm:$0xf]
          %v1539 = vld [vmem:[%s1524 + $0x38] sm:$0xf]
          %v1540 = vld [vmem:[%s1524 + $0x3c] sm:$0xf]
          %v1557 = vunpack.c.l.b16 %v1525
          %v1558 = vunpack.c.l.b16 %v1526
          %v1559 = vunpack.c.l.b16 %v1527
          %v1560 = vunpack.c.l.b16 %v1528
          %v1561 = vunpack.c.l.b16 %v1529
          %v1562 = vunpack.c.l.b16 %v1530
          %v1563 = vunpack.c.l.b16 %v1531
          %v1564 = vunpack.c.l.b16 %v1532
          %v1565 = vunpack.c.l.b16 %v1533
          %v1566 = vunpack.c.l.b16 %v1534
          %v1567 = vunpack.c.l.b16 %v1535
          %v1568 = vunpack.c.l.b16 %v1536
          %v1569 = vunpack.c.l.b16 %v1537
          %v1570 = vunpack.c.l.b16 %v1538
          %v1571 = vunpack.c.l.b16 %v1539
          %v1572 = vunpack.c.l.b16 %v1540
          %v1573 = vpack.c.b16 %v1558, %v1557
          %v1574 = vpack.c.b16 %v1560, %v1559
          %v1575 = vpack.c.b16 %v1562, %v1561
          %v1576 = vpack.c.b16 %v1564, %v1563
          %v1577 = vpack.c.b16 %v1566, %v1565
          %v1578 = vpack.c.b16 %v1568, %v1567
          %v1579 = vpack.c.b16 %v1570, %v1569
          %v1580 = vpack.c.b16 %v1572, %v1571
          %1589 = vmatprep.subr.bf16.mxu0 0
          %1590 = vmatpush1.bf16.msra.mxu0 %v1580
          %1591 = vmatprep.subr.bf16.mxu0 0
          %1592 = vmatpush1.bf16.msra.mxu0 %v1579
          %1593 = vmatprep.subr.bf16.mxu0 0
          %1594 = vmatpush1.bf16.msra.mxu0 %v1578
          %1595 = vmatprep.subr.bf16.mxu0 0
          %1596 = vmatpush1.bf16.msra.mxu0 %v1577
          %1597 = vmatprep.subr.bf16.mxu0 0
          %1598 = vmatpush1.bf16.msra.mxu0 %v1576
          %1599 = vmatprep.subr.bf16.mxu0 0
          %1600 = vmatpush1.bf16.msra.mxu0 %v1575
          %1601 = vmatprep.subr.bf16.mxu0 0
          %1602 = vmatpush1.bf16.msra.mxu0 %v1574
          %1603 = vmatprep.subr.bf16.mxu0 0
          %1604 = vmatpush1.bf16.msra.mxu0 %v1573
          %1605 = vmatprep.subr.bf16.mxu0 0
          %1606 = vmatpush2.bf16.msra.mxu0 0
          %1607 = vmatprep.subr.bf16.mxu0 0
          %1608 = vmatpush2.bf16.msra.mxu0 0
          %1609 = vmatprep.subr.bf16.mxu0 0
          %1610 = vmatpush2.bf16.msra.mxu0 0
          %1611 = vmatprep.subr.bf16.mxu0 0
          %1612 = vmatpush2.bf16.msra.mxu0 0
          %1613 = vmatprep.subr.bf16.mxu0 0
          %1614 = vmatpush2.bf16.msra.mxu0 0
          %1615 = vmatprep.subr.bf16.mxu0 0
          %1616 = vmatpush2.bf16.msra.mxu0 0
          %1617 = vmatprep.subr.bf16.mxu0 0
          %1618 = vmatpush2.bf16.msra.mxu0 0
          %1619 = vmatprep.subr.bf16.mxu0 0
          %1620 = vmatpush2.bf16.msra.mxu0 0
          %1621 = vmatprep.mubr.bf16.mxu0 0
          %1622 = vmatmul.mubr.bf16.gmra.mxu0 %v1523
          %v1623 = vpop.f32.mrf.mxu0
          %v1624 = vadd.f32 0.0, %v1623
          %v1625 = vpop.f32.mrf.mxu0
          %v1626 = vpop.f32.mrf.mxu0
          %v1627 = vpop.f32.mrf.mxu0
          %1628 = vdwg.mxu0
          %v1629 = vadd.f32 %v1518, %v1624
          %s1630 = sadd.s32 1, %s1520
          %s1631 = smul.addr %s1630, 2
          %s1632 = scalar_lea.vmem %s824, %s1631
          %v1633 = vld [vmem:[%s1632] sm:$0x1]
          %s1634 = scalar_lea.vmem %s792, 448 [#allocation2]
          %v1635 = vld [vmem:[%s1634] sm:$0xf]
          %v1636 = vld [vmem:[%s1634 + $0x4] sm:$0xf]
          %v1637 = vld [vmem:[%s1634 + $0x8] sm:$0xf]
          %v1638 = vld [vmem:[%s1634 + $0xc] sm:$0xf]
          %v1639 = vld [vmem:[%s1634 + $0x10] sm:$0xf]
          %v1640 = vld [vmem:[%s1634 + $0x14] sm:$0xf]
          %v1641 = vld [vmem:[%s1634 + $0x18] sm:$0xf]
          %v1642 = vld [vmem:[%s1634 + $0x1c] sm:$0xf]
          %v1643 = vld [vmem:[%s1634 + $0x20] sm:$0xf]
          %v1644 = vld [vmem:[%s1634 + $0x24] sm:$0xf]
          %v1645 = vld [vmem:[%s1634 + $0x28] sm:$0xf]
          %v1646 = vld [vmem:[%s1634 + $0x2c] sm:$0xf]
          %v1647 = vld [vmem:[%s1634 + $0x30] sm:$0xf]
          %v1648 = vld [vmem:[%s1634 + $0x34] sm:$0xf]
          %v1649 = vld [vmem:[%s1634 + $0x38] sm:$0xf]
          %v1650 = vld [vmem:[%s1634 + $0x3c] sm:$0xf]
          %v1667 = vunpack.c.l.b16 %v1635
          %v1668 = vunpack.c.l.b16 %v1636
          %v1669 = vunpack.c.l.b16 %v1637
          %v1670 = vunpack.c.l.b16 %v1638
          %v1671 = vunpack.c.l.b16 %v1639
          %v1672 = vunpack.c.l.b16 %v1640
          %v1673 = vunpack.c.l.b16 %v1641
          %v1674 = vunpack.c.l.b16 %v1642
          %v1675 = vunpack.c.l.b16 %v1643
          %v1676 = vunpack.c.l.b16 %v1644
          %v1677 = vunpack.c.l.b16 %v1645
          %v1678 = vunpack.c.l.b16 %v1646
          %v1679 = vunpack.c.l.b16 %v1647
          %v1680 = vunpack.c.l.b16 %v1648
          %v1681 = vunpack.c.l.b16 %v1649
          %v1682 = vunpack.c.l.b16 %v1650
          %v1683 = vpack.c.b16 %v1668, %v1667
          %v1684 = vpack.c.b16 %v1670, %v1669
          %v1685 = vpack.c.b16 %v1672, %v1671
          %v1686 = vpack.c.b16 %v1674, %v1673
          %v1687 = vpack.c.b16 %v1676, %v1675
          %v1688 = vpack.c.b16 %v1678, %v1677
          %v1689 = vpack.c.b16 %v1680, %v1679
          %v1690 = vpack.c.b16 %v1682, %v1681
          %1699 = vmatprep.subr.bf16.mxu0 0
          %1700 = vmatpush1.bf16.msra.mxu0 %v1690
          %1701 = vmatprep.subr.bf16.mxu0 0
          %1702 = vmatpush1.bf16.msra.mxu0 %v1689
          %1703 = vmatprep.subr.bf16.mxu0 0
          %1704 = vmatpush1.bf16.msra.mxu0 %v1688
          %1705 = vmatprep.subr.bf16.mxu0 0
          %1706 = vmatpush1.bf16.msra.mxu0 %v1687
          %1707 = vmatprep.subr.bf16.mxu0 0
          %1708 = vmatpush1.bf16.msra.mxu0 %v1686
          %1709 = vmatprep.subr.bf16.mxu0 0
          %1710 = vmatpush1.bf16.msra.mxu0 %v1685
          %1711 = vmatprep.subr.bf16.mxu0 0
          %1712 = vmatpush1.bf16.msra.mxu0 %v1684
          %1713 = vmatprep.subr.bf16.mxu0 0
          %1714 = vmatpush1.bf16.msra.mxu0 %v1683
          %1715 = vmatprep.subr.bf16.mxu0 0
          %1716 = vmatpush2.bf16.msra.mxu0 0
          %1717 = vmatprep.subr.bf16.mxu0 0
          %1718 = vmatpush2.bf16.msra.mxu0 0
          %1719 = vmatprep.subr.bf16.mxu0 0
          %1720 = vmatpush2.bf16.msra.mxu0 0
          %1721 = vmatprep.subr.bf16.mxu0 0
          %1722 = vmatpush2.bf16.msra.mxu0 0
          %1723 = vmatprep.subr.bf16.mxu0 0
          %1724 = vmatpush2.bf16.msra.mxu0 0
          %1725 = vmatprep.subr.bf16.mxu0 0
          %1726 = vmatpush2.bf16.msra.mxu0 0
          %1727 = vmatprep.subr.bf16.mxu0 0
          %1728 = vmatpush2.bf16.msra.mxu0 0
          %1729 = vmatprep.subr.bf16.mxu0 0
          %1730 = vmatpush2.bf16.msra.mxu0 0
          %1731 = vmatprep.mubr.bf16.mxu0 0
          %1732 = vmatmul.mubr.bf16.gmra.mxu0 %v1633
          %v1733 = vpop.f32.mrf.mxu0
          %v1734 = vadd.f32 0.0, %v1733
          %v1735 = vpop.f32.mrf.mxu0
          %v1736 = vpop.f32.mrf.mxu0
          %v1737 = vpop.f32.mrf.mxu0
          %1738 = vdwg.mxu0
          %v1739 = vadd.f32 %v1629, %v1734
          %v1740 = vld [vmem:[%s1522] sm:$0x3]
          %s1741 = scalar_lea.vmem %s792, 512 [#allocation2]
          %v1742 = vld [vmem:[%s1741] sm:$0xf]
          %v1743 = vld [vmem:[%s1741 + $0x4] sm:$0xf]
          %v1744 = vld [vmem:[%s1741 + $0x8] sm:$0xf]
          %v1745 = vld [vmem:[%s1741 + $0xc] sm:$0xf]
          %v1746 = vld [vmem:[%s1741 + $0x10] sm:$0xf]
          %v1747 = vld [vmem:[%s1741 + $0x14] sm:$0xf]
          %v1748 = vld [vmem:[%s1741 + $0x18] sm:$0xf]
          %v1749 = vld [vmem:[%s1741 + $0x1c] sm:$0xf]
          %v1750 = vld [vmem:[%s1741 + $0x20] sm:$0xf]
          %v1751 = vld [vmem:[%s1741 + $0x24] sm:$0xf]
          %v1752 = vld [vmem:[%s1741 + $0x28] sm:$0xf]
          %v1753 = vld [vmem:[%s1741 + $0x2c] sm:$0xf]
          %v1754 = vld [vmem:[%s1741 + $0x30] sm:$0xf]
          %v1755 = vld [vmem:[%s1741 + $0x34] sm:$0xf]
          %v1756 = vld [vmem:[%s1741 + $0x38] sm:$0xf]
          %v1757 = vld [vmem:[%s1741 + $0x3c] sm:$0xf]
          %v1760 = vunpack.c.l.s4 1983009808
          %v1761 = vunpack.c.0.s8 %v1760
          %v1762 = vlaneseq
          %v1763 = vshrl.u32 %v1762, 7
          %v1764 = vsub.s32 %v1761, %v1763
          %v1765 = vrot.slane %v1740, %v1764
          %v1767 = vshrl.u32 %v1765, 16
          %v1769 = vshll.u32 %v1765, 16
          %v1771 = vrot.slane %v1769, 1
          %v1772 = vor.u32 %v1767, %v1771
          %v1790 = vunpack.c.l.b16 %v1742
          %v1791 = vunpack.c.l.b16 %v1743
          %v1792 = vunpack.c.l.b16 %v1744
          %v1793 = vunpack.c.l.b16 %v1745
          %v1794 = vunpack.c.l.b16 %v1746
          %v1795 = vunpack.c.l.b16 %v1747
          %v1796 = vunpack.c.l.b16 %v1748
          %v1797 = vunpack.c.l.b16 %v1749
          %v1798 = vunpack.c.l.b16 %v1750
          %v1799 = vunpack.c.l.b16 %v1751
          %v1800 = vunpack.c.l.b16 %v1752
          %v1801 = vunpack.c.l.b16 %v1753
          %v1802 = vunpack.c.l.b16 %v1754
          %v1803 = vunpack.c.l.b16 %v1755
          %v1804 = vunpack.c.l.b16 %v1756
          %v1805 = vunpack.c.l.b16 %v1757
          %v1806 = vpack.c.b16 %v1791, %v1790
          %v1807 = vpack.c.b16 %v1793, %v1792
          %v1808 = vpack.c.b16 %v1795, %v1794
          %v1809 = vpack.c.b16 %v1797, %v1796
          %v1810 = vpack.c.b16 %v1799, %v1798
          %v1811 = vpack.c.b16 %v1801, %v1800
          %v1812 = vpack.c.b16 %v1803, %v1802
          %v1813 = vpack.c.b16 %v1805, %v1804
          %1822 = vmatprep.subr.bf16.mxu0 0
          %1823 = vmatpush1.bf16.msra.mxu0 %v1813
          %1824 = vmatprep.subr.bf16.mxu0 0
          %1825 = vmatpush1.bf16.msra.mxu0 %v1812
          %1826 = vmatprep.subr.bf16.mxu0 0
          %1827 = vmatpush1.bf16.msra.mxu0 %v1811
          %1828 = vmatprep.subr.bf16.mxu0 0
          %1829 = vmatpush1.bf16.msra.mxu0 %v1810
          %1830 = vmatprep.subr.bf16.mxu0 0
          %1831 = vmatpush1.bf16.msra.mxu0 %v1809
          %1832 = vmatprep.subr.bf16.mxu0 0
          %1833 = vmatpush1.bf16.msra.mxu0 %v1808
          %1834 = vmatprep.subr.bf16.mxu0 0
          %1835 = vmatpush1.bf16.msra.mxu0 %v1807
          %1836 = vmatprep.subr.bf16.mxu0 0
          %1837 = vmatpush1.bf16.msra.mxu0 %v1806
          %1838 = vmatprep.subr.bf16.mxu0 0
          %1839 = vmatpush2.bf16.msra.mxu0 0
          %1840 = vmatprep.subr.bf16.mxu0 0
          %1841 = vmatpush2.bf16.msra.mxu0 0
          %1842 = vmatprep.subr.bf16.mxu0 0
          %1843 = vmatpush2.bf16.msra.mxu0 0
          %1844 = vmatprep.subr.bf16.mxu0 0
          %1845 = vmatpush2.bf16.msra.mxu0 0
          %1846 = vmatprep.subr.bf16.mxu0 0
          %1847 = vmatpush2.bf16.msra.mxu0 0
          %1848 = vmatprep.subr.bf16.mxu0 0
          %1849 = vmatpush2.bf16.msra.mxu0 0
          %1850 = vmatprep.subr.bf16.mxu0 0
          %1851 = vmatpush2.bf16.msra.mxu0 0
          %1852 = vmatprep.subr.bf16.mxu0 0
          %1853 = vmatpush2.bf16.msra.mxu0 0
          %1854 = vmatprep.mubr.bf16.mxu0 0
          %1855 = vmatmul.mubr.bf16.gmra.mxu0 %v1772
          %v1856 = vpop.f32.mrf.mxu0
          %v1857 = vadd.f32 0.0, %v1856
          %v1858 = vpop.f32.mrf.mxu0
          %v1859 = vpop.f32.mrf.mxu0
          %v1860 = vpop.f32.mrf.mxu0
          %1861 = vdwg.mxu0
          %v1862 = vadd.f32 %v1739, %v1857
          %v1864 = vlaneseq
          %v1865 = vshrl.u32 %v1864, 7
          %v1866 = vsub.s32 0, %v1865
          %v1867 = vrot.slane %v829, %v1866
          %v1869 = vadd.f32 %v1862, %v1867
          %v1870 = vmax.f32 %v1869, 0.0
          %v1871 = vpack.c.bf16 %v1870, %v1870
          %s1872 = scalar_lea.vmem %s819, %s831 [#allocation3]
          %1873 = vst [vmem:[%s1872] sm:$0x1] %v1871
        $region78: #{_lambda_.5} parent=68 // loop_footer
          %s835 = sadd.s32 1, %s831
        $region79: #{_lambda_.5} parent=68 // loop_footer_branch
          %830 = sbr.rel target = $region75
        $region80: #{_lambda_.5} parent=68 // loop_exit
          _
        %s1874 = sand.u32 %s114, 1
        %s1875 = sand.u32 %s114, 1
        %s1876 = smul.addr %s1875, 2
        %s1877 = scalar_lea.vmem [#allocation3], %s1876
        // Predicated region
        $region81: #{_lambda_.5} parent=68 // pred_check
          %p1878 = pneg %p124
        $region82: #{_lambda_.5} parent=68 // pred_check_branch
          %1880 = sbr.rel (%p1878) target = $region84
        $region83: #{_lambda_.5} parent=68 // pred_region
          %s1881 = smul.addr %s18, 4
          %s1882 = sadd.s32 %s19, %s1881
          %s1883 = scalar_lea.vmem %s3, %s1882
          // Predicated region
          $region85: #{_lambda_.5} parent=83 // pred_check
            _
          $region86: #{_lambda_.5} parent=83 // pred_check_branch
            %1885 = sbr.rel (0) target = $region88
          $region87: #{_lambda_.5} parent=83 // pred_region
            // Predicated region
            $region89: #{_lambda_.5} parent=87 // pred_check
              _
            $region90: #{_lambda_.5} parent=87 // pred_check_branch
              %1887 = sbr.rel target = $region92
            $region91: #{_lambda_.5} parent=87 // pred_region
              // Predicated region
              $region104: #{_lambda_.5} parent=91 // pred_check
                _
              $region105: #{_lambda_.5} parent=91 // pred_check_branch
                %1905 = sbr.rel (0) target = $region107
              $region106: #{_lambda_.5} parent=91 // pred_region
                %s1907 = ssub.s32 2, 1
                loop: start=0, step=1, limit=1
                $region108: #{_lambda_.5} parent=106 // loop_pre_header
                  _
                $region109: #{_lambda_.5} parent=106 // loop_header
                  %s1909 = sphi 0, %s1913
                  %p1910 = scmp.ge.s32.totalorder %s1909, 1
                  %s1914 = sphi %s1877, %s1877
                  %s1915 = sphi %s1883, %s1883
                $region110: #{_lambda_.5} parent=106 // loop_header_branch
                  %1912 = sbr.rel (%p1910) target = $region114
                $region111: #{_lambda_.5} parent=106 // loop_body
                  %v1916 = vld [vmem:[%s1914] sm:%s1907]
                  %1917 = vst [vmem:[%s1915] sm:%s1907] %v1916
                  %v1918 = vld [vmem:[%s1914 + $0x1] sm:%s1907]
                  %1919 = vst [vmem:[%s1915 + $0x2] sm:%s1907] %v1918
                $region112: #{_lambda_.5} parent=106 // loop_footer
                  %s1913 = sadd.s32 1, %s1909
                $region113: #{_lambda_.5} parent=106 // loop_footer_branch
                  %1908 = sbr.rel target = $region109
                $region114: #{_lambda_.5} parent=106 // loop_exit
                  _
              $region107: #{_lambda_.5} parent=91 // pred_fallthru
                _
            $region92: #{_lambda_.5} parent=87 // pred_fallthru
              _
            // Predicated region
            $region93: #{_lambda_.5} parent=87 // pred_check
              _
            $region94: #{_lambda_.5} parent=87 // pred_check_branch
              %1889 = sbr.rel (0) target = $region96
            $region95: #{_lambda_.5} parent=87 // pred_region
              %s1891 = ssub.s32 2, 1
              loop: start=0, step=1, limit=1
              $region97: #{_lambda_.5} parent=95 // loop_pre_header
                _
              $region98: #{_lambda_.5} parent=95 // loop_header
                %s1893 = sphi 0, %s1897
                %p1894 = scmp.ge.s32.totalorder %s1893, 1
                %s1898 = sphi %s1877, %s1877
                %s1899 = sphi %s1883, %s1883
              $region99: #{_lambda_.5} parent=95 // loop_header_branch
                %1896 = sbr.rel (%p1894) target = $region103
              $region100: #{_lambda_.5} parent=95 // loop_body
                %v1900 = vld [vmem:[%s1898] sm:%s1891]
                %1901 = vst [vmem:[%s1899] sm:%s1891] %v1900
                %v1902 = vld [vmem:[%s1898 + $0x1] sm:%s1891]
                %1903 = vst [vmem:[%s1899 + $0x2] sm:%s1891] %v1902
              $region101: #{_lambda_.5} parent=95 // loop_footer
                %s1897 = sadd.s32 1, %s1893
              $region102: #{_lambda_.5} parent=95 // loop_footer_branch
                %1892 = sbr.rel target = $region98
              $region103: #{_lambda_.5} parent=95 // loop_exit
                _
            $region96: #{_lambda_.5} parent=87 // pred_fallthru
              _
          $region88: #{_lambda_.5} parent=83 // pred_fallthru
            _
          %1920 = vnop
        $region84: #{_lambda_.5} parent=68 // pred_fallthru
          _
      $region69: #{_lambda_.5} parent=5 // pred_fallthru
        _
      %p1921 = scmp.le.s32.totalorder 2, %s9
      // Predicated region
      $region115: #{_lambda_.5} parent=5 // pred_check
        %p1922 = pneg %p1921
      $region116: #{_lambda_.5} parent=5 // pred_check_branch
        %1924 = sbr.rel (%p1922) target = $region118
      $region117: #{_lambda_.5} parent=5 // pred_region
        %s1925 = ssub.s32 %s9, 2
        // Predicated region
        $region119: #{_lambda_.5} parent=117 // pred_check
          %p1926 = pneg %p130
        $region120: #{_lambda_.5} parent=117 // pred_check_branch
          %1928 = sbr.rel (%p1926) target = $region122
        $region121: #{_lambda_.5} parent=117 // pred_region
          %s1929 = sand.u32 %s115, 1
          %s1930 = sand.u32 %s115, 1
          %s1931 = smul.addr %s1930, 2
          %s1932 = scalar_lea.vmem [#allocation3], %s1931
        $region122: #{_lambda_.5} parent=117 // pred_fallthru
          _
      $region118: #{_lambda_.5} parent=5 // pred_fallthru
        _
    $region6: #{_lambda_.5} parent=1 // loop_footer
      %s13 = sadd.s32 1, %s9
    $region7: #{_lambda_.5} parent=1 // loop_footer_branch
      %8 = sbr.rel target = $region3
    $region8: #{_lambda_.5} parent=1 // loop_exit
      _

</llo_original>
